<compile_context>
chip_gen: v7x
topology: tpu7x:2x2x1
jax: 0.10.0
libtpu: 0.0.40
codegen_flags: <defaults>
</compile_context>

<pallas_src>
import functools

import jax
import jax.numpy as jnp
from jax.experimental import pallas as pl
from jax.experimental.pallas import tpu as pltpu


# ----------------------------------------------------------------------------
# Fused Pallas kernel: conv1 -> BN1 -> ReLU -> ActQ -> conv2 -> BN2 -> ActQ
#                      -> + residual -> ReLU -> ActQ_out
# ----------------------------------------------------------------------------
def _basic_block_q_kernel(x_ref, w1_ref, b1_ref, w2_ref, b2_ref, sc_ref, o_ref,
                          xp_ref, c1p_ref, *, H, W, Cin, Cout, qn, qp):
    qn_f, qp_f = float(qn), float(qp)

    # Zero-filled halo scratches (re-zeroed each step so the kernel stays
    # correct when the batch grid is sharded across TensorCores).
    xp_ref[...] = jnp.zeros_like(xp_ref)
    c1p_ref[...] = jnp.zeros_like(c1p_ref)

    x = x_ref[0]                                    # (H, W, Cin)
    # Interior at rows [1, H], cols [8, W+8): sublane-aligned store; the
    # surrounding zeros implement the conv's padding=1.
    xp_ref[1:H + 1, 8:W + 8, :] = x

    def im2col(buf, c):
        # 9 shifted taps -> one (H*W, 9*c) patch -> a single MXU matmul.
        taps = [buf[dy:dy + H, 7 + dx:7 + dx + W, :].reshape(H * W, c)
                for dy in range(3) for dx in range(3)]
        return jnp.concatenate(taps, axis=-1)

    # ---- conv1 + BN1 + ReLU + ActQ (BN1/alpha1 folded into w1/b1 -> codes) --
    p1 = im2col(xp_ref[...], Cin)
    t1 = jnp.dot(p1, w1_ref[...], preferred_element_type=jnp.float32) + b1_ref[...]
    codes1 = jnp.clip(jnp.round(jnp.maximum(t1, 0.0)), qn_f, qp_f)   # (H*W, Cout)

    # ---- conv2 + BN2 + ActQ (alpha1*BN2/alpha2 folded into w2/b2 -> codes) --
    c1p_ref[1:H + 1, 8:W + 8, :] = codes1.reshape(H, W, Cout)
    p2 = im2col(c1p_ref[...], Cout)
    t2 = jnp.dot(p2, w2_ref[...], preferred_element_type=jnp.float32) + b2_ref[...]
    codes2 = jnp.clip(jnp.round(t2), qn_f, qp_f)                     # (H*W, Cout)

    # ---- residual add + ReLU + output ActQ ----------------------------------
    v_q2 = sc_ref[0:1, :]      # alpha2 / out_alpha
    v_res = sc_ref[1:2, :]     # 1 / out_alpha
    v_out = sc_ref[2:3, :]     # out_alpha
    res = x.reshape(H * W, Cin)
    t3 = jnp.maximum(codes2 * v_q2 + res * v_res, 0.0)
    out = jnp.clip(jnp.round(t3), qn_f, qp_f) * v_out
    o_ref[0] = out.reshape(H, W, Cout)


# ----------------------------------------------------------------------------
# Plain-JAX glue: weight quantization / BN + ActQ-scale folding / driver
# ----------------------------------------------------------------------------
def _quantize_weight_llsq(w, nbits):
    """LLSQ-style symmetric weight quant: w_q = clamp(round(w/alpha)) * alpha."""
    qn, qp = -(2 ** (nbits - 1)), 2 ** (nbits - 1) - 1
    alpha = 2.0 * jnp.mean(jnp.abs(w)) / jnp.sqrt(float(qp))
    return jnp.clip(jnp.round(w / alpha), qn, qp) * alpha


def _prep_conv_weight(w_oihw, nbits_w, col_scale):
    """(Cout, Cin, 3, 3) -> quantize -> (9*Cin, Cout) im2col layout, with a
    per-output-channel scale (folded BN / ActQ step) baked into the columns."""
    cout, cin = w_oihw.shape[0], w_oihw.shape[1]
    wq = _quantize_weight_llsq(w_oihw, nbits_w)
    wm = jnp.transpose(wq, (2, 3, 1, 0)).reshape(9 * cin, cout)
    return (wm * col_scale.reshape(1, cout)).astype(jnp.float32)


def _fold_bn(gamma, beta, mean, var, eps=1e-5):
    scale = gamma / jnp.sqrt(var + eps)
    bias = beta - mean * scale
    return scale, bias


def basic_block_q_forward(x_nchw, params, *, nbits_w=4, nbits_a=4):
    """BasicBlockQ forward (stride=1, downsample=None). Input/output NCHW."""
    x = jnp.transpose(x_nchw, (0, 2, 3, 1)).astype(jnp.float32)     # -> NHWC
    N, H, W, Cin = x.shape
    Cout = params["w1"].shape[0]
    assert Cin == Cout, "no-downsample BasicBlockQ requires inplanes == planes"

    a1 = jnp.asarray(params["act_alpha1"], jnp.float32)
    a2 = jnp.asarray(params["act_alpha2"], jnp.float32)
    ao = jnp.asarray(params["out_alpha"], jnp.float32)

    s1, b1 = _fold_bn(params["bn1_gamma"], params["bn1_beta"],
                      params["bn1_mean"], params["bn1_var"])
    s2, b2 = _fold_bn(params["bn2_gamma"], params["bn2_beta"],
                      params["bn2_mean"], params["bn2_var"])

    # Fold BN and 1/alpha into the matmul weights/bias so only round/clip/scale
    # remains in-kernel after each conv.
    w1f = _prep_conv_weight(params["w1"], nbits_w, s1 / a1)
    b1f = (b1 / a1).reshape(1, Cout).astype(jnp.float32)
    w2f = _prep_conv_weight(params["w2"], nbits_w, a1 * s2 / a2)
    b2f = (b2 / a2).reshape(1, Cout).astype(jnp.float32)

    ones = jnp.ones((Cout,), jnp.float32)
    scales = jnp.stack([ones * (a2 / ao), ones * (1.0 / ao), ones * ao], axis=0)

    qn, qp = -(2 ** (nbits_a - 1)), 2 ** (nbits_a - 1) - 1
    kernel = functools.partial(_basic_block_q_kernel, H=H, W=W, Cin=Cin,
                               Cout=Cout, qn=qn, qp=qp)

    out_nhwc = pl.pallas_call(
        kernel,
        out_shape=jax.ShapeDtypeStruct((N, H, W, Cout), jnp.float32),
        grid=(N,),
        in_specs=[
            pl.BlockSpec((1, H, W, Cin), lambda n: (n, 0, 0, 0)),      # x (also residual)
            pl.BlockSpec((9 * Cin, Cout), lambda n: (0, 0)),           # conv1 folded weights
            pl.BlockSpec((1, Cout), lambda n: (0, 0)),                 # conv1 folded bias
            pl.BlockSpec((9 * Cout, Cout), lambda n: (0, 0)),          # conv2 folded weights
            pl.BlockSpec((1, Cout), lambda n: (0, 0)),                 # conv2 folded bias
            pl.BlockSpec((3, Cout), lambda n: (0, 0)),                 # ActQ scale vectors
        ],
        out_specs=pl.BlockSpec((1, H, W, Cout), lambda n: (n, 0, 0, 0)),
        scratch_shapes=[
            pltpu.VMEM((H + 2, W + 16, Cin), jnp.float32),   # zero-padded x halo
            pltpu.VMEM((H + 2, W + 16, Cout), jnp.float32),  # zero-padded out1 codes
        ],
        compiler_params=pltpu.CompilerParams(
            dimension_semantics=("parallel",)),
    )(x, w1f, b1f, w2f, b2f, scales)

    return jnp.transpose(out_nhwc, (0, 3, 1, 2))                      # NHWC -> NCHW


# ----------------------------------------------------------------------------
# Demo
# ----------------------------------------------------------------------------
if __name__ == "__main__":
    key = jax.random.PRNGKey(0)
    kx, kw1, kw2, kg1, kb1, kg2, kb2, km = jax.random.split(key, 8)

    N, C, H, W = 2, 8, 16, 16          # inplanes == planes, stride 1
    planes = C

    x = jax.random.normal(kx, (N, C, H, W), jnp.float32)

    params = {
        "w1": 0.1 * jax.random.normal(kw1, (planes, C, 3, 3), jnp.float32),
        "w2": 0.1 * jax.random.normal(kw2, (planes, planes, 3, 3), jnp.float32),
        "bn1_gamma": 1.0 + 0.1 * jax.random.normal(kg1, (planes,), jnp.float32),
        "bn1_beta": 0.1 * jax.random.normal(kb1, (planes,), jnp.float32),
        "bn1_mean": jnp.zeros((planes,), jnp.float32),
        "bn1_var": jnp.ones((planes,), jnp.float32),
        "bn2_gamma": 1.0 + 0.1 * jax.random.normal(kg2, (planes,), jnp.float32),
        "bn2_beta": 0.1 * jax.random.normal(kb2, (planes,), jnp.float32),
        "bn2_mean": 0.05 * jax.random.normal(km, (planes,), jnp.float32),
        "bn2_var": jnp.ones((planes,), jnp.float32),
        # learned ActQ step sizes (deterministic synthetic init)
        "act_alpha1": 0.1,
        "act_alpha2": 0.1,
        "out_alpha": 0.1,
    }

    out = basic_block_q_forward(x, params, nbits_w=4, nbits_a=4)
    jax.block_until_ready(out)
    assert out.shape == (N, planes, H, W)
    print("KERNEL_OK")
</pallas_src>

<mosaic_0001>
module attributes {stable_mosaic.version = 11 : i64} {
  func.func @_basic_block_q_kernel(%arg0: i32, %arg1: memref<1x16x16x8xf32, #tpu.memory_space<vmem>>, %arg2: memref<72x8xf32, #tpu.memory_space<vmem>>, %arg3: memref<1x8xf32, #tpu.memory_space<vmem>>, %arg4: memref<72x8xf32, #tpu.memory_space<vmem>>, %arg5: memref<1x8xf32, #tpu.memory_space<vmem>>, %arg6: memref<3x8xf32, #tpu.memory_space<vmem>>, %arg7: memref<1x16x16x8xf32, #tpu.memory_space<vmem>>, %arg8: memref<18x32x8xf32, #tpu.memory_space<vmem>>, %arg9: memref<18x32x8xf32, #tpu.memory_space<vmem>>) attributes {dimension_semantics = [#tpu.dimension_semantics<parallel>], iteration_bounds = array<i64: 2>, scalar_prefetch = 0 : i64, scratch_operands = 2 : i64, tpu.core_type = #tpu.core_type<tc>, window_params = [{transform_indices = @transform_0, window_bounds = array<i64: 1, 16, 16, 8>}, {pipeline_mode = #tpu.pipeline_mode<synchronous>, transform_indices = @transform_1, window_bounds = array<i64: 72, 8>}, {pipeline_mode = #tpu.pipeline_mode<synchronous>, transform_indices = @transform_2, window_bounds = array<i64: 1, 8>}, {pipeline_mode = #tpu.pipeline_mode<synchronous>, transform_indices = @transform_3, window_bounds = array<i64: 72, 8>}, {pipeline_mode = #tpu.pipeline_mode<synchronous>, transform_indices = @transform_4, window_bounds = array<i64: 1, 8>}, {pipeline_mode = #tpu.pipeline_mode<synchronous>, transform_indices = @transform_5, window_bounds = array<i64: 3, 8>}, {transform_indices = @transform_6, window_bounds = array<i64: 1, 16, 16, 8>}]} {
    %cst = arith.constant 0.000000e+00 : f32
    %0 = vector.broadcast %cst : f32 to vector<18x32x8xf32>
    %c0 = arith.constant 0 : index
    %c0_0 = arith.constant 0 : index
    %c0_1 = arith.constant 0 : index
    %1 = vector.load %arg8[%c0, %c0_0, %c0_1] : memref<18x32x8xf32, #tpu.memory_space<vmem>>, vector<18x32x8xf32>
    tpu.vector_store %arg8[%c0, %c0_0, %c0_1], %0 {strides = array<i32>} : memref<18x32x8xf32, #tpu.memory_space<vmem>>, vector<18x32x8xf32>,
    %cst_2 = arith.constant 0.000000e+00 : f32
    %2 = vector.broadcast %cst_2 : f32 to vector<18x32x8xf32>
    %c0_3 = arith.constant 0 : index
    %c0_4 = arith.constant 0 : index
    %c0_5 = arith.constant 0 : index
    %3 = vector.load %arg9[%c0_3, %c0_4, %c0_5] : memref<18x32x8xf32, #tpu.memory_space<vmem>>, vector<18x32x8xf32>
    tpu.vector_store %arg9[%c0_3, %c0_4, %c0_5], %2 {strides = array<i32>} : memref<18x32x8xf32, #tpu.memory_space<vmem>>, vector<18x32x8xf32>,
    %c0_6 = arith.constant 0 : index
    %c0_7 = arith.constant 0 : index
    %c0_8 = arith.constant 0 : index
    %c0_9 = arith.constant 0 : index
    %4 = vector.load %arg1[%c0_6, %c0_7, %c0_8, %c0_9] : memref<1x16x16x8xf32, #tpu.memory_space<vmem>>, vector<1x16x16x8xf32>
    %5 = vector.shape_cast %4 : vector<1x16x16x8xf32> to vector<16x16x8xf32>
    %c1 = arith.constant 1 : index
    %c8 = arith.constant 8 : index
    %c0_10 = arith.constant 0 : index
    %6 = vector.load %arg8[%c1, %c8, %c0_10] : memref<18x32x8xf32, #tpu.memory_space<vmem>>, vector<16x16x8xf32>
    tpu.vector_store %arg8[%c1, %c8, %c0_10], %5 {strides = array<i32>} : memref<18x32x8xf32, #tpu.memory_space<vmem>>, vector<16x16x8xf32>,
    %c0_11 = arith.constant 0 : index
    %c0_12 = arith.constant 0 : index
    %c0_13 = arith.constant 0 : index
    %7 = vector.load %arg8[%c0_11, %c0_12, %c0_13] : memref<18x32x8xf32, #tpu.memory_space<vmem>>, vector<18x32x8xf32>
    %8 = vector.extract_strided_slice %7 {offsets = [0, 7, 0], sizes = [16, 16, 8], strides = [1, 1, 1]} : vector<18x32x8xf32> to vector<16x16x8xf32>
    %9 = vector.shape_cast %8 : vector<16x16x8xf32> to vector<256x8xf32>
    %10 = vector.extract_strided_slice %7 {offsets = [0, 8, 0], sizes = [16, 16, 8], strides = [1, 1, 1]} : vector<18x32x8xf32> to vector<16x16x8xf32>
    %11 = vector.shape_cast %10 : vector<16x16x8xf32> to vector<256x8xf32>
    %12 = vector.extract_strided_slice %7 {offsets = [0, 9, 0], sizes = [16, 16, 8], strides = [1, 1, 1]} : vector<18x32x8xf32> to vector<16x16x8xf32>
    %13 = vector.shape_cast %12 : vector<16x16x8xf32> to vector<256x8xf32>
    %14 = vector.extract_strided_slice %7 {offsets = [1, 7, 0], sizes = [16, 16, 8], strides = [1, 1, 1]} : vector<18x32x8xf32> to vector<16x16x8xf32>
    %15 = vector.shape_cast %14 : vector<16x16x8xf32> to vector<256x8xf32>
    %16 = vector.extract_strided_slice %7 {offsets = [1, 8, 0], sizes = [16, 16, 8], strides = [1, 1, 1]} : vector<18x32x8xf32> to vector<16x16x8xf32>
    %17 = vector.shape_cast %16 : vector<16x16x8xf32> to vector<256x8xf32>
    %18 = vector.extract_strided_slice %7 {offsets = [1, 9, 0], sizes = [16, 16, 8], strides = [1, 1, 1]} : vector<18x32x8xf32> to vector<16x16x8xf32>
    %19 = vector.shape_cast %18 : vector<16x16x8xf32> to vector<256x8xf32>
    %20 = vector.extract_strided_slice %7 {offsets = [2, 7, 0], sizes = [16, 16, 8], strides = [1, 1, 1]} : vector<18x32x8xf32> to vector<16x16x8xf32>
    %21 = vector.shape_cast %20 : vector<16x16x8xf32> to vector<256x8xf32>
    %22 = vector.extract_strided_slice %7 {offsets = [2, 8, 0], sizes = [16, 16, 8], strides = [1, 1, 1]} : vector<18x32x8xf32> to vector<16x16x8xf32>
    %23 = vector.shape_cast %22 : vector<16x16x8xf32> to vector<256x8xf32>
    %24 = vector.extract_strided_slice %7 {offsets = [2, 9, 0], sizes = [16, 16, 8], strides = [1, 1, 1]} : vector<18x32x8xf32> to vector<16x16x8xf32>
    %25 = vector.shape_cast %24 : vector<16x16x8xf32> to vector<256x8xf32>
    %26 = tpu.concatenate %9, %11, %13, %15, %17, %19, %21, %23, %25 in 1 : vector<256x8xf32>, vector<256x8xf32>, vector<256x8xf32>, vector<256x8xf32>, vector<256x8xf32>, vector<256x8xf32>, vector<256x8xf32>, vector<256x8xf32>, vector<256x8xf32> -> vector<256x72xf32>
    %c0_14 = arith.constant 0 : index
    %c0_15 = arith.constant 0 : index
    %27 = vector.load %arg2[%c0_14, %c0_15] : memref<72x8xf32, #tpu.memory_space<vmem>>, vector<72x8xf32>
    %cst_16 = arith.constant dense<0.000000e+00> : vector<256x8xf32>
    %28 = tpu.matmul %26, %27, %cst_16 {dimension_numbers = #tpu.dot_dimension_numbers<[1], [0], [0], [1], [0, 0, 1, 1], [], []>} : vector<256x72xf32>, vector<72x8xf32>, vector<256x8xf32> -> vector<256x8xf32>
    %c0_17 = arith.constant 0 : index
    %c0_18 = arith.constant 0 : index
    %29 = vector.load %arg3[%c0_17, %c0_18] : memref<1x8xf32, #tpu.memory_space<vmem>>, vector<1x8xf32>
    %30 = vector.broadcast %29 : vector<1x8xf32> to vector<256x8xf32>
    %31 = arith.addf %28, %30 : vector<256x8xf32>
    %cst_19 = arith.constant 0.000000e+00 : f32
    %32 = vector.broadcast %cst_19 : f32 to vector<256x8xf32>
    %33 = arith.maximumf %31, %32 : vector<256x8xf32>
    %34 = math.roundeven %33 : vector<256x8xf32>
    %cst_20 = arith.constant -8.000000e+00 : f32
    %cst_21 = arith.constant 7.000000e+00 : f32
    %35 = vector.broadcast %cst_20 : f32 to vector<256x8xf32>
    %36 = arith.maximumf %35, %34 : vector<256x8xf32>
    %37 = vector.broadcast %cst_21 : f32 to vector<256x8xf32>
    %38 = arith.minimumf %37, %36 : vector<256x8xf32>
    %39 = vector.shape_cast %38 : vector<256x8xf32> to vector<16x16x8xf32>
    %c1_22 = arith.constant 1 : index
    %c8_23 = arith.constant 8 : index
    %c0_24 = arith.constant 0 : index
    %40 = vector.load %arg9[%c1_22, %c8_23, %c0_24] : memref<18x32x8xf32, #tpu.memory_space<vmem>>, vector<16x16x8xf32>
    tpu.vector_store %arg9[%c1_22, %c8_23, %c0_24], %39 {strides = array<i32>} : memref<18x32x8xf32, #tpu.memory_space<vmem>>, vector<16x16x8xf32>,
    %c0_25 = arith.constant 0 : index
    %c0_26 = arith.constant 0 : index
    %c0_27 = arith.constant 0 : index
    %41 = vector.load %arg9[%c0_25, %c0_26, %c0_27] : memref<18x32x8xf32, #tpu.memory_space<vmem>>, vector<18x32x8xf32>
    %42 = vector.extract_strided_slice %41 {offsets = [0, 7, 0], sizes = [16, 16, 8], strides = [1, 1, 1]} : vector<18x32x8xf32> to vector<16x16x8xf32>
    %43 = vector.shape_cast %42 : vector<16x16x8xf32> to vector<256x8xf32>
    %44 = vector.extract_strided_slice %41 {offsets = [0, 8, 0], sizes = [16, 16, 8], strides = [1, 1, 1]} : vector<18x32x8xf32> to vector<16x16x8xf32>
    %45 = vector.shape_cast %44 : vector<16x16x8xf32> to vector<256x8xf32>
    %46 = vector.extract_strided_slice %41 {offsets = [0, 9, 0], sizes = [16, 16, 8], strides = [1, 1, 1]} : vector<18x32x8xf32> to vector<16x16x8xf32>
    %47 = vector.shape_cast %46 : vector<16x16x8xf32> to vector<256x8xf32>
    %48 = vector.extract_strided_slice %41 {offsets = [1, 7, 0], sizes = [16, 16, 8], strides = [1, 1, 1]} : vector<18x32x8xf32> to vector<16x16x8xf32>
    %49 = vector.shape_cast %48 : vector<16x16x8xf32> to vector<256x8xf32>
    %50 = vector.extract_strided_slice %41 {offsets = [1, 8, 0], sizes = [16, 16, 8], strides = [1, 1, 1]} : vector<18x32x8xf32> to vector<16x16x8xf32>
    %51 = vector.shape_cast %50 : vector<16x16x8xf32> to vector<256x8xf32>
    %52 = vector.extract_strided_slice %41 {offsets = [1, 9, 0], sizes = [16, 16, 8], strides = [1, 1, 1]} : vector<18x32x8xf32> to vector<16x16x8xf32>
    %53 = vector.shape_cast %52 : vector<16x16x8xf32> to vector<256x8xf32>
    %54 = vector.extract_strided_slice %41 {offsets = [2, 7, 0], sizes = [16, 16, 8], strides = [1, 1, 1]} : vector<18x32x8xf32> to vector<16x16x8xf32>
    %55 = vector.shape_cast %54 : vector<16x16x8xf32> to vector<256x8xf32>
    %56 = vector.extract_strided_slice %41 {offsets = [2, 8, 0], sizes = [16, 16, 8], strides = [1, 1, 1]} : vector<18x32x8xf32> to vector<16x16x8xf32>
    %57 = vector.shape_cast %56 : vector<16x16x8xf32> to vector<256x8xf32>
    %58 = vector.extract_strided_slice %41 {offsets = [2, 9, 0], sizes = [16, 16, 8], strides = [1, 1, 1]} : vector<18x32x8xf32> to vector<16x16x8xf32>
    %59 = vector.shape_cast %58 : vector<16x16x8xf32> to vector<256x8xf32>
    %60 = tpu.concatenate %43, %45, %47, %49, %51, %53, %55, %57, %59 in 1 : vector<256x8xf32>, vector<256x8xf32>, vector<256x8xf32>, vector<256x8xf32>, vector<256x8xf32>, vector<256x8xf32>, vector<256x8xf32>, vector<256x8xf32>, vector<256x8xf32> -> vector<256x72xf32>
    %c0_28 = arith.constant 0 : index
    %c0_29 = arith.constant 0 : index
    %61 = vector.load %arg4[%c0_28, %c0_29] : memref<72x8xf32, #tpu.memory_space<vmem>>, vector<72x8xf32>
    %cst_30 = arith.constant dense<0.000000e+00> : vector<256x8xf32>
    %62 = tpu.matmul %60, %61, %cst_30 {dimension_numbers = #tpu.dot_dimension_numbers<[1], [0], [0], [1], [0, 0, 1, 1], [], []>} : vector<256x72xf32>, vector<72x8xf32>, vector<256x8xf32> -> vector<256x8xf32>
    %c0_31 = arith.constant 0 : index
    %c0_32 = arith.constant 0 : index
    %63 = vector.load %arg5[%c0_31, %c0_32] : memref<1x8xf32, #tpu.memory_space<vmem>>, vector<1x8xf32>
    %64 = vector.broadcast %63 : vector<1x8xf32> to vector<256x8xf32>
    %65 = arith.addf %62, %64 : vector<256x8xf32>
    %66 = math.roundeven %65 : vector<256x8xf32>
    %cst_33 = arith.constant -8.000000e+00 : f32
    %cst_34 = arith.constant 7.000000e+00 : f32
    %67 = vector.broadcast %cst_33 : f32 to vector<256x8xf32>
    %68 = arith.maximumf %67, %66 : vector<256x8xf32>
    %69 = vector.broadcast %cst_34 : f32 to vector<256x8xf32>
    %70 = arith.minimumf %69, %68 : vector<256x8xf32>
    %c0_35 = arith.constant 0 : index
    %c0_36 = arith.constant 0 : index
    %71 = vector.load %arg6[%c0_35, %c0_36] : memref<3x8xf32, #tpu.memory_space<vmem>>, vector<1x8xf32>
    %c1_37 = arith.constant 1 : index
    %c0_38 = arith.constant 0 : index
    %72 = vector.load %arg6[%c1_37, %c0_38] : memref<3x8xf32, #tpu.memory_space<vmem>>, vector<1x8xf32>
    %c2 = arith.constant 2 : index
    %c0_39 = arith.constant 0 : index
    %73 = vector.load %arg6[%c2, %c0_39] : memref<3x8xf32, #tpu.memory_space<vmem>>, vector<1x8xf32>
    %74 = vector.shape_cast %5 : vector<16x16x8xf32> to vector<256x8xf32>
    %75 = vector.broadcast %71 : vector<1x8xf32> to vector<256x8xf32>
    %76 = arith.mulf %70, %75 : vector<256x8xf32>
    %77 = vector.broadcast %72 : vector<1x8xf32> to vector<256x8xf32>
    %78 = arith.mulf %74, %77 : vector<256x8xf32>
    %79 = arith.addf %76, %78 : vector<256x8xf32>
    %cst_40 = arith.constant 0.000000e+00 : f32
    %80 = vector.broadcast %cst_40 : f32 to vector<256x8xf32>
    %81 = arith.maximumf %79, %80 : vector<256x8xf32>
    %82 = math.roundeven %81 : vector<256x8xf32>
    %cst_41 = arith.constant -8.000000e+00 : f32
    %cst_42 = arith.constant 7.000000e+00 : f32
    %83 = vector.broadcast %cst_41 : f32 to vector<256x8xf32>
    %84 = arith.maximumf %83, %82 : vector<256x8xf32>
    %85 = vector.broadcast %cst_42 : f32 to vector<256x8xf32>
    %86 = arith.minimumf %85, %84 : vector<256x8xf32>
    %87 = vector.broadcast %73 : vector<1x8xf32> to vector<256x8xf32>
    %88 = arith.mulf %86, %87 : vector<256x8xf32>
    %89 = vector.shape_cast %88 : vector<256x8xf32> to vector<16x16x8xf32>
    %c0_43 = arith.constant 0 : index
    %c0_44 = arith.constant 0 : index
    %c0_45 = arith.constant 0 : index
    %c0_46 = arith.constant 0 : index
    %90 = vector.load %arg7[%c0_43, %c0_44, %c0_45, %c0_46] : memref<1x16x16x8xf32, #tpu.memory_space<vmem>>, vector<1x16x16x8xf32>
    %91 = vector.shape_cast %90 : vector<1x16x16x8xf32> to vector<16x16x8xf32>
    %92 = vector.shape_cast %89 : vector<16x16x8xf32> to vector<1x16x16x8xf32>
    tpu.vector_store %arg7[%c0_43, %c0_44, %c0_45, %c0_46], %92 {strides = array<i32>} : memref<1x16x16x8xf32, #tpu.memory_space<vmem>>, vector<1x16x16x8xf32>,
    return
  }
  func.func @transform_0(%arg0: i32) -> (i32, i32, i32, i32) {
    %c0_i32 = arith.constant 0 : i32
    %c0_i32_0 = arith.constant 0 : i32
    %c0_i32_1 = arith.constant 0 : i32
    %c0_i32_2 = arith.constant 0 : i32
    return %arg0, %c0_i32, %c0_i32_0, %c0_i32_1 : i32, i32, i32, i32
  }
  func.func @transform_1(%arg0: i32) -> (i32, i32) {
    %c0_i32 = arith.constant 0 : i32
    %c0_i32_0 = arith.constant 0 : i32
    %c0_i32_1 = arith.constant 0 : i32
    return %c0_i32, %c0_i32_0 : i32, i32
  }
  func.func @transform_2(%arg0: i32) -> (i32, i32) {
    %c0_i32 = arith.constant 0 : i32
    %c0_i32_0 = arith.constant 0 : i32
    %c0_i32_1 = arith.constant 0 : i32
    return %c0_i32, %c0_i32_0 : i32, i32
  }
  func.func @transform_3(%arg0: i32) -> (i32, i32) {
    %c0_i32 = arith.constant 0 : i32
    %c0_i32_0 = arith.constant 0 : i32
    %c0_i32_1 = arith.constant 0 : i32
    return %c0_i32, %c0_i32_0 : i32, i32
  }
  func.func @transform_4(%arg0: i32) -> (i32, i32) {
    %c0_i32 = arith.constant 0 : i32
    %c0_i32_0 = arith.constant 0 : i32
    %c0_i32_1 = arith.constant 0 : i32
    return %c0_i32, %c0_i32_0 : i32, i32
  }
  func.func @transform_5(%arg0: i32) -> (i32, i32) {
    %c0_i32 = arith.constant 0 : i32
    %c0_i32_0 = arith.constant 0 : i32
    %c0_i32_1 = arith.constant 0 : i32
    return %c0_i32, %c0_i32_0 : i32, i32
  }
  func.func @transform_6(%arg0: i32) -> (i32, i32, i32, i32) {
    %c0_i32 = arith.constant 0 : i32
    %c0_i32_0 = arith.constant 0 : i32
    %c0_i32_1 = arith.constant 0 : i32
    %c0_i32_2 = arith.constant 0 : i32
    return %arg0, %c0_i32, %c0_i32_0, %c0_i32_1 : i32, i32, i32, i32
  }
}

</mosaic_0001>

<llo_original>
// kernel: tpu_custom_call.1
$region0: #{tpu_custom_call.1}
  #allocation0 [shape = 'u32[]', space=smem, size = 0x4, offset = 0x4, fixed_abs, tag = 'smem constant byte address 0x4 - core index']
  #allocation1 [shape = 'u32[144,128]{1,0:T(1,128)}', space=vmem, size = 0x12000, scoped, tag = 'internal scratch']
  #allocation2 [shape = 'f32[18,32,8]{2,1,0:T(8,128)}', space=vmem, size = 0x48000, scoped, tag = 'scratch operand']
  #allocation3 [shape = 'f32[18,32,8]{2,1,0:T(8,128)}', space=vmem, size = 0x48000, scoped, tag = 'scratch operand']
  %s0 = inlined_call_operand.vmem [shape: f32[2,16,16,8], index: 0, kind: input, shape index: {}]
  %s1 = inlined_call_operand.vmem [shape: f32[72,8], index: 1, kind: input, shape index: {}]
  %s2 = inlined_call_operand.vmem [shape: f32[1,8], index: 2, kind: input, shape index: {}]
  %s3 = inlined_call_operand.vmem [shape: f32[72,8], index: 3, kind: input, shape index: {}]
  %s4 = inlined_call_operand.vmem [shape: f32[1,8], index: 4, kind: input, shape index: {}]
  %s5 = inlined_call_operand.vmem [shape: f32[3,8], index: 5, kind: input, shape index: {}]
  %s6 = inlined_call_operand.vmem [shape: f32[2,16,16,8], index: 6, kind: output, shape index: {}]
  %s7 = sld [smem:[#allocation0]]
  $region57: #{tpu_custom_call.1} parent=0
    _
  %s9 = ssub.s32 1, %s7
  %s10 = scalar_select 0, %s9, %s7
  loop: start=0, step=1, limit=4
  $region2: #{tpu_custom_call.1} parent=0 // loop_pre_header
    _
  $region3: #{tpu_custom_call.1} parent=0 // loop_header
    %s12 = sphi 0, %s16
    %p13 = scmp.ge.s32.totalorder %s12, 4
    %s22 = sphi 0, %s24
    %s25 = sphi 0, %s22
    %s26 = sphi 0, %s25
    %s42 = sphi 0, %s26
    %s46 = sphi 0, %s46
    %s48 = sphi 0, %s46
    %s49 = sphi 0, %s48
    %s63 = sphi 0, %s49
    %s67 = sphi 0, %s67
    %s69 = sphi 0, %s67
    %s70 = sphi 0, %s69
    %s84 = sphi 0, %s70
    %s88 = sphi 0, %s88
    %s90 = sphi 0, %s88
    %s91 = sphi 0, %s90
    %s105 = sphi 0, %s91
    %s109 = sphi 0, %s109
    %s111 = sphi 0, %s109
    %s112 = sphi 0, %s111
    %s126 = sphi 0, %s112
    %s130 = sphi 0, %s130
    %s132 = sphi 0, %s130
    %s133 = sphi 0, %s132
    %s147 = sphi 0, %s133
    %s153 = sphi 0, %s155
    %s156 = sphi 0, %s153
    %s157 = sphi 0, %s156
    %s173 = sphi 0, %s157
  $region4: #{tpu_custom_call.1} parent=0 // loop_header_branch
    %15 = sbr.rel (%p13) target = $region8
  $region5: #{tpu_custom_call.1} parent=0 // loop_body
    %s17 = ssub.s32 %s12, 1
    %s18 = ssub.s32 %s12, 2
    %s19 = sadd.s32 %s12, 1
    %s20 = ssub.s32 %s12, %s19
    %p21 = scmp.eq.s32.totalorder %s20, 0
    %s23 = sadd.s32 %s22, 1
    %s24 = scalar_select %p21, %s22, %s23
    %p27 = pneg %p21
    %p28 = scmp.eq.s32.totalorder %s12, 1
    %p29 = por %p27, %p28
    %p30 = scmp.ne.s32.totalorder %s22, %s25
    %p31 = scmp.eq.s32.totalorder %s12, 0
    %p32 = por %p30, %p31
    %p33 = scmp.ne.s32.totalorder %s22, %s25
    %p34 = scmp.eq.s32.totalorder %s17, 1
    %p35 = por %p33, %p34
    %p36 = scmp.ne.s32.totalorder %s25, %s26
    %p37 = scmp.eq.s32.totalorder %s17, 0
    %p38 = por %p36, %p37
    %p39 = scmp.ne.s32.totalorder %s25, %s26
    %p40 = scmp.eq.s32.totalorder %s18, 1
    %p41 = por %p39, %p40
    %p43 = scmp.ne.s32.totalorder %s26, %s42
    %p44 = scmp.eq.s32.totalorder %s18, 0
    %p45 = por %p43, %p44
    %s47 = sadd.s32 %s46, 1
    %p50 = scmp.eq.s32.totalorder %s12, 1
    %p51 = scmp.ne.s32.totalorder %s46, %s48
    %p52 = scmp.eq.s32.totalorder %s12, 0
    %p53 = por %p51, %p52
    %p54 = scmp.ne.s32.totalorder %s46, %s48
    %p55 = scmp.eq.s32.totalorder %s17, 1
    %p56 = por %p54, %p55
    %p57 = scmp.ne.s32.totalorder %s48, %s49
    %p58 = scmp.eq.s32.totalorder %s17, 0
    %p59 = por %p57, %p58
    %p60 = scmp.ne.s32.totalorder %s48, %s49
    %p61 = scmp.eq.s32.totalorder %s18, 1
    %p62 = por %p60, %p61
    %p64 = scmp.ne.s32.totalorder %s49, %s63
    %p65 = scmp.eq.s32.totalorder %s18, 0
    %p66 = por %p64, %p65
    %s68 = sadd.s32 %s67, 1
    %p71 = scmp.eq.s32.totalorder %s12, 1
    %p72 = scmp.ne.s32.totalorder %s67, %s69
    %p73 = scmp.eq.s32.totalorder %s12, 0
    %p74 = por %p72, %p73
    %p75 = scmp.ne.s32.totalorder %s67, %s69
    %p76 = scmp.eq.s32.totalorder %s17, 1
    %p77 = por %p75, %p76
    %p78 = scmp.ne.s32.totalorder %s69, %s70
    %p79 = scmp.eq.s32.totalorder %s17, 0
    %p80 = por %p78, %p79
    %p81 = scmp.ne.s32.totalorder %s69, %s70
    %p82 = scmp.eq.s32.totalorder %s18, 1
    %p83 = por %p81, %p82
    %p85 = scmp.ne.s32.totalorder %s70, %s84
    %p86 = scmp.eq.s32.totalorder %s18, 0
    %p87 = por %p85, %p86
    %s89 = sadd.s32 %s88, 1
    %p92 = scmp.eq.s32.totalorder %s12, 1
    %p93 = scmp.ne.s32.totalorder %s88, %s90
    %p94 = scmp.eq.s32.totalorder %s12, 0
    %p95 = por %p93, %p94
    %p96 = scmp.ne.s32.totalorder %s88, %s90
    %p97 = scmp.eq.s32.totalorder %s17, 1
    %p98 = por %p96, %p97
    %p99 = scmp.ne.s32.totalorder %s90, %s91
    %p100 = scmp.eq.s32.totalorder %s17, 0
    %p101 = por %p99, %p100
    %p102 = scmp.ne.s32.totalorder %s90, %s91
    %p103 = scmp.eq.s32.totalorder %s18, 1
    %p104 = por %p102, %p103
    %p106 = scmp.ne.s32.totalorder %s91, %s105
    %p107 = scmp.eq.s32.totalorder %s18, 0
    %p108 = por %p106, %p107
    %s110 = sadd.s32 %s109, 1
    %p113 = scmp.eq.s32.totalorder %s12, 1
    %p114 = scmp.ne.s32.totalorder %s109, %s111
    %p115 = scmp.eq.s32.totalorder %s12, 0
    %p116 = por %p114, %p115
    %p117 = scmp.ne.s32.totalorder %s109, %s111
    %p118 = scmp.eq.s32.totalorder %s17, 1
    %p119 = por %p117, %p118
    %p120 = scmp.ne.s32.totalorder %s111, %s112
    %p121 = scmp.eq.s32.totalorder %s17, 0
    %p122 = por %p120, %p121
    %p123 = scmp.ne.s32.totalorder %s111, %s112
    %p124 = scmp.eq.s32.totalorder %s18, 1
    %p125 = por %p123, %p124
    %p127 = scmp.ne.s32.totalorder %s112, %s126
    %p128 = scmp.eq.s32.totalorder %s18, 0
    %p129 = por %p127, %p128
    %s131 = sadd.s32 %s130, 1
    %p134 = scmp.eq.s32.totalorder %s12, 1
    %p135 = scmp.ne.s32.totalorder %s130, %s132
    %p136 = scmp.eq.s32.totalorder %s12, 0
    %p137 = por %p135, %p136
    %p138 = scmp.ne.s32.totalorder %s130, %s132
    %p139 = scmp.eq.s32.totalorder %s17, 1
    %p140 = por %p138, %p139
    %p141 = scmp.ne.s32.totalorder %s132, %s133
    %p142 = scmp.eq.s32.totalorder %s17, 0
    %p143 = por %p141, %p142
    %p144 = scmp.ne.s32.totalorder %s132, %s133
    %p145 = scmp.eq.s32.totalorder %s18, 1
    %p146 = por %p144, %p145
    %p148 = scmp.ne.s32.totalorder %s133, %s147
    %p149 = scmp.eq.s32.totalorder %s18, 0
    %p150 = por %p148, %p149
    %s151 = ssub.s32 %s12, %s19
    %p152 = scmp.eq.s32.totalorder %s151, 0
    %s154 = sadd.s32 %s153, 1
    %s155 = scalar_select %p152, %s153, %s154
    %p158 = pneg %p152
    %p159 = scmp.eq.s32.totalorder %s12, 1
    %p160 = por %p158, %p159
    %p161 = scmp.ne.s32.totalorder %s153, %s156
    %p162 = scmp.eq.s32.totalorder %s12, 0
    %p163 = por %p161, %p162
    %p164 = scmp.ne.s32.totalorder %s153, %s156
    %p165 = scmp.eq.s32.totalorder %s17, 1
    %p166 = por %p164, %p165
    %p167 = scmp.ne.s32.totalorder %s156, %s157
    %p168 = scmp.eq.s32.totalorder %s17, 0
    %p169 = por %p167, %p168
    %p170 = scmp.ne.s32.totalorder %s156, %s157
    %p171 = scmp.eq.s32.totalorder %s18, 1
    %p172 = por %p170, %p171
    %p174 = scmp.ne.s32.totalorder %s157, %s173
    %p175 = scmp.eq.s32.totalorder %s18, 0
    %p176 = por %p174, %p175
    %p177 = scmp.le.s32.totalorder 1, %s12
    %p178 = scmp.lt.s32.totalorder %s12, 3
    %p179 = pnand %p177, %p178
    %p180 = pneg %p179
    // Predicated region
    $region9: #{tpu_custom_call.1} parent=5 // pred_check
      _
    $region10: #{tpu_custom_call.1} parent=5 // pred_check_branch
      %182 = sbr.rel (%p179) target = $region12
    $region11: #{tpu_custom_call.1} parent=5 // pred_region
      %s183 = ssub.s32 %s12, 1
      // Predicated region
      $region13: #{tpu_custom_call.1} parent=11 // pred_check
        %p184 = pneg %p59
      $region14: #{tpu_custom_call.1} parent=11 // pred_check_branch
        %186 = sbr.rel (%p184) target = $region16
      $region15: #{tpu_custom_call.1} parent=11 // pred_region
        _
      $region16: #{tpu_custom_call.1} parent=11 // pred_fallthru
        _
      // Predicated region
      $region17: #{tpu_custom_call.1} parent=11 // pred_check
        %p187 = pneg %p80
      $region18: #{tpu_custom_call.1} parent=11 // pred_check_branch
        %189 = sbr.rel (%p187) target = $region20
      $region19: #{tpu_custom_call.1} parent=11 // pred_region
        _
      $region20: #{tpu_custom_call.1} parent=11 // pred_fallthru
        _
      // Predicated region
      $region21: #{tpu_custom_call.1} parent=11 // pred_check
        %p190 = pneg %p101
      $region22: #{tpu_custom_call.1} parent=11 // pred_check_branch
        %192 = sbr.rel (%p190) target = $region24
      $region23: #{tpu_custom_call.1} parent=11 // pred_region
        _
      $region24: #{tpu_custom_call.1} parent=11 // pred_fallthru
        _
      // Predicated region
      $region25: #{tpu_custom_call.1} parent=11 // pred_check
        %p193 = pneg %p122
      $region26: #{tpu_custom_call.1} parent=11 // pred_check_branch
        %195 = sbr.rel (%p193) target = $region28
      $region27: #{tpu_custom_call.1} parent=11 // pred_region
        _
      $region28: #{tpu_custom_call.1} parent=11 // pred_fallthru
        _
      // Predicated region
      $region29: #{tpu_custom_call.1} parent=11 // pred_check
        %p196 = pneg %p143
      $region30: #{tpu_custom_call.1} parent=11 // pred_check_branch
        %198 = sbr.rel (%p196) target = $region32
      $region31: #{tpu_custom_call.1} parent=11 // pred_region
        _
      $region32: #{tpu_custom_call.1} parent=11 // pred_fallthru
        _
    $region12: #{tpu_custom_call.1} parent=5 // pred_fallthru
      _
    %p199 = scmp.lt.s32.totalorder %s12, 2
    // Predicated region
    $region33: #{tpu_custom_call.1} parent=5 // pred_check
      %p200 = pneg %p199
    $region34: #{tpu_custom_call.1} parent=5 // pred_check_branch
      %202 = sbr.rel (%p200) target = $region36
    $region35: #{tpu_custom_call.1} parent=5 // pred_region
      // Predicated region
      $region37: #{tpu_custom_call.1} parent=35 // pred_check
        %p203 = pneg %p32
      $region38: #{tpu_custom_call.1} parent=35 // pred_check_branch
        %205 = sbr.rel (%p203) target = $region40
      $region39: #{tpu_custom_call.1} parent=35 // pred_region
        %p206 = scmp.lt.s32.totalorder %s12, 1
        %s207 = scalar_select %p206, %s12, 1
        %s208 = smul.addr %s207, 32
        %s209 = smul.addr %s208, 8
        %s210 = scalar_lea.vmem %s0, %s209
      $region40: #{tpu_custom_call.1} parent=35 // pred_fallthru
        _
    $region36: #{tpu_custom_call.1} parent=5 // pred_fallthru
      _
    %p211 = scmp.le.s32.totalorder 1, %s12
    %p212 = scmp.lt.s32.totalorder %s12, 3
    %p213 = pnand %p211, %p212
    %p214 = pneg %p213
    // Predicated region
    $region41: #{tpu_custom_call.1} parent=5 // pred_check
      _
    $region42: #{tpu_custom_call.1} parent=5 // pred_check_branch
      %216 = sbr.rel (%p213) target = $region44
    $region43: #{tpu_custom_call.1} parent=5 // pred_region
      %s217 = ssub.s32 %s12, 1
      %p218 = scmp.lt.s32.totalorder %s17, 1
      %s219 = scalar_select %p218, %s17, 1
      %s220 = smul.addr %s219, 32
      %s221 = smul.addr %s220, 8
      %s222 = scalar_lea.vmem %s0, %s221
      %p223 = pneg %p38
      %p224 = pneg %p35
      %p225 = pneg %p59
      %p226 = pneg %p56
      %p227 = pneg %p80
      %p228 = pneg %p77
      %p229 = pneg %p101
      %p230 = pneg %p98
      %p231 = pneg %p122
      %p232 = pneg %p119
      %p233 = pneg %p143
      %p234 = pneg %p140
      %p235 = pneg %p169
      %p236 = pneg %p166
      %p237 = scmp.lt.s32.totalorder %s17, 1
      %s238 = scalar_select %p237, %s17, 1
      %s239 = smul.addr %s238, 32
      %s240 = smul.addr %s239, 8
      %s241 = scalar_lea.vmem %s6, %s240
      %p242 = scmp.lt.s32.totalorder %s17, 1
      %s243 = scalar_select %p242, %s17, 1
      %s244 = smul.addr %s243, 32
      %s245 = smul.addr %s244, 8
      %s246 = scalar_lea.vmem %s0, %s245
      %p247 = scmp.lt.s32.totalorder %s17, 1
      %s248 = scalar_select %p247, %s17, 1
      %s249 = smul.addr %s248, 32
      %s250 = smul.addr %s249, 8
      %s251 = scalar_lea.vmem %s6, %s250
      %vm252 = vcmask 64512
      %253 = vst.msk [vmem:[#allocation2] sm:$0xff] %vm252, 0.0
      %254 = vst.msk [vmem:[#allocation2 + $0x8] sm:$0xff] %vm252, 0.0
      %255 = vst.msk [vmem:[#allocation2 + $0x10] sm:$0xff] %vm252, 0.0
      %256 = vst.msk [vmem:[#allocation2 + $0x18] sm:$0xff] %vm252, 0.0
      %257 = vst.msk [vmem:[#allocation2 + $0x20] sm:$0xff] %vm252, 0.0
      %258 = vst.msk [vmem:[#allocation2 + $0x28] sm:$0xff] %vm252, 0.0
      %259 = vst.msk [vmem:[#allocation2 + $0x30] sm:$0xff] %vm252, 0.0
      %260 = vst.msk [vmem:[#allocation2 + $0x38] sm:$0xff] %vm252, 0.0
      %261 = vst.msk [vmem:[#allocation2 + $0x40] sm:$0xff] %vm252, 0.0
      %262 = vst.msk [vmem:[#allocation2 + $0x48] sm:$0xff] %vm252, 0.0
      %263 = vst.msk [vmem:[#allocation2 + $0x50] sm:$0xff] %vm252, 0.0
      %264 = vst.msk [vmem:[#allocation2 + $0x58] sm:$0xff] %vm252, 0.0
      %265 = vst.msk [vmem:[#allocation2 + $0x60] sm:$0xff] %vm252, 0.0
      %266 = vst.msk [vmem:[#allocation2 + $0x68] sm:$0xff] %vm252, 0.0
      %267 = vst.msk [vmem:[#allocation2 + $0x70] sm:$0xff] %vm252, 0.0
      %268 = vst.msk [vmem:[#allocation2 + $0x78] sm:$0xff] %vm252, 0.0
      %269 = vst.msk [vmem:[#allocation2 + $0x80] sm:$0xff] %vm252, 0.0
      %270 = vst.msk [vmem:[#allocation2 + $0x88] sm:$0xff] %vm252, 0.0
      %271 = vst.msk [vmem:[#allocation2 + $0x90] sm:$0xff] %vm252, 0.0
      %272 = vst.msk [vmem:[#allocation2 + $0x98] sm:$0xff] %vm252, 0.0
      %273 = vst.msk [vmem:[#allocation2 + $0xa0] sm:$0xff] %vm252, 0.0
      %274 = vst.msk [vmem:[#allocation2 + $0xa8] sm:$0xff] %vm252, 0.0
      %275 = vst.msk [vmem:[#allocation2 + $0xb0] sm:$0xff] %vm252, 0.0
      %276 = vst.msk [vmem:[#allocation2 + $0xb8] sm:$0xff] %vm252, 0.0
      %277 = vst.msk [vmem:[#allocation2 + $0xc0] sm:$0xff] %vm252, 0.0
      %278 = vst.msk [vmem:[#allocation2 + $0xc8] sm:$0xff] %vm252, 0.0
      %279 = vst.msk [vmem:[#allocation2 + $0xd0] sm:$0xff] %vm252, 0.0
      %280 = vst.msk [vmem:[#allocation2 + $0xd8] sm:$0xff] %vm252, 0.0
      %281 = vst.msk [vmem:[#allocation2 + $0xe0] sm:$0xff] %vm252, 0.0
      %282 = vst.msk [vmem:[#allocation2 + $0xe8] sm:$0xff] %vm252, 0.0
      %283 = vst.msk [vmem:[#allocation2 + $0xf0] sm:$0xff] %vm252, 0.0
      %284 = vst.msk [vmem:[#allocation2 + $0xf8] sm:$0xff] %vm252, 0.0
      %285 = vst.msk [vmem:[#allocation2 + $0x100] sm:$0xff] %vm252, 0.0
      %286 = vst.msk [vmem:[#allocation2 + $0x108] sm:$0xff] %vm252, 0.0
      %287 = vst.msk [vmem:[#allocation2 + $0x110] sm:$0xff] %vm252, 0.0
      %288 = vst.msk [vmem:[#allocation2 + $0x118] sm:$0xff] %vm252, 0.0
      %289 = vst.msk [vmem:[#allocation2 + $0x120] sm:$0xff] %vm252, 0.0
      %290 = vst.msk [vmem:[#allocation2 + $0x128] sm:$0xff] %vm252, 0.0
      %291 = vst.msk [vmem:[#allocation2 + $0x130] sm:$0xff] %vm252, 0.0
      %292 = vst.msk [vmem:[#allocation2 + $0x138] sm:$0xff] %vm252, 0.0
      %293 = vst.msk [vmem:[#allocation2 + $0x140] sm:$0xff] %vm252, 0.0
      %294 = vst.msk [vmem:[#allocation2 + $0x148] sm:$0xff] %vm252, 0.0
      %295 = vst.msk [vmem:[#allocation2 + $0x150] sm:$0xff] %vm252, 0.0
      %296 = vst.msk [vmem:[#allocation2 + $0x158] sm:$0xff] %vm252, 0.0
      %297 = vst.msk [vmem:[#allocation2 + $0x160] sm:$0xff] %vm252, 0.0
      %298 = vst.msk [vmem:[#allocation2 + $0x168] sm:$0xff] %vm252, 0.0
      %299 = vst.msk [vmem:[#allocation2 + $0x170] sm:$0xff] %vm252, 0.0
      %300 = vst.msk [vmem:[#allocation2 + $0x178] sm:$0xff] %vm252, 0.0
      %301 = vst.msk [vmem:[#allocation2 + $0x180] sm:$0xff] %vm252, 0.0
      %302 = vst.msk [vmem:[#allocation2 + $0x188] sm:$0xff] %vm252, 0.0
      %303 = vst.msk [vmem:[#allocation2 + $0x190] sm:$0xff] %vm252, 0.0
      %304 = vst.msk [vmem:[#allocation2 + $0x198] sm:$0xff] %vm252, 0.0
      %305 = vst.msk [vmem:[#allocation2 + $0x1a0] sm:$0xff] %vm252, 0.0
      %306 = vst.msk [vmem:[#allocation2 + $0x1a8] sm:$0xff] %vm252, 0.0
      %307 = vst.msk [vmem:[#allocation2 + $0x1b0] sm:$0xff] %vm252, 0.0
      %308 = vst.msk [vmem:[#allocation2 + $0x1b8] sm:$0xff] %vm252, 0.0
      %309 = vst.msk [vmem:[#allocation2 + $0x1c0] sm:$0xff] %vm252, 0.0
      %310 = vst.msk [vmem:[#allocation2 + $0x1c8] sm:$0xff] %vm252, 0.0
      %311 = vst.msk [vmem:[#allocation2 + $0x1d0] sm:$0xff] %vm252, 0.0
      %312 = vst.msk [vmem:[#allocation2 + $0x1d8] sm:$0xff] %vm252, 0.0
      %313 = vst.msk [vmem:[#allocation2 + $0x1e0] sm:$0xff] %vm252, 0.0
      %314 = vst.msk [vmem:[#allocation2 + $0x1e8] sm:$0xff] %vm252, 0.0
      %315 = vst.msk [vmem:[#allocation2 + $0x1f0] sm:$0xff] %vm252, 0.0
      %316 = vst.msk [vmem:[#allocation2 + $0x1f8] sm:$0xff] %vm252, 0.0
      %317 = vst.msk [vmem:[#allocation2 + $0x200] sm:$0xff] %vm252, 0.0
      %318 = vst.msk [vmem:[#allocation2 + $0x208] sm:$0xff] %vm252, 0.0
      %319 = vst.msk [vmem:[#allocation2 + $0x210] sm:$0xff] %vm252, 0.0
      %320 = vst.msk [vmem:[#allocation2 + $0x218] sm:$0xff] %vm252, 0.0
      %321 = vst.msk [vmem:[#allocation2 + $0x220] sm:$0xff] %vm252, 0.0
      %322 = vst.msk [vmem:[#allocation2 + $0x228] sm:$0xff] %vm252, 0.0
      %323 = vst.msk [vmem:[#allocation2 + $0x230] sm:$0xff] %vm252, 0.0
      %324 = vst.msk [vmem:[#allocation2 + $0x238] sm:$0xff] %vm252, 0.0
      %325 = vst.msk [vmem:[#allocation3] sm:$0xff] %vm252, 0.0
      %326 = vst.msk [vmem:[#allocation3 + $0x8] sm:$0xff] %vm252, 0.0
      %327 = vst.msk [vmem:[#allocation3 + $0x10] sm:$0xff] %vm252, 0.0
      %328 = vst.msk [vmem:[#allocation3 + $0x18] sm:$0xff] %vm252, 0.0
      %329 = vst.msk [vmem:[#allocation3 + $0x20] sm:$0xff] %vm252, 0.0
      %330 = vst.msk [vmem:[#allocation3 + $0x28] sm:$0xff] %vm252, 0.0
      %331 = vst.msk [vmem:[#allocation3 + $0x30] sm:$0xff] %vm252, 0.0
      %332 = vst.msk [vmem:[#allocation3 + $0x38] sm:$0xff] %vm252, 0.0
      %333 = vst.msk [vmem:[#allocation3 + $0x40] sm:$0xff] %vm252, 0.0
      %334 = vst.msk [vmem:[#allocation3 + $0x48] sm:$0xff] %vm252, 0.0
      %335 = vst.msk [vmem:[#allocation3 + $0x50] sm:$0xff] %vm252, 0.0
      %336 = vst.msk [vmem:[#allocation3 + $0x58] sm:$0xff] %vm252, 0.0
      %337 = vst.msk [vmem:[#allocation3 + $0x60] sm:$0xff] %vm252, 0.0
      %338 = vst.msk [vmem:[#allocation3 + $0x68] sm:$0xff] %vm252, 0.0
      %339 = vst.msk [vmem:[#allocation3 + $0x70] sm:$0xff] %vm252, 0.0
      %340 = vst.msk [vmem:[#allocation3 + $0x78] sm:$0xff] %vm252, 0.0
      %341 = vst.msk [vmem:[#allocation3 + $0x80] sm:$0xff] %vm252, 0.0
      %342 = vst.msk [vmem:[#allocation3 + $0x88] sm:$0xff] %vm252, 0.0
      %343 = vst.msk [vmem:[#allocation3 + $0x90] sm:$0xff] %vm252, 0.0
      %344 = vst.msk [vmem:[#allocation3 + $0x98] sm:$0xff] %vm252, 0.0
      %345 = vst.msk [vmem:[#allocation3 + $0xa0] sm:$0xff] %vm252, 0.0
      %346 = vst.msk [vmem:[#allocation3 + $0xa8] sm:$0xff] %vm252, 0.0
      %347 = vst.msk [vmem:[#allocation3 + $0xb0] sm:$0xff] %vm252, 0.0
      %348 = vst.msk [vmem:[#allocation3 + $0xb8] sm:$0xff] %vm252, 0.0
      %349 = vst.msk [vmem:[#allocation3 + $0xc0] sm:$0xff] %vm252, 0.0
      %350 = vst.msk [vmem:[#allocation3 + $0xc8] sm:$0xff] %vm252, 0.0
      %351 = vst.msk [vmem:[#allocation3 + $0xd0] sm:$0xff] %vm252, 0.0
      %352 = vst.msk [vmem:[#allocation3 + $0xd8] sm:$0xff] %vm252, 0.0
      %353 = vst.msk [vmem:[#allocation3 + $0xe0] sm:$0xff] %vm252, 0.0
      %354 = vst.msk [vmem:[#allocation3 + $0xe8] sm:$0xff] %vm252, 0.0
      %355 = vst.msk [vmem:[#allocation3 + $0xf0] sm:$0xff] %vm252, 0.0
      %356 = vst.msk [vmem:[#allocation3 + $0xf8] sm:$0xff] %vm252, 0.0
      %357 = vst.msk [vmem:[#allocation3 + $0x100] sm:$0xff] %vm252, 0.0
      %358 = vst.msk [vmem:[#allocation3 + $0x108] sm:$0xff] %vm252, 0.0
      %359 = vst.msk [vmem:[#allocation3 + $0x110] sm:$0xff] %vm252, 0.0
      %360 = vst.msk [vmem:[#allocation3 + $0x118] sm:$0xff] %vm252, 0.0
      %361 = vst.msk [vmem:[#allocation3 + $0x120] sm:$0xff] %vm252, 0.0
      %362 = vst.msk [vmem:[#allocation3 + $0x128] sm:$0xff] %vm252, 0.0
      %363 = vst.msk [vmem:[#allocation3 + $0x130] sm:$0xff] %vm252, 0.0
      %364 = vst.msk [vmem:[#allocation3 + $0x138] sm:$0xff] %vm252, 0.0
      %365 = vst.msk [vmem:[#allocation3 + $0x140] sm:$0xff] %vm252, 0.0
      %366 = vst.msk [vmem:[#allocation3 + $0x148] sm:$0xff] %vm252, 0.0
      %367 = vst.msk [vmem:[#allocation3 + $0x150] sm:$0xff] %vm252, 0.0
      %368 = vst.msk [vmem:[#allocation3 + $0x158] sm:$0xff] %vm252, 0.0
      %369 = vst.msk [vmem:[#allocation3 + $0x160] sm:$0xff] %vm252, 0.0
      %370 = vst.msk [vmem:[#allocation3 + $0x168] sm:$0xff] %vm252, 0.0
      %371 = vst.msk [vmem:[#allocation3 + $0x170] sm:$0xff] %vm252, 0.0
      %372 = vst.msk [vmem:[#allocation3 + $0x178] sm:$0xff] %vm252, 0.0
      %373 = vst.msk [vmem:[#allocation3 + $0x180] sm:$0xff] %vm252, 0.0
      %374 = vst.msk [vmem:[#allocation3 + $0x188] sm:$0xff] %vm252, 0.0
      %375 = vst.msk [vmem:[#allocation3 + $0x190] sm:$0xff] %vm252, 0.0
      %376 = vst.msk [vmem:[#allocation3 + $0x198] sm:$0xff] %vm252, 0.0
      %377 = vst.msk [vmem:[#allocation3 + $0x1a0] sm:$0xff] %vm252, 0.0
      %378 = vst.msk [vmem:[#allocation3 + $0x1a8] sm:$0xff] %vm252, 0.0
      %379 = vst.msk [vmem:[#allocation3 + $0x1b0] sm:$0xff] %vm252, 0.0
      %380 = vst.msk [vmem:[#allocation3 + $0x1b8] sm:$0xff] %vm252, 0.0
      %381 = vst.msk [vmem:[#allocation3 + $0x1c0] sm:$0xff] %vm252, 0.0
      %382 = vst.msk [vmem:[#allocation3 + $0x1c8] sm:$0xff] %vm252, 0.0
      %383 = vst.msk [vmem:[#allocation3 + $0x1d0] sm:$0xff] %vm252, 0.0
      %384 = vst.msk [vmem:[#allocation3 + $0x1d8] sm:$0xff] %vm252, 0.0
      %385 = vst.msk [vmem:[#allocation3 + $0x1e0] sm:$0xff] %vm252, 0.0
      %386 = vst.msk [vmem:[#allocation3 + $0x1e8] sm:$0xff] %vm252, 0.0
      %387 = vst.msk [vmem:[#allocation3 + $0x1f0] sm:$0xff] %vm252, 0.0
      %388 = vst.msk [vmem:[#allocation3 + $0x1f8] sm:$0xff] %vm252, 0.0
      %389 = vst.msk [vmem:[#allocation3 + $0x200] sm:$0xff] %vm252, 0.0
      %390 = vst.msk [vmem:[#allocation3 + $0x208] sm:$0xff] %vm252, 0.0
      %391 = vst.msk [vmem:[#allocation3 + $0x210] sm:$0xff] %vm252, 0.0
      %392 = vst.msk [vmem:[#allocation3 + $0x218] sm:$0xff] %vm252, 0.0
      %393 = vst.msk [vmem:[#allocation3 + $0x220] sm:$0xff] %vm252, 0.0
      %394 = vst.msk [vmem:[#allocation3 + $0x228] sm:$0xff] %vm252, 0.0
      %395 = vst.msk [vmem:[#allocation3 + $0x230] sm:$0xff] %vm252, 0.0
      %396 = vst.msk [vmem:[#allocation3 + $0x238] sm:$0xff] %vm252, 0.0
      %v397 = vld [vmem:[%s246] sm:$0xff]
      %v398 = vld [vmem:[%s246 + $0x8] sm:$0xff]
      %v399 = vld [vmem:[%s246 + $0x10] sm:$0xff]
      %v400 = vld [vmem:[%s246 + $0x18] sm:$0xff]
      %v401 = vld [vmem:[%s246 + $0x20] sm:$0xff]
      %v402 = vld [vmem:[%s246 + $0x28] sm:$0xff]
      %v403 = vld [vmem:[%s246 + $0x30] sm:$0xff]
      %v404 = vld [vmem:[%s246 + $0x38] sm:$0xff]
      %v405 = vld [vmem:[%s246 + $0x40] sm:$0xff]
      %v406 = vld [vmem:[%s246 + $0x48] sm:$0xff]
      %v407 = vld [vmem:[%s246 + $0x50] sm:$0xff]
      %v408 = vld [vmem:[%s246 + $0x58] sm:$0xff]
      %v409 = vld [vmem:[%s246 + $0x60] sm:$0xff]
      %v410 = vld [vmem:[%s246 + $0x68] sm:$0xff]
      %v411 = vld [vmem:[%s246 + $0x70] sm:$0xff]
      %v412 = vld [vmem:[%s246 + $0x78] sm:$0xff]
      %v413 = vld [vmem:[%s246 + $0x80] sm:$0xff]
      %v414 = vld [vmem:[%s246 + $0x88] sm:$0xff]
      %v415 = vld [vmem:[%s246 + $0x90] sm:$0xff]
      %v416 = vld [vmem:[%s246 + $0x98] sm:$0xff]
      %v417 = vld [vmem:[%s246 + $0xa0] sm:$0xff]
      %v418 = vld [vmem:[%s246 + $0xa8] sm:$0xff]
      %v419 = vld [vmem:[%s246 + $0xb0] sm:$0xff]
      %v420 = vld [vmem:[%s246 + $0xb8] sm:$0xff]
      %v421 = vld [vmem:[%s246 + $0xc0] sm:$0xff]
      %v422 = vld [vmem:[%s246 + $0xc8] sm:$0xff]
      %v423 = vld [vmem:[%s246 + $0xd0] sm:$0xff]
      %v424 = vld [vmem:[%s246 + $0xd8] sm:$0xff]
      %v425 = vld [vmem:[%s246 + $0xe0] sm:$0xff]
      %v426 = vld [vmem:[%s246 + $0xe8] sm:$0xff]
      %v427 = vld [vmem:[%s246 + $0xf0] sm:$0xff]
      %v428 = vld [vmem:[%s246 + $0xf8] sm:$0xff]
      %s429 = scalar_lea.vmem [#allocation2], 32
      %430 = vst.msk [vmem:[%s429 + $0x8] sm:$0xff] %vm252, %v397
      %431 = vst.msk [vmem:[%s429 + $0x10] sm:$0xff] %vm252, %v398
      %432 = vst.msk [vmem:[%s429 + $0x28] sm:$0xff] %vm252, %v399
      %433 = vst.msk [vmem:[%s429 + $0x30] sm:$0xff] %vm252, %v400
      %434 = vst.msk [vmem:[%s429 + $0x48] sm:$0xff] %vm252, %v401
      %435 = vst.msk [vmem:[%s429 + $0x50] sm:$0xff] %vm252, %v402
      %436 = vst.msk [vmem:[%s429 + $0x68] sm:$0xff] %vm252, %v403
      %437 = vst.msk [vmem:[%s429 + $0x70] sm:$0xff] %vm252, %v404
      %438 = vst.msk [vmem:[%s429 + $0x88] sm:$0xff] %vm252, %v405
      %439 = vst.msk [vmem:[%s429 + $0x90] sm:$0xff] %vm252, %v406
      %440 = vst.msk [vmem:[%s429 + $0xa8] sm:$0xff] %vm252, %v407
      %441 = vst.msk [vmem:[%s429 + $0xb0] sm:$0xff] %vm252, %v408
      %442 = vst.msk [vmem:[%s429 + $0xc8] sm:$0xff] %vm252, %v409
      %443 = vst.msk [vmem:[%s429 + $0xd0] sm:$0xff] %vm252, %v410
      %444 = vst.msk [vmem:[%s429 + $0xe8] sm:$0xff] %vm252, %v411
      %445 = vst.msk [vmem:[%s429 + $0xf0] sm:$0xff] %vm252, %v412
      %446 = vst.msk [vmem:[%s429 + $0x108] sm:$0xff] %vm252, %v413
      %447 = vst.msk [vmem:[%s429 + $0x110] sm:$0xff] %vm252, %v414
      %448 = vst.msk [vmem:[%s429 + $0x128] sm:$0xff] %vm252, %v415
      %449 = vst.msk [vmem:[%s429 + $0x130] sm:$0xff] %vm252, %v416
      %450 = vst.msk [vmem:[%s429 + $0x148] sm:$0xff] %vm252, %v417
      %451 = vst.msk [vmem:[%s429 + $0x150] sm:$0xff] %vm252, %v418
      %452 = vst.msk [vmem:[%s429 + $0x168] sm:$0xff] %vm252, %v419
      %453 = vst.msk [vmem:[%s429 + $0x170] sm:$0xff] %vm252, %v420
      %454 = vst.msk [vmem:[%s429 + $0x188] sm:$0xff] %vm252, %v421
      %455 = vst.msk [vmem:[%s429 + $0x190] sm:$0xff] %vm252, %v422
      %456 = vst.msk [vmem:[%s429 + $0x1a8] sm:$0xff] %vm252, %v423
      %457 = vst.msk [vmem:[%s429 + $0x1b0] sm:$0xff] %vm252, %v424
      %458 = vst.msk [vmem:[%s429 + $0x1c8] sm:$0xff] %vm252, %v425
      %459 = vst.msk [vmem:[%s429 + $0x1d0] sm:$0xff] %vm252, %v426
      %460 = vst.msk [vmem:[%s429 + $0x1e8] sm:$0xff] %vm252, %v427
      %461 = vst.msk [vmem:[%s429 + $0x1f0] sm:$0xff] %vm252, %v428
      %v462 = vld [vmem:[#allocation2] sm:$0xff]
      %v463 = vld [vmem:[#allocation2 + $0x8] sm:$0xff]
      %v464 = vld [vmem:[#allocation2 + $0x10] sm:$0xff]
      %v465 = vld [vmem:[#allocation2 + $0x18] sm:$0xff]
      %v466 = vld [vmem:[#allocation2 + $0x20] sm:$0xff]
      %v467 = vld [vmem:[#allocation2 + $0x28] sm:$0xff]
      %v468 = vld [vmem:[#allocation2 + $0x30] sm:$0xff]
      %v469 = vld [vmem:[#allocation2 + $0x38] sm:$0xff]
      %v470 = vld [vmem:[#allocation2 + $0x40] sm:$0xff]
      %v471 = vld [vmem:[#allocation2 + $0x48] sm:$0xff]
      %v472 = vld [vmem:[#allocation2 + $0x50] sm:$0xff]
      %v473 = vld [vmem:[#allocation2 + $0x58] sm:$0xff]
      %v474 = vld [vmem:[#allocation2 + $0x60] sm:$0xff]
      %v475 = vld [vmem:[#allocation2 + $0x68] sm:$0xff]
      %v476 = vld [vmem:[#allocation2 + $0x70] sm:$0xff]
      %v477 = vld [vmem:[#allocation2 + $0x78] sm:$0xff]
      %v478 = vld [vmem:[#allocation2 + $0x80] sm:$0xff]
      %v479 = vld [vmem:[#allocation2 + $0x88] sm:$0xff]
      %v480 = vld [vmem:[#allocation2 + $0x90] sm:$0xff]
      %v481 = vld [vmem:[#allocation2 + $0x98] sm:$0xff]
      %v482 = vld [vmem:[#allocation2 + $0xa0] sm:$0xff]
      %v483 = vld [vmem:[#allocation2 + $0xa8] sm:$0xff]
      %v484 = vld [vmem:[#allocation2 + $0xb0] sm:$0xff]
      %v485 = vld [vmem:[#allocation2 + $0xb8] sm:$0xff]
      %v486 = vld [vmem:[#allocation2 + $0xc0] sm:$0xff]
      %v487 = vld [vmem:[#allocation2 + $0xc8] sm:$0xff]
      %v488 = vld [vmem:[#allocation2 + $0xd0] sm:$0xff]
      %v489 = vld [vmem:[#allocation2 + $0xd8] sm:$0xff]
      %v490 = vld [vmem:[#allocation2 + $0xe0] sm:$0xff]
      %v491 = vld [vmem:[#allocation2 + $0xe8] sm:$0xff]
      %v492 = vld [vmem:[#allocation2 + $0xf0] sm:$0xff]
      %v493 = vld [vmem:[#allocation2 + $0xf8] sm:$0xff]
      %v494 = vld [vmem:[#allocation2 + $0x100] sm:$0xff]
      %v495 = vld [vmem:[#allocation2 + $0x108] sm:$0xff]
      %v496 = vld [vmem:[#allocation2 + $0x110] sm:$0xff]
      %v497 = vld [vmem:[#allocation2 + $0x118] sm:$0xff]
      %v498 = vld [vmem:[#allocation2 + $0x120] sm:$0xff]
      %v499 = vld [vmem:[#allocation2 + $0x128] sm:$0xff]
      %v500 = vld [vmem:[#allocation2 + $0x130] sm:$0xff]
      %v501 = vld [vmem:[#allocation2 + $0x138] sm:$0xff]
      %v502 = vld [vmem:[#allocation2 + $0x140] sm:$0xff]
      %v503 = vld [vmem:[#allocation2 + $0x148] sm:$0xff]
      %v504 = vld [vmem:[#allocation2 + $0x150] sm:$0xff]
      %v505 = vld [vmem:[#allocation2 + $0x158] sm:$0xff]
      %v506 = vld [vmem:[#allocation2 + $0x160] sm:$0xff]
      %v507 = vld [vmem:[#allocation2 + $0x168] sm:$0xff]
      %v508 = vld [vmem:[#allocation2 + $0x170] sm:$0xff]
      %v509 = vld [vmem:[#allocation2 + $0x178] sm:$0xff]
      %v510 = vld [vmem:[#allocation2 + $0x180] sm:$0xff]
      %v511 = vld [vmem:[#allocation2 + $0x188] sm:$0xff]
      %v512 = vld [vmem:[#allocation2 + $0x190] sm:$0xff]
      %v513 = vld [vmem:[#allocation2 + $0x198] sm:$0xff]
      %v514 = vld [vmem:[#allocation2 + $0x1a0] sm:$0xff]
      %v515 = vld [vmem:[#allocation2 + $0x1a8] sm:$0xff]
      %v516 = vld [vmem:[#allocation2 + $0x1b0] sm:$0xff]
      %v517 = vld [vmem:[#allocation2 + $0x1b8] sm:$0xff]
      %v518 = vld [vmem:[#allocation2 + $0x1c0] sm:$0xff]
      %v519 = vld [vmem:[#allocation2 + $0x1c8] sm:$0xff]
      %v520 = vld [vmem:[#allocation2 + $0x1d0] sm:$0xff]
      %v521 = vld [vmem:[#allocation2 + $0x1d8] sm:$0xff]
      %v522 = vld [vmem:[#allocation2 + $0x1e0] sm:$0xff]
      %v523 = vld [vmem:[#allocation2 + $0x1e8] sm:$0xff]
      %v524 = vld [vmem:[#allocation2 + $0x1f0] sm:$0xff]
      %v525 = vld [vmem:[#allocation2 + $0x1f8] sm:$0xff]
      %v526 = vld [vmem:[#allocation2 + $0x200] sm:$0xff]
      %v527 = vld [vmem:[#allocation2 + $0x208] sm:$0xff]
      %v528 = vld [vmem:[#allocation2 + $0x210] sm:$0xff]
      %v529 = vld [vmem:[#allocation2 + $0x218] sm:$0xff]
      %v530 = vld [vmem:[#allocation2 + $0x220] sm:$0xff]
      %v531 = vld [vmem:[#allocation2 + $0x228] sm:$0xff]
      %v532 = vld [vmem:[#allocation2 + $0x230] sm:$0xff]
      %v533 = vld [vmem:[#allocation2 + $0x238] sm:$0xff]
      %vm582 = vcmask 1040384
      %v583 = vrot.slane %v462, 7
      %v584 = vrot.slane %v463, 7
      %v585 = vsel %vm582, %v583, %v584
      %v586 = vrot.slane %v464, 7
      %v587 = vsel %vm582, %v584, %v586
      %v588 = vrot.slane %v466, 7
      %v589 = vrot.slane %v467, 7
      %v590 = vsel %vm582, %v588, %v589
      %v591 = vrot.slane %v468, 7
      %v592 = vsel %vm582, %v589, %v591
      %v593 = vrot.slane %v470, 7
      %v594 = vrot.slane %v471, 7
      %v595 = vsel %vm582, %v593, %v594
      %v596 = vrot.slane %v472, 7
      %v597 = vsel %vm582, %v594, %v596
      %v598 = vrot.slane %v474, 7
      %v599 = vrot.slane %v475, 7
      %v600 = vsel %vm582, %v598, %v599
      %v601 = vrot.slane %v476, 7
      %v602 = vsel %vm582, %v599, %v601
      %v603 = vrot.slane %v478, 7
      %v604 = vrot.slane %v479, 7
      %v605 = vsel %vm582, %v603, %v604
      %v606 = vrot.slane %v480, 7
      %v607 = vsel %vm582, %v604, %v606
      %v608 = vrot.slane %v482, 7
      %v609 = vrot.slane %v483, 7
      %v610 = vsel %vm582, %v608, %v609
      %v611 = vrot.slane %v484, 7
      %v612 = vsel %vm582, %v609, %v611
      %v613 = vrot.slane %v486, 7
      %v614 = vrot.slane %v487, 7
      %v615 = vsel %vm582, %v613, %v614
      %v616 = vrot.slane %v488, 7
      %v617 = vsel %vm582, %v614, %v616
      %v618 = vrot.slane %v490, 7
      %v619 = vrot.slane %v491, 7
      %v620 = vsel %vm582, %v618, %v619
      %v621 = vrot.slane %v492, 7
      %v622 = vsel %vm582, %v619, %v621
      %v623 = vrot.slane %v494, 7
      %v624 = vrot.slane %v495, 7
      %v625 = vsel %vm582, %v623, %v624
      %v626 = vrot.slane %v496, 7
      %v627 = vsel %vm582, %v624, %v626
      %v628 = vrot.slane %v498, 7
      %v629 = vrot.slane %v499, 7
      %v630 = vsel %vm582, %v628, %v629
      %v631 = vrot.slane %v500, 7
      %v632 = vsel %vm582, %v629, %v631
      %v633 = vrot.slane %v502, 7
      %v634 = vrot.slane %v503, 7
      %v635 = vsel %vm582, %v633, %v634
      %v636 = vrot.slane %v504, 7
      %v637 = vsel %vm582, %v634, %v636
      %v638 = vrot.slane %v506, 7
      %v639 = vrot.slane %v507, 7
      %v640 = vsel %vm582, %v638, %v639
      %v641 = vrot.slane %v508, 7
      %v642 = vsel %vm582, %v639, %v641
      %v643 = vrot.slane %v510, 7
      %v644 = vrot.slane %v511, 7
      %v645 = vsel %vm582, %v643, %v644
      %v646 = vrot.slane %v512, 7
      %v647 = vsel %vm582, %v644, %v646
      %v648 = vrot.slane %v514, 7
      %v649 = vrot.slane %v515, 7
      %v650 = vsel %vm582, %v648, %v649
      %v651 = vrot.slane %v516, 7
      %v652 = vsel %vm582, %v649, %v651
      %v653 = vrot.slane %v518, 7
      %v654 = vrot.slane %v519, 7
      %v655 = vsel %vm582, %v653, %v654
      %v656 = vrot.slane %v520, 7
      %v657 = vsel %vm582, %v654, %v656
      %v658 = vrot.slane %v522, 7
      %v659 = vrot.slane %v523, 7
      %v660 = vsel %vm582, %v658, %v659
      %v661 = vrot.slane %v524, 7
      %v662 = vsel %vm582, %v659, %v661
      %vm711 = vcmask 1046528
      %v712 = vrot.slane %v463, 1
      %v713 = vrot.slane %v464, 1
      %v714 = vsel %vm711, %v712, %v713
      %v715 = vrot.slane %v465, 1
      %v716 = vsel %vm711, %v713, %v715
      %v717 = vrot.slane %v467, 1
      %v718 = vrot.slane %v468, 1
      %v719 = vsel %vm711, %v717, %v718
      %v720 = vrot.slane %v469, 1
      %v721 = vsel %vm711, %v718, %v720
      %v722 = vrot.slane %v471, 1
      %v723 = vrot.slane %v472, 1
      %v724 = vsel %vm711, %v722, %v723
      %v725 = vrot.slane %v473, 1
      %v726 = vsel %vm711, %v723, %v725
      %v727 = vrot.slane %v475, 1
      %v728 = vrot.slane %v476, 1
      %v729 = vsel %vm711, %v727, %v728
      %v730 = vrot.slane %v477, 1
      %v731 = vsel %vm711, %v728, %v730
      %v732 = vrot.slane %v479, 1
      %v733 = vrot.slane %v480, 1
      %v734 = vsel %vm711, %v732, %v733
      %v735 = vrot.slane %v481, 1
      %v736 = vsel %vm711, %v733, %v735
      %v737 = vrot.slane %v483, 1
      %v738 = vrot.slane %v484, 1
      %v739 = vsel %vm711, %v737, %v738
      %v740 = vrot.slane %v485, 1
      %v741 = vsel %vm711, %v738, %v740
      %v742 = vrot.slane %v487, 1
      %v743 = vrot.slane %v488, 1
      %v744 = vsel %vm711, %v742, %v743
      %v745 = vrot.slane %v489, 1
      %v746 = vsel %vm711, %v743, %v745
      %v747 = vrot.slane %v491, 1
      %v748 = vrot.slane %v492, 1
      %v749 = vsel %vm711, %v747, %v748
      %v750 = vrot.slane %v493, 1
      %v751 = vsel %vm711, %v748, %v750
      %v752 = vrot.slane %v495, 1
      %v753 = vrot.slane %v496, 1
      %v754 = vsel %vm711, %v752, %v753
      %v755 = vrot.slane %v497, 1
      %v756 = vsel %vm711, %v753, %v755
      %v757 = vrot.slane %v499, 1
      %v758 = vrot.slane %v500, 1
      %v759 = vsel %vm711, %v757, %v758
      %v760 = vrot.slane %v501, 1
      %v761 = vsel %vm711, %v758, %v760
      %v762 = vrot.slane %v503, 1
      %v763 = vrot.slane %v504, 1
      %v764 = vsel %vm711, %v762, %v763
      %v765 = vrot.slane %v505, 1
      %v766 = vsel %vm711, %v763, %v765
      %v767 = vrot.slane %v507, 1
      %v768 = vrot.slane %v508, 1
      %v769 = vsel %vm711, %v767, %v768
      %v770 = vrot.slane %v509, 1
      %v771 = vsel %vm711, %v768, %v770
      %v772 = vrot.slane %v511, 1
      %v773 = vrot.slane %v512, 1
      %v774 = vsel %vm711, %v772, %v773
      %v775 = vrot.slane %v513, 1
      %v776 = vsel %vm711, %v773, %v775
      %v777 = vrot.slane %v515, 1
      %v778 = vrot.slane %v516, 1
      %v779 = vsel %vm711, %v777, %v778
      %v780 = vrot.slane %v517, 1
      %v781 = vsel %vm711, %v778, %v780
      %v782 = vrot.slane %v519, 1
      %v783 = vrot.slane %v520, 1
      %v784 = vsel %vm711, %v782, %v783
      %v785 = vrot.slane %v521, 1
      %v786 = vsel %vm711, %v783, %v785
      %v787 = vrot.slane %v523, 1
      %v788 = vrot.slane %v524, 1
      %v789 = vsel %vm711, %v787, %v788
      %v790 = vrot.slane %v525, 1
      %v791 = vsel %vm711, %v788, %v790
      %v795 = vrot.slane %v526, 7
      %v796 = vrot.slane %v527, 7
      %v797 = vsel %vm582, %v795, %v796
      %v798 = vrot.slane %v528, 7
      %v799 = vsel %vm582, %v796, %v798
      %v801 = vrot.slane %v527, 1
      %v802 = vrot.slane %v528, 1
      %v803 = vsel %vm711, %v801, %v802
      %v804 = vrot.slane %v529, 1
      %v805 = vsel %vm711, %v802, %v804
      %v809 = vrot.slane %v530, 7
      %v810 = vrot.slane %v531, 7
      %v811 = vsel %vm582, %v809, %v810
      %v812 = vrot.slane %v532, 7
      %v813 = vsel %vm582, %v810, %v812
      %v815 = vrot.slane %v531, 1
      %v816 = vrot.slane %v532, 1
      %v817 = vsel %vm711, %v815, %v816
      %v818 = vrot.slane %v533, 1
      %v819 = vsel %vm711, %v816, %v818
      %820 = vrot.lane.b32.xlu0 %v463, 8
      %v821 = vpop.permute.xlu0 %820
      %822 = vrot.lane.b32.xlu0 %v464, 8
      %v823 = vpop.permute.xlu0 %822
      %824 = vrot.lane.b32.xlu0 %v467, 8
      %v825 = vpop.permute.xlu0 %824
      %826 = vrot.lane.b32.xlu0 %v468, 8
      %v827 = vpop.permute.xlu0 %826
      %828 = vrot.lane.b32.xlu0 %v471, 8
      %v829 = vpop.permute.xlu0 %828
      %830 = vrot.lane.b32.xlu0 %v472, 8
      %v831 = vpop.permute.xlu0 %830
      %832 = vrot.lane.b32.xlu0 %v475, 8
      %v833 = vpop.permute.xlu0 %832
      %834 = vrot.lane.b32.xlu0 %v476, 8
      %v835 = vpop.permute.xlu0 %834
      %836 = vrot.lane.b32.xlu0 %v479, 8
      %v837 = vpop.permute.xlu0 %836
      %838 = vrot.lane.b32.xlu0 %v480, 8
      %v839 = vpop.permute.xlu0 %838
      %840 = vrot.lane.b32.xlu0 %v483, 8
      %v841 = vpop.permute.xlu0 %840
      %842 = vrot.lane.b32.xlu0 %v484, 8
      %v843 = vpop.permute.xlu0 %842
      %844 = vrot.lane.b32.xlu0 %v487, 8
      %v845 = vpop.permute.xlu0 %844
      %846 = vrot.lane.b32.xlu0 %v488, 8
      %v847 = vpop.permute.xlu0 %846
      %848 = vrot.lane.b32.xlu0 %v491, 8
      %v849 = vpop.permute.xlu0 %848
      %850 = vrot.lane.b32.xlu0 %v492, 8
      %v851 = vpop.permute.xlu0 %850
      %852 = vrot.lane.b32.xlu0 %v495, 8
      %v853 = vpop.permute.xlu0 %852
      %854 = vrot.lane.b32.xlu0 %v496, 8
      %v855 = vpop.permute.xlu0 %854
      %856 = vrot.lane.b32.xlu0 %v499, 8
      %v857 = vpop.permute.xlu0 %856
      %858 = vrot.lane.b32.xlu0 %v500, 8
      %v859 = vpop.permute.xlu0 %858
      %860 = vrot.lane.b32.xlu0 %v503, 8
      %v861 = vpop.permute.xlu0 %860
      %862 = vrot.lane.b32.xlu0 %v504, 8
      %v863 = vpop.permute.xlu0 %862
      %864 = vrot.lane.b32.xlu0 %v507, 8
      %v865 = vpop.permute.xlu0 %864
      %866 = vrot.lane.b32.xlu0 %v508, 8
      %v867 = vpop.permute.xlu0 %866
      %868 = vrot.lane.b32.xlu0 %v511, 8
      %v869 = vpop.permute.xlu0 %868
      %870 = vrot.lane.b32.xlu0 %v512, 8
      %v871 = vpop.permute.xlu0 %870
      %872 = vrot.lane.b32.xlu0 %v515, 8
      %v873 = vpop.permute.xlu0 %872
      %874 = vrot.lane.b32.xlu0 %v516, 8
      %v875 = vpop.permute.xlu0 %874
      %876 = vrot.lane.b32.xlu0 %v519, 8
      %v877 = vpop.permute.xlu0 %876
      %878 = vrot.lane.b32.xlu0 %v520, 8
      %v879 = vpop.permute.xlu0 %878
      %880 = vrot.lane.b32.xlu0 %v523, 8
      %v881 = vpop.permute.xlu0 %880
      %882 = vrot.lane.b32.xlu0 %v524, 8
      %v883 = vpop.permute.xlu0 %882
      %916 = vrot.lane.b32.xlu0 %v714, 16
      %v917 = vpop.permute.xlu0 %916
      %918 = vrot.lane.b32.xlu0 %v716, 16
      %v919 = vpop.permute.xlu0 %918
      %920 = vrot.lane.b32.xlu0 %v719, 16
      %v921 = vpop.permute.xlu0 %920
      %922 = vrot.lane.b32.xlu0 %v721, 16
      %v923 = vpop.permute.xlu0 %922
      %924 = vrot.lane.b32.xlu0 %v724, 16
      %v925 = vpop.permute.xlu0 %924
      %926 = vrot.lane.b32.xlu0 %v726, 16
      %v927 = vpop.permute.xlu0 %926
      %928 = vrot.lane.b32.xlu0 %v729, 16
      %v929 = vpop.permute.xlu0 %928
      %930 = vrot.lane.b32.xlu0 %v731, 16
      %v931 = vpop.permute.xlu0 %930
      %932 = vrot.lane.b32.xlu0 %v734, 16
      %v933 = vpop.permute.xlu0 %932
      %934 = vrot.lane.b32.xlu0 %v736, 16
      %v935 = vpop.permute.xlu0 %934
      %936 = vrot.lane.b32.xlu0 %v739, 16
      %v937 = vpop.permute.xlu0 %936
      %938 = vrot.lane.b32.xlu0 %v741, 16
      %v939 = vpop.permute.xlu0 %938
      %940 = vrot.lane.b32.xlu0 %v744, 16
      %v941 = vpop.permute.xlu0 %940
      %942 = vrot.lane.b32.xlu0 %v746, 16
      %v943 = vpop.permute.xlu0 %942
      %944 = vrot.lane.b32.xlu0 %v749, 16
      %v945 = vpop.permute.xlu0 %944
      %946 = vrot.lane.b32.xlu0 %v751, 16
      %v947 = vpop.permute.xlu0 %946
      %948 = vrot.lane.b32.xlu0 %v754, 16
      %v949 = vpop.permute.xlu0 %948
      %950 = vrot.lane.b32.xlu0 %v756, 16
      %v951 = vpop.permute.xlu0 %950
      %952 = vrot.lane.b32.xlu0 %v759, 16
      %v953 = vpop.permute.xlu0 %952
      %954 = vrot.lane.b32.xlu0 %v761, 16
      %v955 = vpop.permute.xlu0 %954
      %956 = vrot.lane.b32.xlu0 %v764, 16
      %v957 = vpop.permute.xlu0 %956
      %958 = vrot.lane.b32.xlu0 %v766, 16
      %v959 = vpop.permute.xlu0 %958
      %960 = vrot.lane.b32.xlu0 %v769, 16
      %v961 = vpop.permute.xlu0 %960
      %962 = vrot.lane.b32.xlu0 %v771, 16
      %v963 = vpop.permute.xlu0 %962
      %964 = vrot.lane.b32.xlu0 %v774, 16
      %v965 = vpop.permute.xlu0 %964
      %966 = vrot.lane.b32.xlu0 %v776, 16
      %v967 = vpop.permute.xlu0 %966
      %968 = vrot.lane.b32.xlu0 %v779, 16
      %v969 = vpop.permute.xlu0 %968
      %970 = vrot.lane.b32.xlu0 %v781, 16
      %v971 = vpop.permute.xlu0 %970
      %972 = vrot.lane.b32.xlu0 %v784, 16
      %v973 = vpop.permute.xlu0 %972
      %974 = vrot.lane.b32.xlu0 %v786, 16
      %v975 = vpop.permute.xlu0 %974
      %976 = vrot.lane.b32.xlu0 %v789, 16
      %v977 = vpop.permute.xlu0 %976
      %978 = vrot.lane.b32.xlu0 %v791, 16
      %v979 = vpop.permute.xlu0 %978
      %1012 = vrot.lane.b32.xlu0 %v590, 24
      %v1013 = vpop.permute.xlu0 %1012
      %1014 = vrot.lane.b32.xlu0 %v592, 24
      %v1015 = vpop.permute.xlu0 %1014
      %1016 = vrot.lane.b32.xlu0 %v595, 24
      %v1017 = vpop.permute.xlu0 %1016
      %1018 = vrot.lane.b32.xlu0 %v597, 24
      %v1019 = vpop.permute.xlu0 %1018
      %1020 = vrot.lane.b32.xlu0 %v600, 24
      %v1021 = vpop.permute.xlu0 %1020
      %1022 = vrot.lane.b32.xlu0 %v602, 24
      %v1023 = vpop.permute.xlu0 %1022
      %1024 = vrot.lane.b32.xlu0 %v605, 24
      %v1025 = vpop.permute.xlu0 %1024
      %1026 = vrot.lane.b32.xlu0 %v607, 24
      %v1027 = vpop.permute.xlu0 %1026
      %1028 = vrot.lane.b32.xlu0 %v610, 24
      %v1029 = vpop.permute.xlu0 %1028
      %1030 = vrot.lane.b32.xlu0 %v612, 24
      %v1031 = vpop.permute.xlu0 %1030
      %1032 = vrot.lane.b32.xlu0 %v615, 24
      %v1033 = vpop.permute.xlu0 %1032
      %1034 = vrot.lane.b32.xlu0 %v617, 24
      %v1035 = vpop.permute.xlu0 %1034
      %1036 = vrot.lane.b32.xlu0 %v620, 24
      %v1037 = vpop.permute.xlu0 %1036
      %1038 = vrot.lane.b32.xlu0 %v622, 24
      %v1039 = vpop.permute.xlu0 %1038
      %1040 = vrot.lane.b32.xlu0 %v625, 24
      %v1041 = vpop.permute.xlu0 %1040
      %1042 = vrot.lane.b32.xlu0 %v627, 24
      %v1043 = vpop.permute.xlu0 %1042
      %1044 = vrot.lane.b32.xlu0 %v630, 24
      %v1045 = vpop.permute.xlu0 %1044
      %1046 = vrot.lane.b32.xlu0 %v632, 24
      %v1047 = vpop.permute.xlu0 %1046
      %1048 = vrot.lane.b32.xlu0 %v635, 24
      %v1049 = vpop.permute.xlu0 %1048
      %1050 = vrot.lane.b32.xlu0 %v637, 24
      %v1051 = vpop.permute.xlu0 %1050
      %1052 = vrot.lane.b32.xlu0 %v640, 24
      %v1053 = vpop.permute.xlu0 %1052
      %1054 = vrot.lane.b32.xlu0 %v642, 24
      %v1055 = vpop.permute.xlu0 %1054
      %1056 = vrot.lane.b32.xlu0 %v645, 24
      %v1057 = vpop.permute.xlu0 %1056
      %1058 = vrot.lane.b32.xlu0 %v647, 24
      %v1059 = vpop.permute.xlu0 %1058
      %1060 = vrot.lane.b32.xlu0 %v650, 24
      %v1061 = vpop.permute.xlu0 %1060
      %1062 = vrot.lane.b32.xlu0 %v652, 24
      %v1063 = vpop.permute.xlu0 %1062
      %1064 = vrot.lane.b32.xlu0 %v655, 24
      %v1065 = vpop.permute.xlu0 %1064
      %1066 = vrot.lane.b32.xlu0 %v657, 24
      %v1067 = vpop.permute.xlu0 %1066
      %1068 = vrot.lane.b32.xlu0 %v660, 24
      %v1069 = vpop.permute.xlu0 %1068
      %1070 = vrot.lane.b32.xlu0 %v662, 24
      %v1071 = vpop.permute.xlu0 %1070
      %1072 = vrot.lane.b32.xlu0 %v797, 24
      %v1073 = vpop.permute.xlu0 %1072
      %1074 = vrot.lane.b32.xlu0 %v799, 24
      %v1075 = vpop.permute.xlu0 %1074
      %1108 = vrot.lane.b32.xlu0 %v467, 32
      %v1109 = vpop.permute.xlu0 %1108
      %1110 = vrot.lane.b32.xlu0 %v468, 32
      %v1111 = vpop.permute.xlu0 %1110
      %1112 = vrot.lane.b32.xlu0 %v471, 32
      %v1113 = vpop.permute.xlu0 %1112
      %1114 = vrot.lane.b32.xlu0 %v472, 32
      %v1115 = vpop.permute.xlu0 %1114
      %1116 = vrot.lane.b32.xlu0 %v475, 32
      %v1117 = vpop.permute.xlu0 %1116
      %1118 = vrot.lane.b32.xlu0 %v476, 32
      %v1119 = vpop.permute.xlu0 %1118
      %1120 = vrot.lane.b32.xlu0 %v479, 32
      %v1121 = vpop.permute.xlu0 %1120
      %1122 = vrot.lane.b32.xlu0 %v480, 32
      %v1123 = vpop.permute.xlu0 %1122
      %1124 = vrot.lane.b32.xlu0 %v483, 32
      %v1125 = vpop.permute.xlu0 %1124
      %1126 = vrot.lane.b32.xlu0 %v484, 32
      %v1127 = vpop.permute.xlu0 %1126
      %1128 = vrot.lane.b32.xlu0 %v487, 32
      %v1129 = vpop.permute.xlu0 %1128
      %1130 = vrot.lane.b32.xlu0 %v488, 32
      %v1131 = vpop.permute.xlu0 %1130
      %1132 = vrot.lane.b32.xlu0 %v491, 32
      %v1133 = vpop.permute.xlu0 %1132
      %1134 = vrot.lane.b32.xlu0 %v492, 32
      %v1135 = vpop.permute.xlu0 %1134
      %1136 = vrot.lane.b32.xlu0 %v495, 32
      %v1137 = vpop.permute.xlu0 %1136
      %1138 = vrot.lane.b32.xlu0 %v496, 32
      %v1139 = vpop.permute.xlu0 %1138
      %1140 = vrot.lane.b32.xlu0 %v499, 32
      %v1141 = vpop.permute.xlu0 %1140
      %1142 = vrot.lane.b32.xlu0 %v500, 32
      %v1143 = vpop.permute.xlu0 %1142
      %1144 = vrot.lane.b32.xlu0 %v503, 32
      %v1145 = vpop.permute.xlu0 %1144
      %1146 = vrot.lane.b32.xlu0 %v504, 32
      %v1147 = vpop.permute.xlu0 %1146
      %1148 = vrot.lane.b32.xlu0 %v507, 32
      %v1149 = vpop.permute.xlu0 %1148
      %1150 = vrot.lane.b32.xlu0 %v508, 32
      %v1151 = vpop.permute.xlu0 %1150
      %1152 = vrot.lane.b32.xlu0 %v511, 32
      %v1153 = vpop.permute.xlu0 %1152
      %1154 = vrot.lane.b32.xlu0 %v512, 32
      %v1155 = vpop.permute.xlu0 %1154
      %1156 = vrot.lane.b32.xlu0 %v515, 32
      %v1157 = vpop.permute.xlu0 %1156
      %1158 = vrot.lane.b32.xlu0 %v516, 32
      %v1159 = vpop.permute.xlu0 %1158
      %1160 = vrot.lane.b32.xlu0 %v519, 32
      %v1161 = vpop.permute.xlu0 %1160
      %1162 = vrot.lane.b32.xlu0 %v520, 32
      %v1163 = vpop.permute.xlu0 %1162
      %1164 = vrot.lane.b32.xlu0 %v523, 32
      %v1165 = vpop.permute.xlu0 %1164
      %1166 = vrot.lane.b32.xlu0 %v524, 32
      %v1167 = vpop.permute.xlu0 %1166
      %1168 = vrot.lane.b32.xlu0 %v527, 32
      %v1169 = vpop.permute.xlu0 %1168
      %1170 = vrot.lane.b32.xlu0 %v528, 32
      %v1171 = vpop.permute.xlu0 %1170
      %1204 = vrot.lane.b32.xlu0 %v719, 40
      %v1205 = vpop.permute.xlu0 %1204
      %1206 = vrot.lane.b32.xlu0 %v721, 40
      %v1207 = vpop.permute.xlu0 %1206
      %1208 = vrot.lane.b32.xlu0 %v724, 40
      %v1209 = vpop.permute.xlu0 %1208
      %1210 = vrot.lane.b32.xlu0 %v726, 40
      %v1211 = vpop.permute.xlu0 %1210
      %1212 = vrot.lane.b32.xlu0 %v729, 40
      %v1213 = vpop.permute.xlu0 %1212
      %1214 = vrot.lane.b32.xlu0 %v731, 40
      %v1215 = vpop.permute.xlu0 %1214
      %1216 = vrot.lane.b32.xlu0 %v734, 40
      %v1217 = vpop.permute.xlu0 %1216
      %1218 = vrot.lane.b32.xlu0 %v736, 40
      %v1219 = vpop.permute.xlu0 %1218
      %1220 = vrot.lane.b32.xlu0 %v739, 40
      %v1221 = vpop.permute.xlu0 %1220
      %1222 = vrot.lane.b32.xlu0 %v741, 40
      %v1223 = vpop.permute.xlu0 %1222
      %1224 = vrot.lane.b32.xlu0 %v744, 40
      %v1225 = vpop.permute.xlu0 %1224
      %1226 = vrot.lane.b32.xlu0 %v746, 40
      %v1227 = vpop.permute.xlu0 %1226
      %1228 = vrot.lane.b32.xlu0 %v749, 40
      %v1229 = vpop.permute.xlu0 %1228
      %1230 = vrot.lane.b32.xlu0 %v751, 40
      %v1231 = vpop.permute.xlu0 %1230
      %1232 = vrot.lane.b32.xlu0 %v754, 40
      %v1233 = vpop.permute.xlu0 %1232
      %1234 = vrot.lane.b32.xlu0 %v756, 40
      %v1235 = vpop.permute.xlu0 %1234
      %1236 = vrot.lane.b32.xlu0 %v759, 40
      %v1237 = vpop.permute.xlu0 %1236
      %1238 = vrot.lane.b32.xlu0 %v761, 40
      %v1239 = vpop.permute.xlu0 %1238
      %1240 = vrot.lane.b32.xlu0 %v764, 40
      %v1241 = vpop.permute.xlu0 %1240
      %1242 = vrot.lane.b32.xlu0 %v766, 40
      %v1243 = vpop.permute.xlu0 %1242
      %1244 = vrot.lane.b32.xlu0 %v769, 40
      %v1245 = vpop.permute.xlu0 %1244
      %1246 = vrot.lane.b32.xlu0 %v771, 40
      %v1247 = vpop.permute.xlu0 %1246
      %1248 = vrot.lane.b32.xlu0 %v774, 40
      %v1249 = vpop.permute.xlu0 %1248
      %1250 = vrot.lane.b32.xlu0 %v776, 40
      %v1251 = vpop.permute.xlu0 %1250
      %1252 = vrot.lane.b32.xlu0 %v779, 40
      %v1253 = vpop.permute.xlu0 %1252
      %1254 = vrot.lane.b32.xlu0 %v781, 40
      %v1255 = vpop.permute.xlu0 %1254
      %1256 = vrot.lane.b32.xlu0 %v784, 40
      %v1257 = vpop.permute.xlu0 %1256
      %1258 = vrot.lane.b32.xlu0 %v786, 40
      %v1259 = vpop.permute.xlu0 %1258
      %1260 = vrot.lane.b32.xlu0 %v789, 40
      %v1261 = vpop.permute.xlu0 %1260
      %1262 = vrot.lane.b32.xlu0 %v791, 40
      %v1263 = vpop.permute.xlu0 %1262
      %1264 = vrot.lane.b32.xlu0 %v803, 40
      %v1265 = vpop.permute.xlu0 %1264
      %1266 = vrot.lane.b32.xlu0 %v805, 40
      %v1267 = vpop.permute.xlu0 %1266
      %1300 = vrot.lane.b32.xlu0 %v595, 48
      %v1301 = vpop.permute.xlu0 %1300
      %1302 = vrot.lane.b32.xlu0 %v597, 48
      %v1303 = vpop.permute.xlu0 %1302
      %1304 = vrot.lane.b32.xlu0 %v600, 48
      %v1305 = vpop.permute.xlu0 %1304
      %1306 = vrot.lane.b32.xlu0 %v602, 48
      %v1307 = vpop.permute.xlu0 %1306
      %1308 = vrot.lane.b32.xlu0 %v605, 48
      %v1309 = vpop.permute.xlu0 %1308
      %1310 = vrot.lane.b32.xlu0 %v607, 48
      %v1311 = vpop.permute.xlu0 %1310
      %1312 = vrot.lane.b32.xlu0 %v610, 48
      %v1313 = vpop.permute.xlu0 %1312
      %1314 = vrot.lane.b32.xlu0 %v612, 48
      %v1315 = vpop.permute.xlu0 %1314
      %1316 = vrot.lane.b32.xlu0 %v615, 48
      %v1317 = vpop.permute.xlu0 %1316
      %1318 = vrot.lane.b32.xlu0 %v617, 48
      %v1319 = vpop.permute.xlu0 %1318
      %1320 = vrot.lane.b32.xlu0 %v620, 48
      %v1321 = vpop.permute.xlu0 %1320
      %1322 = vrot.lane.b32.xlu0 %v622, 48
      %v1323 = vpop.permute.xlu0 %1322
      %1324 = vrot.lane.b32.xlu0 %v625, 48
      %v1325 = vpop.permute.xlu0 %1324
      %1326 = vrot.lane.b32.xlu0 %v627, 48
      %v1327 = vpop.permute.xlu0 %1326
      %1328 = vrot.lane.b32.xlu0 %v630, 48
      %v1329 = vpop.permute.xlu0 %1328
      %1330 = vrot.lane.b32.xlu0 %v632, 48
      %v1331 = vpop.permute.xlu0 %1330
      %1332 = vrot.lane.b32.xlu0 %v635, 48
      %v1333 = vpop.permute.xlu0 %1332
      %1334 = vrot.lane.b32.xlu0 %v637, 48
      %v1335 = vpop.permute.xlu0 %1334
      %1336 = vrot.lane.b32.xlu0 %v640, 48
      %v1337 = vpop.permute.xlu0 %1336
      %1338 = vrot.lane.b32.xlu0 %v642, 48
      %v1339 = vpop.permute.xlu0 %1338
      %1340 = vrot.lane.b32.xlu0 %v645, 48
      %v1341 = vpop.permute.xlu0 %1340
      %1342 = vrot.lane.b32.xlu0 %v647, 48
      %v1343 = vpop.permute.xlu0 %1342
      %1344 = vrot.lane.b32.xlu0 %v650, 48
      %v1345 = vpop.permute.xlu0 %1344
      %1346 = vrot.lane.b32.xlu0 %v652, 48
      %v1347 = vpop.permute.xlu0 %1346
      %1348 = vrot.lane.b32.xlu0 %v655, 48
      %v1349 = vpop.permute.xlu0 %1348
      %1350 = vrot.lane.b32.xlu0 %v657, 48
      %v1351 = vpop.permute.xlu0 %1350
      %1352 = vrot.lane.b32.xlu0 %v660, 48
      %v1353 = vpop.permute.xlu0 %1352
      %1354 = vrot.lane.b32.xlu0 %v662, 48
      %v1355 = vpop.permute.xlu0 %1354
      %1356 = vrot.lane.b32.xlu0 %v797, 48
      %v1357 = vpop.permute.xlu0 %1356
      %1358 = vrot.lane.b32.xlu0 %v799, 48
      %v1359 = vpop.permute.xlu0 %1358
      %1360 = vrot.lane.b32.xlu0 %v811, 48
      %v1361 = vpop.permute.xlu0 %1360
      %1362 = vrot.lane.b32.xlu0 %v813, 48
      %v1363 = vpop.permute.xlu0 %1362
      %1396 = vrot.lane.b32.xlu0 %v471, 56
      %v1397 = vpop.permute.xlu0 %1396
      %1398 = vrot.lane.b32.xlu0 %v472, 56
      %v1399 = vpop.permute.xlu0 %1398
      %1400 = vrot.lane.b32.xlu0 %v475, 56
      %v1401 = vpop.permute.xlu0 %1400
      %1402 = vrot.lane.b32.xlu0 %v476, 56
      %v1403 = vpop.permute.xlu0 %1402
      %1404 = vrot.lane.b32.xlu0 %v479, 56
      %v1405 = vpop.permute.xlu0 %1404
      %1406 = vrot.lane.b32.xlu0 %v480, 56
      %v1407 = vpop.permute.xlu0 %1406
      %1408 = vrot.lane.b32.xlu0 %v483, 56
      %v1409 = vpop.permute.xlu0 %1408
      %1410 = vrot.lane.b32.xlu0 %v484, 56
      %v1411 = vpop.permute.xlu0 %1410
      %1412 = vrot.lane.b32.xlu0 %v487, 56
      %v1413 = vpop.permute.xlu0 %1412
      %1414 = vrot.lane.b32.xlu0 %v488, 56
      %v1415 = vpop.permute.xlu0 %1414
      %1416 = vrot.lane.b32.xlu0 %v491, 56
      %v1417 = vpop.permute.xlu0 %1416
      %1418 = vrot.lane.b32.xlu0 %v492, 56
      %v1419 = vpop.permute.xlu0 %1418
      %1420 = vrot.lane.b32.xlu0 %v495, 56
      %v1421 = vpop.permute.xlu0 %1420
      %1422 = vrot.lane.b32.xlu0 %v496, 56
      %v1423 = vpop.permute.xlu0 %1422
      %1424 = vrot.lane.b32.xlu0 %v499, 56
      %v1425 = vpop.permute.xlu0 %1424
      %1426 = vrot.lane.b32.xlu0 %v500, 56
      %v1427 = vpop.permute.xlu0 %1426
      %1428 = vrot.lane.b32.xlu0 %v503, 56
      %v1429 = vpop.permute.xlu0 %1428
      %1430 = vrot.lane.b32.xlu0 %v504, 56
      %v1431 = vpop.permute.xlu0 %1430
      %1432 = vrot.lane.b32.xlu0 %v507, 56
      %v1433 = vpop.permute.xlu0 %1432
      %1434 = vrot.lane.b32.xlu0 %v508, 56
      %v1435 = vpop.permute.xlu0 %1434
      %1436 = vrot.lane.b32.xlu0 %v511, 56
      %v1437 = vpop.permute.xlu0 %1436
      %1438 = vrot.lane.b32.xlu0 %v512, 56
      %v1439 = vpop.permute.xlu0 %1438
      %1440 = vrot.lane.b32.xlu0 %v515, 56
      %v1441 = vpop.permute.xlu0 %1440
      %1442 = vrot.lane.b32.xlu0 %v516, 56
      %v1443 = vpop.permute.xlu0 %1442
      %1444 = vrot.lane.b32.xlu0 %v519, 56
      %v1445 = vpop.permute.xlu0 %1444
      %1446 = vrot.lane.b32.xlu0 %v520, 56
      %v1447 = vpop.permute.xlu0 %1446
      %1448 = vrot.lane.b32.xlu0 %v523, 56
      %v1449 = vpop.permute.xlu0 %1448
      %1450 = vrot.lane.b32.xlu0 %v524, 56
      %v1451 = vpop.permute.xlu0 %1450
      %1452 = vrot.lane.b32.xlu0 %v527, 56
      %v1453 = vpop.permute.xlu0 %1452
      %1454 = vrot.lane.b32.xlu0 %v528, 56
      %v1455 = vpop.permute.xlu0 %1454
      %1456 = vrot.lane.b32.xlu0 %v531, 56
      %v1457 = vpop.permute.xlu0 %1456
      %1458 = vrot.lane.b32.xlu0 %v532, 56
      %v1459 = vpop.permute.xlu0 %1458
      %1492 = vrot.lane.b32.xlu0 %v724, 64
      %v1493 = vpop.permute.xlu0 %1492
      %1494 = vrot.lane.b32.xlu0 %v726, 64
      %v1495 = vpop.permute.xlu0 %1494
      %1496 = vrot.lane.b32.xlu0 %v729, 64
      %v1497 = vpop.permute.xlu0 %1496
      %1498 = vrot.lane.b32.xlu0 %v731, 64
      %v1499 = vpop.permute.xlu0 %1498
      %1500 = vrot.lane.b32.xlu0 %v734, 64
      %v1501 = vpop.permute.xlu0 %1500
      %1502 = vrot.lane.b32.xlu0 %v736, 64
      %v1503 = vpop.permute.xlu0 %1502
      %1504 = vrot.lane.b32.xlu0 %v739, 64
      %v1505 = vpop.permute.xlu0 %1504
      %1506 = vrot.lane.b32.xlu0 %v741, 64
      %v1507 = vpop.permute.xlu0 %1506
      %1508 = vrot.lane.b32.xlu0 %v744, 64
      %v1509 = vpop.permute.xlu0 %1508
      %1510 = vrot.lane.b32.xlu0 %v746, 64
      %v1511 = vpop.permute.xlu0 %1510
      %1512 = vrot.lane.b32.xlu0 %v749, 64
      %v1513 = vpop.permute.xlu0 %1512
      %1514 = vrot.lane.b32.xlu0 %v751, 64
      %v1515 = vpop.permute.xlu0 %1514
      %1516 = vrot.lane.b32.xlu0 %v754, 64
      %v1517 = vpop.permute.xlu0 %1516
      %1518 = vrot.lane.b32.xlu0 %v756, 64
      %v1519 = vpop.permute.xlu0 %1518
      %1520 = vrot.lane.b32.xlu0 %v759, 64
      %v1521 = vpop.permute.xlu0 %1520
      %1522 = vrot.lane.b32.xlu0 %v761, 64
      %v1523 = vpop.permute.xlu0 %1522
      %1524 = vrot.lane.b32.xlu0 %v764, 64
      %v1525 = vpop.permute.xlu0 %1524
      %1526 = vrot.lane.b32.xlu0 %v766, 64
      %v1527 = vpop.permute.xlu0 %1526
      %1528 = vrot.lane.b32.xlu0 %v769, 64
      %v1529 = vpop.permute.xlu0 %1528
      %1530 = vrot.lane.b32.xlu0 %v771, 64
      %v1531 = vpop.permute.xlu0 %1530
      %1532 = vrot.lane.b32.xlu0 %v774, 64
      %v1533 = vpop.permute.xlu0 %1532
      %1534 = vrot.lane.b32.xlu0 %v776, 64
      %v1535 = vpop.permute.xlu0 %1534
      %1536 = vrot.lane.b32.xlu0 %v779, 64
      %v1537 = vpop.permute.xlu0 %1536
      %1538 = vrot.lane.b32.xlu0 %v781, 64
      %v1539 = vpop.permute.xlu0 %1538
      %1540 = vrot.lane.b32.xlu0 %v784, 64
      %v1541 = vpop.permute.xlu0 %1540
      %1542 = vrot.lane.b32.xlu0 %v786, 64
      %v1543 = vpop.permute.xlu0 %1542
      %1544 = vrot.lane.b32.xlu0 %v789, 64
      %v1545 = vpop.permute.xlu0 %1544
      %1546 = vrot.lane.b32.xlu0 %v791, 64
      %v1547 = vpop.permute.xlu0 %1546
      %1548 = vrot.lane.b32.xlu0 %v803, 64
      %v1549 = vpop.permute.xlu0 %1548
      %1550 = vrot.lane.b32.xlu0 %v805, 64
      %v1551 = vpop.permute.xlu0 %1550
      %1552 = vrot.lane.b32.xlu0 %v817, 64
      %v1553 = vpop.permute.xlu0 %1552
      %1554 = vrot.lane.b32.xlu0 %v819, 64
      %v1555 = vpop.permute.xlu0 %1554
      %v1588 = vsel %vm252, %v585, %v821
      %v1589 = vsel %vm252, %v587, %v823
      %v1590 = vsel %vm252, %v590, %v825
      %v1591 = vsel %vm252, %v592, %v827
      %v1592 = vsel %vm252, %v595, %v829
      %v1593 = vsel %vm252, %v597, %v831
      %v1594 = vsel %vm252, %v600, %v833
      %v1595 = vsel %vm252, %v602, %v835
      %v1596 = vsel %vm252, %v605, %v837
      %v1597 = vsel %vm252, %v607, %v839
      %v1598 = vsel %vm252, %v610, %v841
      %v1599 = vsel %vm252, %v612, %v843
      %v1600 = vsel %vm252, %v615, %v845
      %v1601 = vsel %vm252, %v617, %v847
      %v1602 = vsel %vm252, %v620, %v849
      %v1603 = vsel %vm252, %v622, %v851
      %v1604 = vsel %vm252, %v625, %v853
      %v1605 = vsel %vm252, %v627, %v855
      %v1606 = vsel %vm252, %v630, %v857
      %v1607 = vsel %vm252, %v632, %v859
      %v1608 = vsel %vm252, %v635, %v861
      %v1609 = vsel %vm252, %v637, %v863
      %v1610 = vsel %vm252, %v640, %v865
      %v1611 = vsel %vm252, %v642, %v867
      %v1612 = vsel %vm252, %v645, %v869
      %v1613 = vsel %vm252, %v647, %v871
      %v1614 = vsel %vm252, %v650, %v873
      %v1615 = vsel %vm252, %v652, %v875
      %v1616 = vsel %vm252, %v655, %v877
      %v1617 = vsel %vm252, %v657, %v879
      %v1618 = vsel %vm252, %v660, %v881
      %v1619 = vsel %vm252, %v662, %v883
      %vm1620 = vcmask 130048
      %v1621 = vsel %vm1620, %v1588, %v917
      %v1622 = vsel %vm1620, %v1589, %v919
      %v1623 = vsel %vm1620, %v1590, %v921
      %v1624 = vsel %vm1620, %v1591, %v923
      %v1625 = vsel %vm1620, %v1592, %v925
      %v1626 = vsel %vm1620, %v1593, %v927
      %v1627 = vsel %vm1620, %v1594, %v929
      %v1628 = vsel %vm1620, %v1595, %v931
      %v1629 = vsel %vm1620, %v1596, %v933
      %v1630 = vsel %vm1620, %v1597, %v935
      %v1631 = vsel %vm1620, %v1598, %v937
      %v1632 = vsel %vm1620, %v1599, %v939
      %v1633 = vsel %vm1620, %v1600, %v941
      %v1634 = vsel %vm1620, %v1601, %v943
      %v1635 = vsel %vm1620, %v1602, %v945
      %v1636 = vsel %vm1620, %v1603, %v947
      %v1637 = vsel %vm1620, %v1604, %v949
      %v1638 = vsel %vm1620, %v1605, %v951
      %v1639 = vsel %vm1620, %v1606, %v953
      %v1640 = vsel %vm1620, %v1607, %v955
      %v1641 = vsel %vm1620, %v1608, %v957
      %v1642 = vsel %vm1620, %v1609, %v959
      %v1643 = vsel %vm1620, %v1610, %v961
      %v1644 = vsel %vm1620, %v1611, %v963
      %v1645 = vsel %vm1620, %v1612, %v965
      %v1646 = vsel %vm1620, %v1613, %v967
      %v1647 = vsel %vm1620, %v1614, %v969
      %v1648 = vsel %vm1620, %v1615, %v971
      %v1649 = vsel %vm1620, %v1616, %v973
      %v1650 = vsel %vm1620, %v1617, %v975
      %v1651 = vsel %vm1620, %v1618, %v977
      %v1652 = vsel %vm1620, %v1619, %v979
      %vm1653 = vcmask 195584
      %v1654 = vsel %vm1653, %v1621, %v1013
      %v1655 = vsel %vm1653, %v1622, %v1015
      %v1656 = vsel %vm1653, %v1623, %v1017
      %v1657 = vsel %vm1653, %v1624, %v1019
      %v1658 = vsel %vm1653, %v1625, %v1021
      %v1659 = vsel %vm1653, %v1626, %v1023
      %v1660 = vsel %vm1653, %v1627, %v1025
      %v1661 = vsel %vm1653, %v1628, %v1027
      %v1662 = vsel %vm1653, %v1629, %v1029
      %v1663 = vsel %vm1653, %v1630, %v1031
      %v1664 = vsel %vm1653, %v1631, %v1033
      %v1665 = vsel %vm1653, %v1632, %v1035
      %v1666 = vsel %vm1653, %v1633, %v1037
      %v1667 = vsel %vm1653, %v1634, %v1039
      %v1668 = vsel %vm1653, %v1635, %v1041
      %v1669 = vsel %vm1653, %v1636, %v1043
      %v1670 = vsel %vm1653, %v1637, %v1045
      %v1671 = vsel %vm1653, %v1638, %v1047
      %v1672 = vsel %vm1653, %v1639, %v1049
      %v1673 = vsel %vm1653, %v1640, %v1051
      %v1674 = vsel %vm1653, %v1641, %v1053
      %v1675 = vsel %vm1653, %v1642, %v1055
      %v1676 = vsel %vm1653, %v1643, %v1057
      %v1677 = vsel %vm1653, %v1644, %v1059
      %v1678 = vsel %vm1653, %v1645, %v1061
      %v1679 = vsel %vm1653, %v1646, %v1063
      %v1680 = vsel %vm1653, %v1647, %v1065
      %v1681 = vsel %vm1653, %v1648, %v1067
      %v1682 = vsel %vm1653, %v1649, %v1069
      %v1683 = vsel %vm1653, %v1650, %v1071
      %v1684 = vsel %vm1653, %v1651, %v1073
      %v1685 = vsel %vm1653, %v1652, %v1075
      %vm1686 = vcmask 261120
      %v1687 = vsel %vm1686, %v1654, %v1109
      %v1688 = vsel %vm1686, %v1655, %v1111
      %v1689 = vsel %vm1686, %v1656, %v1113
      %v1690 = vsel %vm1686, %v1657, %v1115
      %v1691 = vsel %vm1686, %v1658, %v1117
      %v1692 = vsel %vm1686, %v1659, %v1119
      %v1693 = vsel %vm1686, %v1660, %v1121
      %v1694 = vsel %vm1686, %v1661, %v1123
      %v1695 = vsel %vm1686, %v1662, %v1125
      %v1696 = vsel %vm1686, %v1663, %v1127
      %v1697 = vsel %vm1686, %v1664, %v1129
      %v1698 = vsel %vm1686, %v1665, %v1131
      %v1699 = vsel %vm1686, %v1666, %v1133
      %v1700 = vsel %vm1686, %v1667, %v1135
      %v1701 = vsel %vm1686, %v1668, %v1137
      %v1702 = vsel %vm1686, %v1669, %v1139
      %v1703 = vsel %vm1686, %v1670, %v1141
      %v1704 = vsel %vm1686, %v1671, %v1143
      %v1705 = vsel %vm1686, %v1672, %v1145
      %v1706 = vsel %vm1686, %v1673, %v1147
      %v1707 = vsel %vm1686, %v1674, %v1149
      %v1708 = vsel %vm1686, %v1675, %v1151
      %v1709 = vsel %vm1686, %v1676, %v1153
      %v1710 = vsel %vm1686, %v1677, %v1155
      %v1711 = vsel %vm1686, %v1678, %v1157
      %v1712 = vsel %vm1686, %v1679, %v1159
      %v1713 = vsel %vm1686, %v1680, %v1161
      %v1714 = vsel %vm1686, %v1681, %v1163
      %v1715 = vsel %vm1686, %v1682, %v1165
      %v1716 = vsel %vm1686, %v1683, %v1167
      %v1717 = vsel %vm1686, %v1684, %v1169
      %v1718 = vsel %vm1686, %v1685, %v1171
      %vm1719 = vcmask 326656
      %v1720 = vsel %vm1719, %v1687, %v1205
      %v1721 = vsel %vm1719, %v1688, %v1207
      %v1722 = vsel %vm1719, %v1689, %v1209
      %v1723 = vsel %vm1719, %v1690, %v1211
      %v1724 = vsel %vm1719, %v1691, %v1213
      %v1725 = vsel %vm1719, %v1692, %v1215
      %v1726 = vsel %vm1719, %v1693, %v1217
      %v1727 = vsel %vm1719, %v1694, %v1219
      %v1728 = vsel %vm1719, %v1695, %v1221
      %v1729 = vsel %vm1719, %v1696, %v1223
      %v1730 = vsel %vm1719, %v1697, %v1225
      %v1731 = vsel %vm1719, %v1698, %v1227
      %v1732 = vsel %vm1719, %v1699, %v1229
      %v1733 = vsel %vm1719, %v1700, %v1231
      %v1734 = vsel %vm1719, %v1701, %v1233
      %v1735 = vsel %vm1719, %v1702, %v1235
      %v1736 = vsel %vm1719, %v1703, %v1237
      %v1737 = vsel %vm1719, %v1704, %v1239
      %v1738 = vsel %vm1719, %v1705, %v1241
      %v1739 = vsel %vm1719, %v1706, %v1243
      %v1740 = vsel %vm1719, %v1707, %v1245
      %v1741 = vsel %vm1719, %v1708, %v1247
      %v1742 = vsel %vm1719, %v1709, %v1249
      %v1743 = vsel %vm1719, %v1710, %v1251
      %v1744 = vsel %vm1719, %v1711, %v1253
      %v1745 = vsel %vm1719, %v1712, %v1255
      %v1746 = vsel %vm1719, %v1713, %v1257
      %v1747 = vsel %vm1719, %v1714, %v1259
      %v1748 = vsel %vm1719, %v1715, %v1261
      %v1749 = vsel %vm1719, %v1716, %v1263
      %v1750 = vsel %vm1719, %v1717, %v1265
      %v1751 = vsel %vm1719, %v1718, %v1267
      %vm1752 = vcmask 392192
      %v1753 = vsel %vm1752, %v1720, %v1301
      %v1754 = vsel %vm1752, %v1721, %v1303
      %v1755 = vsel %vm1752, %v1722, %v1305
      %v1756 = vsel %vm1752, %v1723, %v1307
      %v1757 = vsel %vm1752, %v1724, %v1309
      %v1758 = vsel %vm1752, %v1725, %v1311
      %v1759 = vsel %vm1752, %v1726, %v1313
      %v1760 = vsel %vm1752, %v1727, %v1315
      %v1761 = vsel %vm1752, %v1728, %v1317
      %v1762 = vsel %vm1752, %v1729, %v1319
      %v1763 = vsel %vm1752, %v1730, %v1321
      %v1764 = vsel %vm1752, %v1731, %v1323
      %v1765 = vsel %vm1752, %v1732, %v1325
      %v1766 = vsel %vm1752, %v1733, %v1327
      %v1767 = vsel %vm1752, %v1734, %v1329
      %v1768 = vsel %vm1752, %v1735, %v1331
      %v1769 = vsel %vm1752, %v1736, %v1333
      %v1770 = vsel %vm1752, %v1737, %v1335
      %v1771 = vsel %vm1752, %v1738, %v1337
      %v1772 = vsel %vm1752, %v1739, %v1339
      %v1773 = vsel %vm1752, %v1740, %v1341
      %v1774 = vsel %vm1752, %v1741, %v1343
      %v1775 = vsel %vm1752, %v1742, %v1345
      %v1776 = vsel %vm1752, %v1743, %v1347
      %v1777 = vsel %vm1752, %v1744, %v1349
      %v1778 = vsel %vm1752, %v1745, %v1351
      %v1779 = vsel %vm1752, %v1746, %v1353
      %v1780 = vsel %vm1752, %v1747, %v1355
      %v1781 = vsel %vm1752, %v1748, %v1357
      %v1782 = vsel %vm1752, %v1749, %v1359
      %v1783 = vsel %vm1752, %v1750, %v1361
      %v1784 = vsel %vm1752, %v1751, %v1363
      %vm1785 = vcmask 457728
      %v1786 = vsel %vm1785, %v1753, %v1397
      %v1787 = vsel %vm1785, %v1754, %v1399
      %v1788 = vsel %vm1785, %v1755, %v1401
      %v1789 = vsel %vm1785, %v1756, %v1403
      %v1790 = vsel %vm1785, %v1757, %v1405
      %v1791 = vsel %vm1785, %v1758, %v1407
      %v1792 = vsel %vm1785, %v1759, %v1409
      %v1793 = vsel %vm1785, %v1760, %v1411
      %v1794 = vsel %vm1785, %v1761, %v1413
      %v1795 = vsel %vm1785, %v1762, %v1415
      %v1796 = vsel %vm1785, %v1763, %v1417
      %v1797 = vsel %vm1785, %v1764, %v1419
      %v1798 = vsel %vm1785, %v1765, %v1421
      %v1799 = vsel %vm1785, %v1766, %v1423
      %v1800 = vsel %vm1785, %v1767, %v1425
      %v1801 = vsel %vm1785, %v1768, %v1427
      %v1802 = vsel %vm1785, %v1769, %v1429
      %v1803 = vsel %vm1785, %v1770, %v1431
      %v1804 = vsel %vm1785, %v1771, %v1433
      %v1805 = vsel %vm1785, %v1772, %v1435
      %v1806 = vsel %vm1785, %v1773, %v1437
      %v1807 = vsel %vm1785, %v1774, %v1439
      %v1808 = vsel %vm1785, %v1775, %v1441
      %v1809 = vsel %vm1785, %v1776, %v1443
      %v1810 = vsel %vm1785, %v1777, %v1445
      %v1811 = vsel %vm1785, %v1778, %v1447
      %v1812 = vsel %vm1785, %v1779, %v1449
      %v1813 = vsel %vm1785, %v1780, %v1451
      %v1814 = vsel %vm1785, %v1781, %v1453
      %v1815 = vsel %vm1785, %v1782, %v1455
      %v1816 = vsel %vm1785, %v1783, %v1457
      %v1817 = vsel %vm1785, %v1784, %v1459
      %vm1818 = vcmask 523264
      %v1819 = vsel %vm1818, %v1786, %v1493
      %v1820 = vsel %vm1818, %v1787, %v1495
      %v1821 = vsel %vm1818, %v1788, %v1497
      %v1822 = vsel %vm1818, %v1789, %v1499
      %v1823 = vsel %vm1818, %v1790, %v1501
      %v1824 = vsel %vm1818, %v1791, %v1503
      %v1825 = vsel %vm1818, %v1792, %v1505
      %v1826 = vsel %vm1818, %v1793, %v1507
      %v1827 = vsel %vm1818, %v1794, %v1509
      %v1828 = vsel %vm1818, %v1795, %v1511
      %v1829 = vsel %vm1818, %v1796, %v1513
      %v1830 = vsel %vm1818, %v1797, %v1515
      %v1831 = vsel %vm1818, %v1798, %v1517
      %v1832 = vsel %vm1818, %v1799, %v1519
      %v1833 = vsel %vm1818, %v1800, %v1521
      %v1834 = vsel %vm1818, %v1801, %v1523
      %v1835 = vsel %vm1818, %v1802, %v1525
      %v1836 = vsel %vm1818, %v1803, %v1527
      %v1837 = vsel %vm1818, %v1804, %v1529
      %v1838 = vsel %vm1818, %v1805, %v1531
      %v1839 = vsel %vm1818, %v1806, %v1533
      %v1840 = vsel %vm1818, %v1807, %v1535
      %v1841 = vsel %vm1818, %v1808, %v1537
      %v1842 = vsel %vm1818, %v1809, %v1539
      %v1843 = vsel %vm1818, %v1810, %v1541
      %v1844 = vsel %vm1818, %v1811, %v1543
      %v1845 = vsel %vm1818, %v1812, %v1545
      %v1846 = vsel %vm1818, %v1813, %v1547
      %v1847 = vsel %vm1818, %v1814, %v1549
      %v1848 = vsel %vm1818, %v1815, %v1551
      %v1849 = vsel %vm1818, %v1816, %v1553
      %v1850 = vsel %vm1818, %v1817, %v1555
      %v1851 = vld [vmem:[%s1] sm:$0xff]
      %v1852 = vld [vmem:[%s1 + $0x8] sm:$0xff]
      %v1853 = vld [vmem:[%s1 + $0x10] sm:$0xff]
      %v1854 = vld [vmem:[%s1 + $0x18] sm:$0xff]
      %v1855 = vld [vmem:[%s1 + $0x20] sm:$0xff]
      %v1856 = vld [vmem:[%s1 + $0x28] sm:$0xff]
      %v1857 = vld [vmem:[%s1 + $0x30] sm:$0xff]
      %v1858 = vld [vmem:[%s1 + $0x38] sm:$0xff]
      %v1859 = vld [vmem:[%s1 + $0x40] sm:$0xff]
      %v1860 = vld [vmem:[%s2] sm:$0x1]
      %v1862 = vlaneseq
      %v1863 = vshrl.u32 %v1862, 7
      %v1864 = vsub.s32 0, %v1863
      %v1865 = vrot.slane %v1860, %v1864
      %vm1867 = vcmask 588800
      %v1869 = vsel %vm1867, %v1819, 0
      %v1872 = vsel %vm1867, %v1820, 0
      %v1875 = vsel %vm1867, %v1821, 0
      %v1878 = vsel %vm1867, %v1822, 0
      %v1881 = vsel %vm1867, %v1823, 0
      %v1884 = vsel %vm1867, %v1824, 0
      %v1887 = vsel %vm1867, %v1825, 0
      %v1890 = vsel %vm1867, %v1826, 0
      %v1893 = vsel %vm1867, %v1827, 0
      %v1896 = vsel %vm1867, %v1828, 0
      %v1899 = vsel %vm1867, %v1829, 0
      %v1902 = vsel %vm1867, %v1830, 0
      %v1905 = vsel %vm1867, %v1831, 0
      %v1908 = vsel %vm1867, %v1832, 0
      %v1911 = vsel %vm1867, %v1833, 0
      %v1914 = vsel %vm1867, %v1834, 0
      %v1917 = vsel %vm1867, %v1835, 0
      %v1920 = vsel %vm1867, %v1836, 0
      %v1923 = vsel %vm1867, %v1837, 0
      %v1926 = vsel %vm1867, %v1838, 0
      %v1929 = vsel %vm1867, %v1839, 0
      %v1932 = vsel %vm1867, %v1840, 0
      %v1935 = vsel %vm1867, %v1841, 0
      %v1938 = vsel %vm1867, %v1842, 0
      %v1941 = vsel %vm1867, %v1843, 0
      %v1944 = vsel %vm1867, %v1844, 0
      %v1947 = vsel %vm1867, %v1845, 0
      %v1950 = vsel %vm1867, %v1846, 0
      %v1953 = vsel %vm1867, %v1847, 0
      %v1956 = vsel %vm1867, %v1848, 0
      %v1959 = vsel %vm1867, %v1849, 0
      %v1962 = vsel %vm1867, %v1850, 0
      %1964 = vmatprep.subr.mxu0 0.0
      %1965 = vmatpush1.msra.mxu0 %v1851
      %1966 = vmatprep.subr.mxu0 0.0
      %1967 = vmatpush1.msra.mxu0 %v1852
      %1968 = vmatprep.subr.mxu0 0.0
      %1969 = vmatpush1.msra.mxu0 %v1853
      %1970 = vmatprep.subr.mxu0 0.0
      %1971 = vmatpush1.msra.mxu0 %v1854
      %1972 = vmatprep.subr.mxu0 0.0
      %1973 = vmatpush1.msra.mxu0 %v1855
      %1974 = vmatprep.subr.mxu0 0.0
      %1975 = vmatpush1.msra.mxu0 %v1856
      %1976 = vmatprep.subr.mxu0 0.0
      %1977 = vmatpush1.msra.mxu0 %v1857
      %1978 = vmatprep.subr.mxu0 0.0
      %1979 = vmatpush1.msra.mxu0 %v1858
      %1980 = vmatprep.subr.mxu0 0.0
      %1981 = vmatpush1.msra.mxu0 %v1859
      %1982 = vmatprep.subr.mxu0 0.0
      %1983 = vmatpush1.msra.mxu0 0.0
      %1984 = vmatprep.subr.mxu0 0.0
      %1985 = vmatpush1.msra.mxu0 0.0
      %1986 = vmatprep.subr.mxu0 0.0
      %1987 = vmatpush1.msra.mxu0 0.0
      %1988 = vmatprep.subr.mxu0 0.0
      %1989 = vmatpush1.msra.mxu0 0.0
      %1990 = vmatprep.subr.mxu0 0.0
      %1991 = vmatpush1.msra.mxu0 0.0
      %1992 = vmatprep.subr.mxu0 0.0
      %1993 = vmatpush1.msra.mxu0 0.0
      %1994 = vmatprep.subr.mxu0 0.0
      %1995 = vmatpush1.msra.mxu0 0.0
      %1996 = vmatprep.subr.mxu0 0.0
      %1997 = vmatpush1.msra.mxu0 0.0
      %1998 = vmatprep.subr.mxu0 0.0
      %1999 = vmatpush1.msra.mxu0 0.0
      %2000 = vmatprep.subr.mxu0 0.0
      %2001 = vmatpush1.msra.mxu0 0.0
      %2002 = vmatprep.subr.mxu0 0.0
      %2003 = vmatpush1.msra.mxu0 0.0
      %2004 = vmatprep.subr.mxu0 0.0
      %2005 = vmatpush1.msra.mxu0 0.0
      %2006 = vmatprep.subr.mxu0 0.0
      %2007 = vmatpush1.msra.mxu0 0.0
      %2008 = vmatprep.subr.mxu0 0.0
      %2009 = vmatpush1.msra.mxu0 0.0
      %2010 = vmatprep.subr.mxu0 0.0
      %2011 = vmatpush1.msra.mxu0 0.0
      %2012 = vmatprep.subr.mxu0 0.0
      %2013 = vmatpush1.msra.mxu0 0.0
      %2014 = vmatprep.subr.mxu0 0.0
      %2015 = vmatpush1.msra.mxu0 0.0
      %2016 = vmatprep.subr.mxu0 0.0
      %2017 = vmatpush1.msra.mxu0 0.0
      %2018 = vmatprep.subr.mxu0 0.0
      %2019 = vmatpush1.msra.mxu0 0.0
      %2020 = vmatprep.subr.mxu0 0.0
      %2021 = vmatpush1.msra.mxu0 0.0
      %2022 = vmatprep.subr.mxu0 0.0
      %2023 = vmatpush1.msra.mxu0 0.0
      %2024 = vmatprep.subr.mxu0 0.0
      %2025 = vmatpush1.msra.mxu0 0.0
      %2026 = vmatprep.subr.mxu0 0.0
      %2027 = vmatpush1.msra.mxu0 0.0
      %2028 = vmatprep.mubr.f32.mxu0 0.0
      %2029 = vmatmul.mubr.f32.gmra.mrb[0].mxu0 %v1869
      %v2030 = vpop.f32.mrb[0].mxu0
      %v2031 = vadd.f32 %v1865, %v2030
      %v2032 = vpop.f32.mrb[0].mxu0
      %2033 = vmatprep.mubr.f32.mxu0 0.0
      %2034 = vmatmul.mubr.f32.gmra.mrb[0].mxu0 %v1872
      %v2035 = vpop.f32.mrb[0].mxu0
      %v2036 = vadd.f32 %v1865, %v2035
      %v2037 = vpop.f32.mrb[0].mxu0
      %2038 = vmatprep.mubr.f32.mxu0 0.0
      %2039 = vmatmul.mubr.f32.gmra.mrb[0].mxu0 %v1875
      %v2040 = vpop.f32.mrb[0].mxu0
      %v2041 = vadd.f32 %v1865, %v2040
      %v2042 = vpop.f32.mrb[0].mxu0
      %2043 = vmatprep.mubr.f32.mxu0 0.0
      %2044 = vmatmul.mubr.f32.gmra.mrb[0].mxu0 %v1878
      %v2045 = vpop.f32.mrb[0].mxu0
      %v2046 = vadd.f32 %v1865, %v2045
      %v2047 = vpop.f32.mrb[0].mxu0
      %2048 = vmatprep.mubr.f32.mxu0 0.0
      %2049 = vmatmul.mubr.f32.gmra.mrb[0].mxu0 %v1881
      %v2050 = vpop.f32.mrb[0].mxu0
      %v2051 = vadd.f32 %v1865, %v2050
      %v2052 = vpop.f32.mrb[0].mxu0
      %2053 = vmatprep.mubr.f32.mxu0 0.0
      %2054 = vmatmul.mubr.f32.gmra.mrb[0].mxu0 %v1884
      %v2055 = vpop.f32.mrb[0].mxu0
      %v2056 = vadd.f32 %v1865, %v2055
      %v2057 = vpop.f32.mrb[0].mxu0
      %2058 = vmatprep.mubr.f32.mxu0 0.0
      %2059 = vmatmul.mubr.f32.gmra.mrb[0].mxu0 %v1887
      %v2060 = vpop.f32.mrb[0].mxu0
      %v2061 = vadd.f32 %v1865, %v2060
      %v2062 = vpop.f32.mrb[0].mxu0
      %2063 = vmatprep.mubr.f32.mxu0 0.0
      %2064 = vmatmul.mubr.f32.gmra.mrb[0].mxu0 %v1890
      %v2065 = vpop.f32.mrb[0].mxu0
      %v2066 = vadd.f32 %v1865, %v2065
      %v2067 = vpop.f32.mrb[0].mxu0
      %2068 = vmatprep.mubr.f32.mxu0 0.0
      %2069 = vmatmul.mubr.f32.gmra.mrb[0].mxu0 %v1893
      %v2070 = vpop.f32.mrb[0].mxu0
      %v2071 = vadd.f32 %v1865, %v2070
      %v2072 = vpop.f32.mrb[0].mxu0
      %2073 = vmatprep.mubr.f32.mxu0 0.0
      %2074 = vmatmul.mubr.f32.gmra.mrb[0].mxu0 %v1896
      %v2075 = vpop.f32.mrb[0].mxu0
      %v2076 = vadd.f32 %v1865, %v2075
      %v2077 = vpop.f32.mrb[0].mxu0
      %2078 = vmatprep.mubr.f32.mxu0 0.0
      %2079 = vmatmul.mubr.f32.gmra.mrb[0].mxu0 %v1899
      %v2080 = vpop.f32.mrb[0].mxu0
      %v2081 = vadd.f32 %v1865, %v2080
      %v2082 = vpop.f32.mrb[0].mxu0
      %2083 = vmatprep.mubr.f32.mxu0 0.0
      %2084 = vmatmul.mubr.f32.gmra.mrb[0].mxu0 %v1902
      %v2085 = vpop.f32.mrb[0].mxu0
      %v2086 = vadd.f32 %v1865, %v2085
      %v2087 = vpop.f32.mrb[0].mxu0
      %2088 = vmatprep.mubr.f32.mxu0 0.0
      %2089 = vmatmul.mubr.f32.gmra.mrb[0].mxu0 %v1905
      %v2090 = vpop.f32.mrb[0].mxu0
      %v2091 = vadd.f32 %v1865, %v2090
      %v2092 = vpop.f32.mrb[0].mxu0
      %2093 = vmatprep.mubr.f32.mxu0 0.0
      %2094 = vmatmul.mubr.f32.gmra.mrb[0].mxu0 %v1908
      %v2095 = vpop.f32.mrb[0].mxu0
      %v2096 = vadd.f32 %v1865, %v2095
      %v2097 = vpop.f32.mrb[0].mxu0
      %2098 = vmatprep.mubr.f32.mxu0 0.0
      %2099 = vmatmul.mubr.f32.gmra.mrb[0].mxu0 %v1911
      %v2100 = vpop.f32.mrb[0].mxu0
      %v2101 = vadd.f32 %v1865, %v2100
      %v2102 = vpop.f32.mrb[0].mxu0
      %2103 = vmatprep.mubr.f32.mxu0 0.0
      %2104 = vmatmul.mubr.f32.gmra.mrb[0].mxu0 %v1914
      %v2105 = vpop.f32.mrb[0].mxu0
      %v2106 = vadd.f32 %v1865, %v2105
      %v2107 = vpop.f32.mrb[0].mxu0
      %2108 = vmatprep.mubr.f32.mxu0 0.0
      %2109 = vmatmul.mubr.f32.gmra.mrb[0].mxu0 %v1917
      %v2110 = vpop.f32.mrb[0].mxu0
      %v2111 = vadd.f32 %v1865, %v2110
      %v2112 = vpop.f32.mrb[0].mxu0
      %2113 = vmatprep.mubr.f32.mxu0 0.0
      %2114 = vmatmul.mubr.f32.gmra.mrb[0].mxu0 %v1920
      %v2115 = vpop.f32.mrb[0].mxu0
      %v2116 = vadd.f32 %v1865, %v2115
      %v2117 = vpop.f32.mrb[0].mxu0
      %2118 = vmatprep.mubr.f32.mxu0 0.0
      %2119 = vmatmul.mubr.f32.gmra.mrb[0].mxu0 %v1923
      %v2120 = vpop.f32.mrb[0].mxu0
      %v2121 = vadd.f32 %v1865, %v2120
      %v2122 = vpop.f32.mrb[0].mxu0
      %2123 = vmatprep.mubr.f32.mxu0 0.0
      %2124 = vmatmul.mubr.f32.gmra.mrb[0].mxu0 %v1926
      %v2125 = vpop.f32.mrb[0].mxu0
      %v2126 = vadd.f32 %v1865, %v2125
      %v2127 = vpop.f32.mrb[0].mxu0
      %2128 = vmatprep.mubr.f32.mxu0 0.0
      %2129 = vmatmul.mubr.f32.gmra.mrb[0].mxu0 %v1929
      %v2130 = vpop.f32.mrb[0].mxu0
      %v2131 = vadd.f32 %v1865, %v2130
      %v2132 = vpop.f32.mrb[0].mxu0
      %2133 = vmatprep.mubr.f32.mxu0 0.0
      %2134 = vmatmul.mubr.f32.gmra.mrb[0].mxu0 %v1932
      %v2135 = vpop.f32.mrb[0].mxu0
      %v2136 = vadd.f32 %v1865, %v2135
      %v2137 = vpop.f32.mrb[0].mxu0
      %2138 = vmatprep.mubr.f32.mxu0 0.0
      %2139 = vmatmul.mubr.f32.gmra.mrb[0].mxu0 %v1935
      %v2140 = vpop.f32.mrb[0].mxu0
      %v2141 = vadd.f32 %v1865, %v2140
      %v2142 = vpop.f32.mrb[0].mxu0
      %2143 = vmatprep.mubr.f32.mxu0 0.0
      %2144 = vmatmul.mubr.f32.gmra.mrb[0].mxu0 %v1938
      %v2145 = vpop.f32.mrb[0].mxu0
      %v2146 = vadd.f32 %v1865, %v2145
      %v2147 = vpop.f32.mrb[0].mxu0
      %2148 = vmatprep.mubr.f32.mxu0 0.0
      %2149 = vmatmul.mubr.f32.gmra.mrb[0].mxu0 %v1941
      %v2150 = vpop.f32.mrb[0].mxu0
      %v2151 = vadd.f32 %v1865, %v2150
      %v2152 = vpop.f32.mrb[0].mxu0
      %2153 = vmatprep.mubr.f32.mxu0 0.0
      %2154 = vmatmul.mubr.f32.gmra.mrb[0].mxu0 %v1944
      %v2155 = vpop.f32.mrb[0].mxu0
      %v2156 = vadd.f32 %v1865, %v2155
      %v2157 = vpop.f32.mrb[0].mxu0
      %2158 = vmatprep.mubr.f32.mxu0 0.0
      %2159 = vmatmul.mubr.f32.gmra.mrb[0].mxu0 %v1947
      %v2160 = vpop.f32.mrb[0].mxu0
      %v2161 = vadd.f32 %v1865, %v2160
      %v2162 = vpop.f32.mrb[0].mxu0
      %2163 = vmatprep.mubr.f32.mxu0 0.0
      %2164 = vmatmul.mubr.f32.gmra.mrb[0].mxu0 %v1950
      %v2165 = vpop.f32.mrb[0].mxu0
      %v2166 = vadd.f32 %v1865, %v2165
      %v2167 = vpop.f32.mrb[0].mxu0
      %2168 = vmatprep.mubr.f32.mxu0 0.0
      %2169 = vmatmul.mubr.f32.gmra.mrb[0].mxu0 %v1953
      %v2170 = vpop.f32.mrb[0].mxu0
      %v2171 = vadd.f32 %v1865, %v2170
      %v2172 = vpop.f32.mrb[0].mxu0
      %2173 = vmatprep.mubr.f32.mxu0 0.0
      %2174 = vmatmul.mubr.f32.gmra.mrb[0].mxu0 %v1956
      %v2175 = vpop.f32.mrb[0].mxu0
      %v2176 = vadd.f32 %v1865, %v2175
      %v2177 = vpop.f32.mrb[0].mxu0
      %2178 = vmatprep.mubr.f32.mxu0 0.0
      %2179 = vmatmul.mubr.f32.gmra.mrb[0].mxu0 %v1959
      %v2180 = vpop.f32.mrb[0].mxu0
      %v2181 = vadd.f32 %v1865, %v2180
      %v2182 = vpop.f32.mrb[0].mxu0
      %2183 = vmatprep.mubr.f32.mxu0 0.0
      %2184 = vmatmul.mubr.f32.gmra.mrb[0].mxu0 %v1962
      %v2185 = vpop.f32.mrb[0].mxu0
      %v2186 = vadd.f32 %v1865, %v2185
      %v2187 = vpop.f32.mrb[0].mxu0
      %2188 = vdwg.mxu0
      %v2189 = vmax.f32 %v2031, 0.0
      %v2190 = vmax.f32 %v2036, 0.0
      %v2191 = vmax.f32 %v2041, 0.0
      %v2192 = vmax.f32 %v2046, 0.0
      %v2193 = vmax.f32 %v2051, 0.0
      %v2194 = vmax.f32 %v2056, 0.0
      %v2195 = vmax.f32 %v2061, 0.0
      %v2196 = vmax.f32 %v2066, 0.0
      %v2197 = vmax.f32 %v2071, 0.0
      %v2198 = vmax.f32 %v2076, 0.0
      %v2199 = vmax.f32 %v2081, 0.0
      %v2200 = vmax.f32 %v2086, 0.0
      %v2201 = vmax.f32 %v2091, 0.0
      %v2202 = vmax.f32 %v2096, 0.0
      %v2203 = vmax.f32 %v2101, 0.0
      %v2204 = vmax.f32 %v2106, 0.0
      %v2205 = vmax.f32 %v2111, 0.0
      %v2206 = vmax.f32 %v2116, 0.0
      %v2207 = vmax.f32 %v2121, 0.0
      %v2208 = vmax.f32 %v2126, 0.0
      %v2209 = vmax.f32 %v2131, 0.0
      %v2210 = vmax.f32 %v2136, 0.0
      %v2211 = vmax.f32 %v2141, 0.0
      %v2212 = vmax.f32 %v2146, 0.0
      %v2213 = vmax.f32 %v2151, 0.0
      %v2214 = vmax.f32 %v2156, 0.0
      %v2215 = vmax.f32 %v2161, 0.0
      %v2216 = vmax.f32 %v2166, 0.0
      %v2217 = vmax.f32 %v2171, 0.0
      %v2218 = vmax.f32 %v2176, 0.0
      %v2219 = vmax.f32 %v2181, 0.0
      %v2220 = vmax.f32 %v2186, 0.0
      %v2221 = vround.ne.pseudo %v2189
      %v2222 = vround.ne.pseudo %v2190
      %v2223 = vround.ne.pseudo %v2191
      %v2224 = vround.ne.pseudo %v2192
      %v2225 = vround.ne.pseudo %v2193
      %v2226 = vround.ne.pseudo %v2194
      %v2227 = vround.ne.pseudo %v2195
      %v2228 = vround.ne.pseudo %v2196
      %v2229 = vround.ne.pseudo %v2197
      %v2230 = vround.ne.pseudo %v2198
      %v2231 = vround.ne.pseudo %v2199
      %v2232 = vround.ne.pseudo %v2200
      %v2233 = vround.ne.pseudo %v2201
      %v2234 = vround.ne.pseudo %v2202
      %v2235 = vround.ne.pseudo %v2203
      %v2236 = vround.ne.pseudo %v2204
      %v2237 = vround.ne.pseudo %v2205
      %v2238 = vround.ne.pseudo %v2206
      %v2239 = vround.ne.pseudo %v2207
      %v2240 = vround.ne.pseudo %v2208
      %v2241 = vround.ne.pseudo %v2209
      %v2242 = vround.ne.pseudo %v2210
      %v2243 = vround.ne.pseudo %v2211
      %v2244 = vround.ne.pseudo %v2212
      %v2245 = vround.ne.pseudo %v2213
      %v2246 = vround.ne.pseudo %v2214
      %v2247 = vround.ne.pseudo %v2215
      %v2248 = vround.ne.pseudo %v2216
      %v2249 = vround.ne.pseudo %v2217
      %v2250 = vround.ne.pseudo %v2218
      %v2251 = vround.ne.pseudo %v2219
      %v2252 = vround.ne.pseudo %v2220
      %v2253 = vmax.f32 %v2221, -8.0
      %v2254 = vmax.f32 %v2222, -8.0
      %v2255 = vmax.f32 %v2223, -8.0
      %v2256 = vmax.f32 %v2224, -8.0
      %v2257 = vmax.f32 %v2225, -8.0
      %v2258 = vmax.f32 %v2226, -8.0
      %v2259 = vmax.f32 %v2227, -8.0
      %v2260 = vmax.f32 %v2228, -8.0
      %v2261 = vmax.f32 %v2229, -8.0
      %v2262 = vmax.f32 %v2230, -8.0
      %v2263 = vmax.f32 %v2231, -8.0
      %v2264 = vmax.f32 %v2232, -8.0
      %v2265 = vmax.f32 %v2233, -8.0
      %v2266 = vmax.f32 %v2234, -8.0
      %v2267 = vmax.f32 %v2235, -8.0
      %v2268 = vmax.f32 %v2236, -8.0
      %v2269 = vmax.f32 %v2237, -8.0
      %v2270 = vmax.f32 %v2238, -8.0
      %v2271 = vmax.f32 %v2239, -8.0
      %v2272 = vmax.f32 %v2240, -8.0
      %v2273 = vmax.f32 %v2241, -8.0
      %v2274 = vmax.f32 %v2242, -8.0
      %v2275 = vmax.f32 %v2243, -8.0
      %v2276 = vmax.f32 %v2244, -8.0
      %v2277 = vmax.f32 %v2245, -8.0
      %v2278 = vmax.f32 %v2246, -8.0
      %v2279 = vmax.f32 %v2247, -8.0
      %v2280 = vmax.f32 %v2248, -8.0
      %v2281 = vmax.f32 %v2249, -8.0
      %v2282 = vmax.f32 %v2250, -8.0
      %v2283 = vmax.f32 %v2251, -8.0
      %v2284 = vmax.f32 %v2252, -8.0
      %v2285 = vmin.f32 %v2253, 7.0
      %v2286 = vmin.f32 %v2254, 7.0
      %v2287 = vmin.f32 %v2255, 7.0
      %v2288 = vmin.f32 %v2256, 7.0
      %v2289 = vmin.f32 %v2257, 7.0
      %v2290 = vmin.f32 %v2258, 7.0
      %v2291 = vmin.f32 %v2259, 7.0
      %v2292 = vmin.f32 %v2260, 7.0
      %v2293 = vmin.f32 %v2261, 7.0
      %v2294 = vmin.f32 %v2262, 7.0
      %v2295 = vmin.f32 %v2263, 7.0
      %v2296 = vmin.f32 %v2264, 7.0
      %v2297 = vmin.f32 %v2265, 7.0
      %v2298 = vmin.f32 %v2266, 7.0
      %v2299 = vmin.f32 %v2267, 7.0
      %v2300 = vmin.f32 %v2268, 7.0
      %v2301 = vmin.f32 %v2269, 7.0
      %v2302 = vmin.f32 %v2270, 7.0
      %v2303 = vmin.f32 %v2271, 7.0
      %v2304 = vmin.f32 %v2272, 7.0
      %v2305 = vmin.f32 %v2273, 7.0
      %v2306 = vmin.f32 %v2274, 7.0
      %v2307 = vmin.f32 %v2275, 7.0
      %v2308 = vmin.f32 %v2276, 7.0
      %v2309 = vmin.f32 %v2277, 7.0
      %v2310 = vmin.f32 %v2278, 7.0
      %v2311 = vmin.f32 %v2279, 7.0
      %v2312 = vmin.f32 %v2280, 7.0
      %v2313 = vmin.f32 %v2281, 7.0
      %v2314 = vmin.f32 %v2282, 7.0
      %v2315 = vmin.f32 %v2283, 7.0
      %v2316 = vmin.f32 %v2284, 7.0
      %s2317 = scalar_lea.vmem [#allocation3], 32
      %2318 = vst.msk [vmem:[%s2317 + $0x8] sm:$0xff] %vm252, %v2285
      %2319 = vst.msk [vmem:[%s2317 + $0x10] sm:$0xff] %vm252, %v2286
      %2320 = vst.msk [vmem:[%s2317 + $0x28] sm:$0xff] %vm252, %v2287
      %2321 = vst.msk [vmem:[%s2317 + $0x30] sm:$0xff] %vm252, %v2288
      %2322 = vst.msk [vmem:[%s2317 + $0x48] sm:$0xff] %vm252, %v2289
      %2323 = vst.msk [vmem:[%s2317 + $0x50] sm:$0xff] %vm252, %v2290
      %2324 = vst.msk [vmem:[%s2317 + $0x68] sm:$0xff] %vm252, %v2291
      %2325 = vst.msk [vmem:[%s2317 + $0x70] sm:$0xff] %vm252, %v2292
      %2326 = vst.msk [vmem:[%s2317 + $0x88] sm:$0xff] %vm252, %v2293
      %2327 = vst.msk [vmem:[%s2317 + $0x90] sm:$0xff] %vm252, %v2294
      %2328 = vst.msk [vmem:[%s2317 + $0xa8] sm:$0xff] %vm252, %v2295
      %2329 = vst.msk [vmem:[%s2317 + $0xb0] sm:$0xff] %vm252, %v2296
      %2330 = vst.msk [vmem:[%s2317 + $0xc8] sm:$0xff] %vm252, %v2297
      %2331 = vst.msk [vmem:[%s2317 + $0xd0] sm:$0xff] %vm252, %v2298
      %2332 = vst.msk [vmem:[%s2317 + $0xe8] sm:$0xff] %vm252, %v2299
      %2333 = vst.msk [vmem:[%s2317 + $0xf0] sm:$0xff] %vm252, %v2300
      %2334 = vst.msk [vmem:[%s2317 + $0x108] sm:$0xff] %vm252, %v2301
      %2335 = vst.msk [vmem:[%s2317 + $0x110] sm:$0xff] %vm252, %v2302
      %2336 = vst.msk [vmem:[%s2317 + $0x128] sm:$0xff] %vm252, %v2303
      %2337 = vst.msk [vmem:[%s2317 + $0x130] sm:$0xff] %vm252, %v2304
      %2338 = vst.msk [vmem:[%s2317 + $0x148] sm:$0xff] %vm252, %v2305
      %2339 = vst.msk [vmem:[%s2317 + $0x150] sm:$0xff] %vm252, %v2306
      %2340 = vst.msk [vmem:[%s2317 + $0x168] sm:$0xff] %vm252, %v2307
      %2341 = vst.msk [vmem:[%s2317 + $0x170] sm:$0xff] %vm252, %v2308
      %2342 = vst.msk [vmem:[%s2317 + $0x188] sm:$0xff] %vm252, %v2309
      %2343 = vst.msk [vmem:[%s2317 + $0x190] sm:$0xff] %vm252, %v2310
      %2344 = vst.msk [vmem:[%s2317 + $0x1a8] sm:$0xff] %vm252, %v2311
      %2345 = vst.msk [vmem:[%s2317 + $0x1b0] sm:$0xff] %vm252, %v2312
      %2346 = vst.msk [vmem:[%s2317 + $0x1c8] sm:$0xff] %vm252, %v2313
      %2347 = vst.msk [vmem:[%s2317 + $0x1d0] sm:$0xff] %vm252, %v2314
      %2348 = vst.msk [vmem:[%s2317 + $0x1e8] sm:$0xff] %vm252, %v2315
      %2349 = vst.msk [vmem:[%s2317 + $0x1f0] sm:$0xff] %vm252, %v2316
      %v2350 = vld [vmem:[#allocation3] sm:$0xff]
      %v2351 = vld [vmem:[#allocation3 + $0x8] sm:$0xff]
      %v2352 = vld [vmem:[#allocation3 + $0x10] sm:$0xff]
      %v2353 = vld [vmem:[#allocation3 + $0x18] sm:$0xff]
      %v2354 = vld [vmem:[#allocation3 + $0x20] sm:$0xff]
      %v2355 = vld [vmem:[#allocation3 + $0x28] sm:$0xff]
      %v2356 = vld [vmem:[#allocation3 + $0x30] sm:$0xff]
      %v2357 = vld [vmem:[#allocation3 + $0x38] sm:$0xff]
      %v2358 = vld [vmem:[#allocation3 + $0x40] sm:$0xff]
      %v2359 = vld [vmem:[#allocation3 + $0x48] sm:$0xff]
      %v2360 = vld [vmem:[#allocation3 + $0x50] sm:$0xff]
      %v2361 = vld [vmem:[#allocation3 + $0x58] sm:$0xff]
      %v2362 = vld [vmem:[#allocation3 + $0x60] sm:$0xff]
      %v2363 = vld [vmem:[#allocation3 + $0x68] sm:$0xff]
      %v2364 = vld [vmem:[#allocation3 + $0x70] sm:$0xff]
      %v2365 = vld [vmem:[#allocation3 + $0x78] sm:$0xff]
      %v2366 = vld [vmem:[#allocation3 + $0x80] sm:$0xff]
      %v2367 = vld [vmem:[#allocation3 + $0x88] sm:$0xff]
      %v2368 = vld [vmem:[#allocation3 + $0x90] sm:$0xff]
      %v2369 = vld [vmem:[#allocation3 + $0x98] sm:$0xff]
      %v2370 = vld [vmem:[#allocation3 + $0xa0] sm:$0xff]
      %v2371 = vld [vmem:[#allocation3 + $0xa8] sm:$0xff]
      %v2372 = vld [vmem:[#allocation3 + $0xb0] sm:$0xff]
      %v2373 = vld [vmem:[#allocation3 + $0xb8] sm:$0xff]
      %v2374 = vld [vmem:[#allocation3 + $0xc0] sm:$0xff]
      %v2375 = vld [vmem:[#allocation3 + $0xc8] sm:$0xff]
      %v2376 = vld [vmem:[#allocation3 + $0xd0] sm:$0xff]
      %v2377 = vld [vmem:[#allocation3 + $0xd8] sm:$0xff]
      %v2378 = vld [vmem:[#allocation3 + $0xe0] sm:$0xff]
      %v2379 = vld [vmem:[#allocation3 + $0xe8] sm:$0xff]
      %v2380 = vld [vmem:[#allocation3 + $0xf0] sm:$0xff]
      %v2381 = vld [vmem:[#allocation3 + $0xf8] sm:$0xff]
      %v2382 = vld [vmem:[#allocation3 + $0x100] sm:$0xff]
      %v2383 = vld [vmem:[#allocation3 + $0x108] sm:$0xff]
      %v2384 = vld [vmem:[#allocation3 + $0x110] sm:$0xff]
      %v2385 = vld [vmem:[#allocation3 + $0x118] sm:$0xff]
      %v2386 = vld [vmem:[#allocation3 + $0x120] sm:$0xff]
      %v2387 = vld [vmem:[#allocation3 + $0x128] sm:$0xff]
      %v2388 = vld [vmem:[#allocation3 + $0x130] sm:$0xff]
      %v2389 = vld [vmem:[#allocation3 + $0x138] sm:$0xff]
      %v2390 = vld [vmem:[#allocation3 + $0x140] sm:$0xff]
      %v2391 = vld [vmem:[#allocation3 + $0x148] sm:$0xff]
      %v2392 = vld [vmem:[#allocation3 + $0x150] sm:$0xff]
      %v2393 = vld [vmem:[#allocation3 + $0x158] sm:$0xff]
      %v2394 = vld [vmem:[#allocation3 + $0x160] sm:$0xff]
      %v2395 = vld [vmem:[#allocation3 + $0x168] sm:$0xff]
      %v2396 = vld [vmem:[#allocation3 + $0x170] sm:$0xff]
      %v2397 = vld [vmem:[#allocation3 + $0x178] sm:$0xff]
      %v2398 = vld [vmem:[#allocation3 + $0x180] sm:$0xff]
      %v2399 = vld [vmem:[#allocation3 + $0x188] sm:$0xff]
      %v2400 = vld [vmem:[#allocation3 + $0x190] sm:$0xff]
      %v2401 = vld [vmem:[#allocation3 + $0x198] sm:$0xff]
      %v2402 = vld [vmem:[#allocation3 + $0x1a0] sm:$0xff]
      %v2403 = vld [vmem:[#allocation3 + $0x1a8] sm:$0xff]
      %v2404 = vld [vmem:[#allocation3 + $0x1b0] sm:$0xff]
      %v2405 = vld [vmem:[#allocation3 + $0x1b8] sm:$0xff]
      %v2406 = vld [vmem:[#allocation3 + $0x1c0] sm:$0xff]
      %v2407 = vld [vmem:[#allocation3 + $0x1c8] sm:$0xff]
      %v2408 = vld [vmem:[#allocation3 + $0x1d0] sm:$0xff]
      %v2409 = vld [vmem:[#allocation3 + $0x1d8] sm:$0xff]
      %v2410 = vld [vmem:[#allocation3 + $0x1e0] sm:$0xff]
      %v2411 = vld [vmem:[#allocation3 + $0x1e8] sm:$0xff]
      %v2412 = vld [vmem:[#allocation3 + $0x1f0] sm:$0xff]
      %v2413 = vld [vmem:[#allocation3 + $0x1f8] sm:$0xff]
      %v2414 = vld [vmem:[#allocation3 + $0x200] sm:$0xff]
      %v2415 = vld [vmem:[#allocation3 + $0x208] sm:$0xff]
      %v2416 = vld [vmem:[#allocation3 + $0x210] sm:$0xff]
      %v2417 = vld [vmem:[#allocation3 + $0x218] sm:$0xff]
      %v2418 = vld [vmem:[#allocation3 + $0x220] sm:$0xff]
      %v2419 = vld [vmem:[#allocation3 + $0x228] sm:$0xff]
      %v2420 = vld [vmem:[#allocation3 + $0x230] sm:$0xff]
      %v2421 = vld [vmem:[#allocation3 + $0x238] sm:$0xff]
      %v2470 = vrot.slane %v2350, 7
      %v2471 = vrot.slane %v2351, 7
      %v2472 = vsel %vm582, %v2470, %v2471
      %v2473 = vrot.slane %v2352, 7
      %v2474 = vsel %vm582, %v2471, %v2473
      %v2475 = vrot.slane %v2354, 7
      %v2476 = vrot.slane %v2355, 7
      %v2477 = vsel %vm582, %v2475, %v2476
      %v2478 = vrot.slane %v2356, 7
      %v2479 = vsel %vm582, %v2476, %v2478
      %v2480 = vrot.slane %v2358, 7
      %v2481 = vrot.slane %v2359, 7
      %v2482 = vsel %vm582, %v2480, %v2481
      %v2483 = vrot.slane %v2360, 7
      %v2484 = vsel %vm582, %v2481, %v2483
      %v2485 = vrot.slane %v2362, 7
      %v2486 = vrot.slane %v2363, 7
      %v2487 = vsel %vm582, %v2485, %v2486
      %v2488 = vrot.slane %v2364, 7
      %v2489 = vsel %vm582, %v2486, %v2488
      %v2490 = vrot.slane %v2366, 7
      %v2491 = vrot.slane %v2367, 7
      %v2492 = vsel %vm582, %v2490, %v2491
      %v2493 = vrot.slane %v2368, 7
      %v2494 = vsel %vm582, %v2491, %v2493
      %v2495 = vrot.slane %v2370, 7
      %v2496 = vrot.slane %v2371, 7
      %v2497 = vsel %vm582, %v2495, %v2496
      %v2498 = vrot.slane %v2372, 7
      %v2499 = vsel %vm582, %v2496, %v2498
      %v2500 = vrot.slane %v2374, 7
      %v2501 = vrot.slane %v2375, 7
      %v2502 = vsel %vm582, %v2500, %v2501
      %v2503 = vrot.slane %v2376, 7
      %v2504 = vsel %vm582, %v2501, %v2503
      %v2505 = vrot.slane %v2378, 7
      %v2506 = vrot.slane %v2379, 7
      %v2507 = vsel %vm582, %v2505, %v2506
      %v2508 = vrot.slane %v2380, 7
      %v2509 = vsel %vm582, %v2506, %v2508
      %v2510 = vrot.slane %v2382, 7
      %v2511 = vrot.slane %v2383, 7
      %v2512 = vsel %vm582, %v2510, %v2511
      %v2513 = vrot.slane %v2384, 7
      %v2514 = vsel %vm582, %v2511, %v2513
      %v2515 = vrot.slane %v2386, 7
      %v2516 = vrot.slane %v2387, 7
      %v2517 = vsel %vm582, %v2515, %v2516
      %v2518 = vrot.slane %v2388, 7
      %v2519 = vsel %vm582, %v2516, %v2518
      %v2520 = vrot.slane %v2390, 7
      %v2521 = vrot.slane %v2391, 7
      %v2522 = vsel %vm582, %v2520, %v2521
      %v2523 = vrot.slane %v2392, 7
      %v2524 = vsel %vm582, %v2521, %v2523
      %v2525 = vrot.slane %v2394, 7
      %v2526 = vrot.slane %v2395, 7
      %v2527 = vsel %vm582, %v2525, %v2526
      %v2528 = vrot.slane %v2396, 7
      %v2529 = vsel %vm582, %v2526, %v2528
      %v2530 = vrot.slane %v2398, 7
      %v2531 = vrot.slane %v2399, 7
      %v2532 = vsel %vm582, %v2530, %v2531
      %v2533 = vrot.slane %v2400, 7
      %v2534 = vsel %vm582, %v2531, %v2533
      %v2535 = vrot.slane %v2402, 7
      %v2536 = vrot.slane %v2403, 7
      %v2537 = vsel %vm582, %v2535, %v2536
      %v2538 = vrot.slane %v2404, 7
      %v2539 = vsel %vm582, %v2536, %v2538
      %v2540 = vrot.slane %v2406, 7
      %v2541 = vrot.slane %v2407, 7
      %v2542 = vsel %vm582, %v2540, %v2541
      %v2543 = vrot.slane %v2408, 7
      %v2544 = vsel %vm582, %v2541, %v2543
      %v2545 = vrot.slane %v2410, 7
      %v2546 = vrot.slane %v2411, 7
      %v2547 = vsel %vm582, %v2545, %v2546
      %v2548 = vrot.slane %v2412, 7
      %v2549 = vsel %vm582, %v2546, %v2548
      %v2598 = vrot.slane %v2351, 1
      %v2599 = vrot.slane %v2352, 1
      %v2600 = vsel %vm711, %v2598, %v2599
      %v2601 = vrot.slane %v2353, 1
      %v2602 = vsel %vm711, %v2599, %v2601
      %v2603 = vrot.slane %v2355, 1
      %v2604 = vrot.slane %v2356, 1
      %v2605 = vsel %vm711, %v2603, %v2604
      %v2606 = vrot.slane %v2357, 1
      %v2607 = vsel %vm711, %v2604, %v2606
      %v2608 = vrot.slane %v2359, 1
      %v2609 = vrot.slane %v2360, 1
      %v2610 = vsel %vm711, %v2608, %v2609
      %v2611 = vrot.slane %v2361, 1
      %v2612 = vsel %vm711, %v2609, %v2611
      %v2613 = vrot.slane %v2363, 1
      %v2614 = vrot.slane %v2364, 1
      %v2615 = vsel %vm711, %v2613, %v2614
      %v2616 = vrot.slane %v2365, 1
      %v2617 = vsel %vm711, %v2614, %v2616
      %v2618 = vrot.slane %v2367, 1
      %v2619 = vrot.slane %v2368, 1
      %v2620 = vsel %vm711, %v2618, %v2619
      %v2621 = vrot.slane %v2369, 1
      %v2622 = vsel %vm711, %v2619, %v2621
      %v2623 = vrot.slane %v2371, 1
      %v2624 = vrot.slane %v2372, 1
      %v2625 = vsel %vm711, %v2623, %v2624
      %v2626 = vrot.slane %v2373, 1
      %v2627 = vsel %vm711, %v2624, %v2626
      %v2628 = vrot.slane %v2375, 1
      %v2629 = vrot.slane %v2376, 1
      %v2630 = vsel %vm711, %v2628, %v2629
      %v2631 = vrot.slane %v2377, 1
      %v2632 = vsel %vm711, %v2629, %v2631
      %v2633 = vrot.slane %v2379, 1
      %v2634 = vrot.slane %v2380, 1
      %v2635 = vsel %vm711, %v2633, %v2634
      %v2636 = vrot.slane %v2381, 1
      %v2637 = vsel %vm711, %v2634, %v2636
      %v2638 = vrot.slane %v2383, 1
      %v2639 = vrot.slane %v2384, 1
      %v2640 = vsel %vm711, %v2638, %v2639
      %v2641 = vrot.slane %v2385, 1
      %v2642 = vsel %vm711, %v2639, %v2641
      %v2643 = vrot.slane %v2387, 1
      %v2644 = vrot.slane %v2388, 1
      %v2645 = vsel %vm711, %v2643, %v2644
      %v2646 = vrot.slane %v2389, 1
      %v2647 = vsel %vm711, %v2644, %v2646
      %v2648 = vrot.slane %v2391, 1
      %v2649 = vrot.slane %v2392, 1
      %v2650 = vsel %vm711, %v2648, %v2649
      %v2651 = vrot.slane %v2393, 1
      %v2652 = vsel %vm711, %v2649, %v2651
      %v2653 = vrot.slane %v2395, 1
      %v2654 = vrot.slane %v2396, 1
      %v2655 = vsel %vm711, %v2653, %v2654
      %v2656 = vrot.slane %v2397, 1
      %v2657 = vsel %vm711, %v2654, %v2656
      %v2658 = vrot.slane %v2399, 1
      %v2659 = vrot.slane %v2400, 1
      %v2660 = vsel %vm711, %v2658, %v2659
      %v2661 = vrot.slane %v2401, 1
      %v2662 = vsel %vm711, %v2659, %v2661
      %v2663 = vrot.slane %v2403, 1
      %v2664 = vrot.slane %v2404, 1
      %v2665 = vsel %vm711, %v2663, %v2664
      %v2666 = vrot.slane %v2405, 1
      %v2667 = vsel %vm711, %v2664, %v2666
      %v2668 = vrot.slane %v2407, 1
      %v2669 = vrot.slane %v2408, 1
      %v2670 = vsel %vm711, %v2668, %v2669
      %v2671 = vrot.slane %v2409, 1
      %v2672 = vsel %vm711, %v2669, %v2671
      %v2673 = vrot.slane %v2411, 1
      %v2674 = vrot.slane %v2412, 1
      %v2675 = vsel %vm711, %v2673, %v2674
      %v2676 = vrot.slane %v2413, 1
      %v2677 = vsel %vm711, %v2674, %v2676
      %v2681 = vrot.slane %v2414, 7
      %v2682 = vrot.slane %v2415, 7
      %v2683 = vsel %vm582, %v2681, %v2682
      %v2684 = vrot.slane %v2416, 7
      %v2685 = vsel %vm582, %v2682, %v2684
      %v2687 = vrot.slane %v2415, 1
      %v2688 = vrot.slane %v2416, 1
      %v2689 = vsel %vm711, %v2687, %v2688
      %v2690 = vrot.slane %v2417, 1
      %v2691 = vsel %vm711, %v2688, %v2690
      %v2695 = vrot.slane %v2418, 7
      %v2696 = vrot.slane %v2419, 7
      %v2697 = vsel %vm582, %v2695, %v2696
      %v2698 = vrot.slane %v2420, 7
      %v2699 = vsel %vm582, %v2696, %v2698
      %v2701 = vrot.slane %v2419, 1
      %v2702 = vrot.slane %v2420, 1
      %v2703 = vsel %vm711, %v2701, %v2702
      %v2704 = vrot.slane %v2421, 1
      %v2705 = vsel %vm711, %v2702, %v2704
      %2706 = vrot.lane.b32.xlu0 %v2351, 8
      %v2707 = vpop.permute.xlu0 %2706
      %2708 = vrot.lane.b32.xlu0 %v2352, 8
      %v2709 = vpop.permute.xlu0 %2708
      %2710 = vrot.lane.b32.xlu0 %v2355, 8
      %v2711 = vpop.permute.xlu0 %2710
      %2712 = vrot.lane.b32.xlu0 %v2356, 8
      %v2713 = vpop.permute.xlu0 %2712
      %2714 = vrot.lane.b32.xlu0 %v2359, 8
      %v2715 = vpop.permute.xlu0 %2714
      %2716 = vrot.lane.b32.xlu0 %v2360, 8
      %v2717 = vpop.permute.xlu0 %2716
      %2718 = vrot.lane.b32.xlu0 %v2363, 8
      %v2719 = vpop.permute.xlu0 %2718
      %2720 = vrot.lane.b32.xlu0 %v2364, 8
      %v2721 = vpop.permute.xlu0 %2720
      %2722 = vrot.lane.b32.xlu0 %v2367, 8
      %v2723 = vpop.permute.xlu0 %2722
      %2724 = vrot.lane.b32.xlu0 %v2368, 8
      %v2725 = vpop.permute.xlu0 %2724
      %2726 = vrot.lane.b32.xlu0 %v2371, 8
      %v2727 = vpop.permute.xlu0 %2726
      %2728 = vrot.lane.b32.xlu0 %v2372, 8
      %v2729 = vpop.permute.xlu0 %2728
      %2730 = vrot.lane.b32.xlu0 %v2375, 8
      %v2731 = vpop.permute.xlu0 %2730
      %2732 = vrot.lane.b32.xlu0 %v2376, 8
      %v2733 = vpop.permute.xlu0 %2732
      %2734 = vrot.lane.b32.xlu0 %v2379, 8
      %v2735 = vpop.permute.xlu0 %2734
      %2736 = vrot.lane.b32.xlu0 %v2380, 8
      %v2737 = vpop.permute.xlu0 %2736
      %2738 = vrot.lane.b32.xlu0 %v2383, 8
      %v2739 = vpop.permute.xlu0 %2738
      %2740 = vrot.lane.b32.xlu0 %v2384, 8
      %v2741 = vpop.permute.xlu0 %2740
      %2742 = vrot.lane.b32.xlu0 %v2387, 8
      %v2743 = vpop.permute.xlu0 %2742
      %2744 = vrot.lane.b32.xlu0 %v2388, 8
      %v2745 = vpop.permute.xlu0 %2744
      %2746 = vrot.lane.b32.xlu0 %v2391, 8
      %v2747 = vpop.permute.xlu0 %2746
      %2748 = vrot.lane.b32.xlu0 %v2392, 8
      %v2749 = vpop.permute.xlu0 %2748
      %2750 = vrot.lane.b32.xlu0 %v2395, 8
      %v2751 = vpop.permute.xlu0 %2750
      %2752 = vrot.lane.b32.xlu0 %v2396, 8
      %v2753 = vpop.permute.xlu0 %2752
      %2754 = vrot.lane.b32.xlu0 %v2399, 8
      %v2755 = vpop.permute.xlu0 %2754
      %2756 = vrot.lane.b32.xlu0 %v2400, 8
      %v2757 = vpop.permute.xlu0 %2756
      %2758 = vrot.lane.b32.xlu0 %v2403, 8
      %v2759 = vpop.permute.xlu0 %2758
      %2760 = vrot.lane.b32.xlu0 %v2404, 8
      %v2761 = vpop.permute.xlu0 %2760
      %2762 = vrot.lane.b32.xlu0 %v2407, 8
      %v2763 = vpop.permute.xlu0 %2762
      %2764 = vrot.lane.b32.xlu0 %v2408, 8
      %v2765 = vpop.permute.xlu0 %2764
      %2766 = vrot.lane.b32.xlu0 %v2411, 8
      %v2767 = vpop.permute.xlu0 %2766
      %2768 = vrot.lane.b32.xlu0 %v2412, 8
      %v2769 = vpop.permute.xlu0 %2768
      %2802 = vrot.lane.b32.xlu0 %v2600, 16
      %v2803 = vpop.permute.xlu0 %2802
      %2804 = vrot.lane.b32.xlu0 %v2602, 16
      %v2805 = vpop.permute.xlu0 %2804
      %2806 = vrot.lane.b32.xlu0 %v2605, 16
      %v2807 = vpop.permute.xlu0 %2806
      %2808 = vrot.lane.b32.xlu0 %v2607, 16
      %v2809 = vpop.permute.xlu0 %2808
      %2810 = vrot.lane.b32.xlu0 %v2610, 16
      %v2811 = vpop.permute.xlu0 %2810
      %2812 = vrot.lane.b32.xlu0 %v2612, 16
      %v2813 = vpop.permute.xlu0 %2812
      %2814 = vrot.lane.b32.xlu0 %v2615, 16
      %v2815 = vpop.permute.xlu0 %2814
      %2816 = vrot.lane.b32.xlu0 %v2617, 16
      %v2817 = vpop.permute.xlu0 %2816
      %2818 = vrot.lane.b32.xlu0 %v2620, 16
      %v2819 = vpop.permute.xlu0 %2818
      %2820 = vrot.lane.b32.xlu0 %v2622, 16
      %v2821 = vpop.permute.xlu0 %2820
      %2822 = vrot.lane.b32.xlu0 %v2625, 16
      %v2823 = vpop.permute.xlu0 %2822
      %2824 = vrot.lane.b32.xlu0 %v2627, 16
      %v2825 = vpop.permute.xlu0 %2824
      %2826 = vrot.lane.b32.xlu0 %v2630, 16
      %v2827 = vpop.permute.xlu0 %2826
      %2828 = vrot.lane.b32.xlu0 %v2632, 16
      %v2829 = vpop.permute.xlu0 %2828
      %2830 = vrot.lane.b32.xlu0 %v2635, 16
      %v2831 = vpop.permute.xlu0 %2830
      %2832 = vrot.lane.b32.xlu0 %v2637, 16
      %v2833 = vpop.permute.xlu0 %2832
      %2834 = vrot.lane.b32.xlu0 %v2640, 16
      %v2835 = vpop.permute.xlu0 %2834
      %2836 = vrot.lane.b32.xlu0 %v2642, 16
      %v2837 = vpop.permute.xlu0 %2836
      %2838 = vrot.lane.b32.xlu0 %v2645, 16
      %v2839 = vpop.permute.xlu0 %2838
      %2840 = vrot.lane.b32.xlu0 %v2647, 16
      %v2841 = vpop.permute.xlu0 %2840
      %2842 = vrot.lane.b32.xlu0 %v2650, 16
      %v2843 = vpop.permute.xlu0 %2842
      %2844 = vrot.lane.b32.xlu0 %v2652, 16
      %v2845 = vpop.permute.xlu0 %2844
      %2846 = vrot.lane.b32.xlu0 %v2655, 16
      %v2847 = vpop.permute.xlu0 %2846
      %2848 = vrot.lane.b32.xlu0 %v2657, 16
      %v2849 = vpop.permute.xlu0 %2848
      %2850 = vrot.lane.b32.xlu0 %v2660, 16
      %v2851 = vpop.permute.xlu0 %2850
      %2852 = vrot.lane.b32.xlu0 %v2662, 16
      %v2853 = vpop.permute.xlu0 %2852
      %2854 = vrot.lane.b32.xlu0 %v2665, 16
      %v2855 = vpop.permute.xlu0 %2854
      %2856 = vrot.lane.b32.xlu0 %v2667, 16
      %v2857 = vpop.permute.xlu0 %2856
      %2858 = vrot.lane.b32.xlu0 %v2670, 16
      %v2859 = vpop.permute.xlu0 %2858
      %2860 = vrot.lane.b32.xlu0 %v2672, 16
      %v2861 = vpop.permute.xlu0 %2860
      %2862 = vrot.lane.b32.xlu0 %v2675, 16
      %v2863 = vpop.permute.xlu0 %2862
      %2864 = vrot.lane.b32.xlu0 %v2677, 16
      %v2865 = vpop.permute.xlu0 %2864
      %2898 = vrot.lane.b32.xlu0 %v2477, 24
      %v2899 = vpop.permute.xlu0 %2898
      %2900 = vrot.lane.b32.xlu0 %v2479, 24
      %v2901 = vpop.permute.xlu0 %2900
      %2902 = vrot.lane.b32.xlu0 %v2482, 24
      %v2903 = vpop.permute.xlu0 %2902
      %2904 = vrot.lane.b32.xlu0 %v2484, 24
      %v2905 = vpop.permute.xlu0 %2904
      %2906 = vrot.lane.b32.xlu0 %v2487, 24
      %v2907 = vpop.permute.xlu0 %2906
      %2908 = vrot.lane.b32.xlu0 %v2489, 24
      %v2909 = vpop.permute.xlu0 %2908
      %2910 = vrot.lane.b32.xlu0 %v2492, 24
      %v2911 = vpop.permute.xlu0 %2910
      %2912 = vrot.lane.b32.xlu0 %v2494, 24
      %v2913 = vpop.permute.xlu0 %2912
      %2914 = vrot.lane.b32.xlu0 %v2497, 24
      %v2915 = vpop.permute.xlu0 %2914
      %2916 = vrot.lane.b32.xlu0 %v2499, 24
      %v2917 = vpop.permute.xlu0 %2916
      %2918 = vrot.lane.b32.xlu0 %v2502, 24
      %v2919 = vpop.permute.xlu0 %2918
      %2920 = vrot.lane.b32.xlu0 %v2504, 24
      %v2921 = vpop.permute.xlu0 %2920
      %2922 = vrot.lane.b32.xlu0 %v2507, 24
      %v2923 = vpop.permute.xlu0 %2922
      %2924 = vrot.lane.b32.xlu0 %v2509, 24
      %v2925 = vpop.permute.xlu0 %2924
      %2926 = vrot.lane.b32.xlu0 %v2512, 24
      %v2927 = vpop.permute.xlu0 %2926
      %2928 = vrot.lane.b32.xlu0 %v2514, 24
      %v2929 = vpop.permute.xlu0 %2928
      %2930 = vrot.lane.b32.xlu0 %v2517, 24
      %v2931 = vpop.permute.xlu0 %2930
      %2932 = vrot.lane.b32.xlu0 %v2519, 24
      %v2933 = vpop.permute.xlu0 %2932
      %2934 = vrot.lane.b32.xlu0 %v2522, 24
      %v2935 = vpop.permute.xlu0 %2934
      %2936 = vrot.lane.b32.xlu0 %v2524, 24
      %v2937 = vpop.permute.xlu0 %2936
      %2938 = vrot.lane.b32.xlu0 %v2527, 24
      %v2939 = vpop.permute.xlu0 %2938
      %2940 = vrot.lane.b32.xlu0 %v2529, 24
      %v2941 = vpop.permute.xlu0 %2940
      %2942 = vrot.lane.b32.xlu0 %v2532, 24
      %v2943 = vpop.permute.xlu0 %2942
      %2944 = vrot.lane.b32.xlu0 %v2534, 24
      %v2945 = vpop.permute.xlu0 %2944
      %2946 = vrot.lane.b32.xlu0 %v2537, 24
      %v2947 = vpop.permute.xlu0 %2946
      %2948 = vrot.lane.b32.xlu0 %v2539, 24
      %v2949 = vpop.permute.xlu0 %2948
      %2950 = vrot.lane.b32.xlu0 %v2542, 24
      %v2951 = vpop.permute.xlu0 %2950
      %2952 = vrot.lane.b32.xlu0 %v2544, 24
      %v2953 = vpop.permute.xlu0 %2952
      %2954 = vrot.lane.b32.xlu0 %v2547, 24
      %v2955 = vpop.permute.xlu0 %2954
      %2956 = vrot.lane.b32.xlu0 %v2549, 24
      %v2957 = vpop.permute.xlu0 %2956
      %2958 = vrot.lane.b32.xlu0 %v2683, 24
      %v2959 = vpop.permute.xlu0 %2958
      %2960 = vrot.lane.b32.xlu0 %v2685, 24
      %v2961 = vpop.permute.xlu0 %2960
      %2994 = vrot.lane.b32.xlu0 %v2355, 32
      %v2995 = vpop.permute.xlu0 %2994
      %2996 = vrot.lane.b32.xlu0 %v2356, 32
      %v2997 = vpop.permute.xlu0 %2996
      %2998 = vrot.lane.b32.xlu0 %v2359, 32
      %v2999 = vpop.permute.xlu0 %2998
      %3000 = vrot.lane.b32.xlu0 %v2360, 32
      %v3001 = vpop.permute.xlu0 %3000
      %3002 = vrot.lane.b32.xlu0 %v2363, 32
      %v3003 = vpop.permute.xlu0 %3002
      %3004 = vrot.lane.b32.xlu0 %v2364, 32
      %v3005 = vpop.permute.xlu0 %3004
      %3006 = vrot.lane.b32.xlu0 %v2367, 32
      %v3007 = vpop.permute.xlu0 %3006
      %3008 = vrot.lane.b32.xlu0 %v2368, 32
      %v3009 = vpop.permute.xlu0 %3008
      %3010 = vrot.lane.b32.xlu0 %v2371, 32
      %v3011 = vpop.permute.xlu0 %3010
      %3012 = vrot.lane.b32.xlu0 %v2372, 32
      %v3013 = vpop.permute.xlu0 %3012
      %3014 = vrot.lane.b32.xlu0 %v2375, 32
      %v3015 = vpop.permute.xlu0 %3014
      %3016 = vrot.lane.b32.xlu0 %v2376, 32
      %v3017 = vpop.permute.xlu0 %3016
      %3018 = vrot.lane.b32.xlu0 %v2379, 32
      %v3019 = vpop.permute.xlu0 %3018
      %3020 = vrot.lane.b32.xlu0 %v2380, 32
      %v3021 = vpop.permute.xlu0 %3020
      %3022 = vrot.lane.b32.xlu0 %v2383, 32
      %v3023 = vpop.permute.xlu0 %3022
      %3024 = vrot.lane.b32.xlu0 %v2384, 32
      %v3025 = vpop.permute.xlu0 %3024
      %3026 = vrot.lane.b32.xlu0 %v2387, 32
      %v3027 = vpop.permute.xlu0 %3026
      %3028 = vrot.lane.b32.xlu0 %v2388, 32
      %v3029 = vpop.permute.xlu0 %3028
      %3030 = vrot.lane.b32.xlu0 %v2391, 32
      %v3031 = vpop.permute.xlu0 %3030
      %3032 = vrot.lane.b32.xlu0 %v2392, 32
      %v3033 = vpop.permute.xlu0 %3032
      %3034 = vrot.lane.b32.xlu0 %v2395, 32
      %v3035 = vpop.permute.xlu0 %3034
      %3036 = vrot.lane.b32.xlu0 %v2396, 32
      %v3037 = vpop.permute.xlu0 %3036
      %3038 = vrot.lane.b32.xlu0 %v2399, 32
      %v3039 = vpop.permute.xlu0 %3038
      %3040 = vrot.lane.b32.xlu0 %v2400, 32
      %v3041 = vpop.permute.xlu0 %3040
      %3042 = vrot.lane.b32.xlu0 %v2403, 32
      %v3043 = vpop.permute.xlu0 %3042
      %3044 = vrot.lane.b32.xlu0 %v2404, 32
      %v3045 = vpop.permute.xlu0 %3044
      %3046 = vrot.lane.b32.xlu0 %v2407, 32
      %v3047 = vpop.permute.xlu0 %3046
      %3048 = vrot.lane.b32.xlu0 %v2408, 32
      %v3049 = vpop.permute.xlu0 %3048
      %3050 = vrot.lane.b32.xlu0 %v2411, 32
      %v3051 = vpop.permute.xlu0 %3050
      %3052 = vrot.lane.b32.xlu0 %v2412, 32
      %v3053 = vpop.permute.xlu0 %3052
      %3054 = vrot.lane.b32.xlu0 %v2415, 32
      %v3055 = vpop.permute.xlu0 %3054
      %3056 = vrot.lane.b32.xlu0 %v2416, 32
      %v3057 = vpop.permute.xlu0 %3056
      %3090 = vrot.lane.b32.xlu0 %v2605, 40
      %v3091 = vpop.permute.xlu0 %3090
      %3092 = vrot.lane.b32.xlu0 %v2607, 40
      %v3093 = vpop.permute.xlu0 %3092
      %3094 = vrot.lane.b32.xlu0 %v2610, 40
      %v3095 = vpop.permute.xlu0 %3094
      %3096 = vrot.lane.b32.xlu0 %v2612, 40
      %v3097 = vpop.permute.xlu0 %3096
      %3098 = vrot.lane.b32.xlu0 %v2615, 40
      %v3099 = vpop.permute.xlu0 %3098
      %3100 = vrot.lane.b32.xlu0 %v2617, 40
      %v3101 = vpop.permute.xlu0 %3100
      %3102 = vrot.lane.b32.xlu0 %v2620, 40
      %v3103 = vpop.permute.xlu0 %3102
      %3104 = vrot.lane.b32.xlu0 %v2622, 40
      %v3105 = vpop.permute.xlu0 %3104
      %3106 = vrot.lane.b32.xlu0 %v2625, 40
      %v3107 = vpop.permute.xlu0 %3106
      %3108 = vrot.lane.b32.xlu0 %v2627, 40
      %v3109 = vpop.permute.xlu0 %3108
      %3110 = vrot.lane.b32.xlu0 %v2630, 40
      %v3111 = vpop.permute.xlu0 %3110
      %3112 = vrot.lane.b32.xlu0 %v2632, 40
      %v3113 = vpop.permute.xlu0 %3112
      %3114 = vrot.lane.b32.xlu0 %v2635, 40
      %v3115 = vpop.permute.xlu0 %3114
      %3116 = vrot.lane.b32.xlu0 %v2637, 40
      %v3117 = vpop.permute.xlu0 %3116
      %3118 = vrot.lane.b32.xlu0 %v2640, 40
      %v3119 = vpop.permute.xlu0 %3118
      %3120 = vrot.lane.b32.xlu0 %v2642, 40
      %v3121 = vpop.permute.xlu0 %3120
      %3122 = vrot.lane.b32.xlu0 %v2645, 40
      %v3123 = vpop.permute.xlu0 %3122
      %3124 = vrot.lane.b32.xlu0 %v2647, 40
      %v3125 = vpop.permute.xlu0 %3124
      %3126 = vrot.lane.b32.xlu0 %v2650, 40
      %v3127 = vpop.permute.xlu0 %3126
      %3128 = vrot.lane.b32.xlu0 %v2652, 40
      %v3129 = vpop.permute.xlu0 %3128
      %3130 = vrot.lane.b32.xlu0 %v2655, 40
      %v3131 = vpop.permute.xlu0 %3130
      %3132 = vrot.lane.b32.xlu0 %v2657, 40
      %v3133 = vpop.permute.xlu0 %3132
      %3134 = vrot.lane.b32.xlu0 %v2660, 40
      %v3135 = vpop.permute.xlu0 %3134
      %3136 = vrot.lane.b32.xlu0 %v2662, 40
      %v3137 = vpop.permute.xlu0 %3136
      %3138 = vrot.lane.b32.xlu0 %v2665, 40
      %v3139 = vpop.permute.xlu0 %3138
      %3140 = vrot.lane.b32.xlu0 %v2667, 40
      %v3141 = vpop.permute.xlu0 %3140
      %3142 = vrot.lane.b32.xlu0 %v2670, 40
      %v3143 = vpop.permute.xlu0 %3142
      %3144 = vrot.lane.b32.xlu0 %v2672, 40
      %v3145 = vpop.permute.xlu0 %3144
      %3146 = vrot.lane.b32.xlu0 %v2675, 40
      %v3147 = vpop.permute.xlu0 %3146
      %3148 = vrot.lane.b32.xlu0 %v2677, 40
      %v3149 = vpop.permute.xlu0 %3148
      %3150 = vrot.lane.b32.xlu0 %v2689, 40
      %v3151 = vpop.permute.xlu0 %3150
      %3152 = vrot.lane.b32.xlu0 %v2691, 40
      %v3153 = vpop.permute.xlu0 %3152
      %3186 = vrot.lane.b32.xlu0 %v2482, 48
      %v3187 = vpop.permute.xlu0 %3186
      %3188 = vrot.lane.b32.xlu0 %v2484, 48
      %v3189 = vpop.permute.xlu0 %3188
      %3190 = vrot.lane.b32.xlu0 %v2487, 48
      %v3191 = vpop.permute.xlu0 %3190
      %3192 = vrot.lane.b32.xlu0 %v2489, 48
      %v3193 = vpop.permute.xlu0 %3192
      %3194 = vrot.lane.b32.xlu0 %v2492, 48
      %v3195 = vpop.permute.xlu0 %3194
      %3196 = vrot.lane.b32.xlu0 %v2494, 48
      %v3197 = vpop.permute.xlu0 %3196
      %3198 = vrot.lane.b32.xlu0 %v2497, 48
      %v3199 = vpop.permute.xlu0 %3198
      %3200 = vrot.lane.b32.xlu0 %v2499, 48
      %v3201 = vpop.permute.xlu0 %3200
      %3202 = vrot.lane.b32.xlu0 %v2502, 48
      %v3203 = vpop.permute.xlu0 %3202
      %3204 = vrot.lane.b32.xlu0 %v2504, 48
      %v3205 = vpop.permute.xlu0 %3204
      %3206 = vrot.lane.b32.xlu0 %v2507, 48
      %v3207 = vpop.permute.xlu0 %3206
      %3208 = vrot.lane.b32.xlu0 %v2509, 48
      %v3209 = vpop.permute.xlu0 %3208
      %3210 = vrot.lane.b32.xlu0 %v2512, 48
      %v3211 = vpop.permute.xlu0 %3210
      %3212 = vrot.lane.b32.xlu0 %v2514, 48
      %v3213 = vpop.permute.xlu0 %3212
      %3214 = vrot.lane.b32.xlu0 %v2517, 48
      %v3215 = vpop.permute.xlu0 %3214
      %3216 = vrot.lane.b32.xlu0 %v2519, 48
      %v3217 = vpop.permute.xlu0 %3216
      %3218 = vrot.lane.b32.xlu0 %v2522, 48
      %v3219 = vpop.permute.xlu0 %3218
      %3220 = vrot.lane.b32.xlu0 %v2524, 48
      %v3221 = vpop.permute.xlu0 %3220
      %3222 = vrot.lane.b32.xlu0 %v2527, 48
      %v3223 = vpop.permute.xlu0 %3222
      %3224 = vrot.lane.b32.xlu0 %v2529, 48
      %v3225 = vpop.permute.xlu0 %3224
      %3226 = vrot.lane.b32.xlu0 %v2532, 48
      %v3227 = vpop.permute.xlu0 %3226
      %3228 = vrot.lane.b32.xlu0 %v2534, 48
      %v3229 = vpop.permute.xlu0 %3228
      %3230 = vrot.lane.b32.xlu0 %v2537, 48
      %v3231 = vpop.permute.xlu0 %3230
      %3232 = vrot.lane.b32.xlu0 %v2539, 48
      %v3233 = vpop.permute.xlu0 %3232
      %3234 = vrot.lane.b32.xlu0 %v2542, 48
      %v3235 = vpop.permute.xlu0 %3234
      %3236 = vrot.lane.b32.xlu0 %v2544, 48
      %v3237 = vpop.permute.xlu0 %3236
      %3238 = vrot.lane.b32.xlu0 %v2547, 48
      %v3239 = vpop.permute.xlu0 %3238
      %3240 = vrot.lane.b32.xlu0 %v2549, 48
      %v3241 = vpop.permute.xlu0 %3240
      %3242 = vrot.lane.b32.xlu0 %v2683, 48
      %v3243 = vpop.permute.xlu0 %3242
      %3244 = vrot.lane.b32.xlu0 %v2685, 48
      %v3245 = vpop.permute.xlu0 %3244
      %3246 = vrot.lane.b32.xlu0 %v2697, 48
      %v3247 = vpop.permute.xlu0 %3246
      %3248 = vrot.lane.b32.xlu0 %v2699, 48
      %v3249 = vpop.permute.xlu0 %3248
      %3282 = vrot.lane.b32.xlu0 %v2359, 56
      %v3283 = vpop.permute.xlu0 %3282
      %3284 = vrot.lane.b32.xlu0 %v2360, 56
      %v3285 = vpop.permute.xlu0 %3284
      %3286 = vrot.lane.b32.xlu0 %v2363, 56
      %v3287 = vpop.permute.xlu0 %3286
      %3288 = vrot.lane.b32.xlu0 %v2364, 56
      %v3289 = vpop.permute.xlu0 %3288
      %3290 = vrot.lane.b32.xlu0 %v2367, 56
      %v3291 = vpop.permute.xlu0 %3290
      %3292 = vrot.lane.b32.xlu0 %v2368, 56
      %v3293 = vpop.permute.xlu0 %3292
      %3294 = vrot.lane.b32.xlu0 %v2371, 56
      %v3295 = vpop.permute.xlu0 %3294
      %3296 = vrot.lane.b32.xlu0 %v2372, 56
      %v3297 = vpop.permute.xlu0 %3296
      %3298 = vrot.lane.b32.xlu0 %v2375, 56
      %v3299 = vpop.permute.xlu0 %3298
      %3300 = vrot.lane.b32.xlu0 %v2376, 56
      %v3301 = vpop.permute.xlu0 %3300
      %3302 = vrot.lane.b32.xlu0 %v2379, 56
      %v3303 = vpop.permute.xlu0 %3302
      %3304 = vrot.lane.b32.xlu0 %v2380, 56
      %v3305 = vpop.permute.xlu0 %3304
      %3306 = vrot.lane.b32.xlu0 %v2383, 56
      %v3307 = vpop.permute.xlu0 %3306
      %3308 = vrot.lane.b32.xlu0 %v2384, 56
      %v3309 = vpop.permute.xlu0 %3308
      %3310 = vrot.lane.b32.xlu0 %v2387, 56
      %v3311 = vpop.permute.xlu0 %3310
      %3312 = vrot.lane.b32.xlu0 %v2388, 56
      %v3313 = vpop.permute.xlu0 %3312
      %3314 = vrot.lane.b32.xlu0 %v2391, 56
      %v3315 = vpop.permute.xlu0 %3314
      %3316 = vrot.lane.b32.xlu0 %v2392, 56
      %v3317 = vpop.permute.xlu0 %3316
      %3318 = vrot.lane.b32.xlu0 %v2395, 56
      %v3319 = vpop.permute.xlu0 %3318
      %3320 = vrot.lane.b32.xlu0 %v2396, 56
      %v3321 = vpop.permute.xlu0 %3320
      %3322 = vrot.lane.b32.xlu0 %v2399, 56
      %v3323 = vpop.permute.xlu0 %3322
      %3324 = vrot.lane.b32.xlu0 %v2400, 56
      %v3325 = vpop.permute.xlu0 %3324
      %3326 = vrot.lane.b32.xlu0 %v2403, 56
      %v3327 = vpop.permute.xlu0 %3326
      %3328 = vrot.lane.b32.xlu0 %v2404, 56
      %v3329 = vpop.permute.xlu0 %3328
      %3330 = vrot.lane.b32.xlu0 %v2407, 56
      %v3331 = vpop.permute.xlu0 %3330
      %3332 = vrot.lane.b32.xlu0 %v2408, 56
      %v3333 = vpop.permute.xlu0 %3332
      %3334 = vrot.lane.b32.xlu0 %v2411, 56
      %v3335 = vpop.permute.xlu0 %3334
      %3336 = vrot.lane.b32.xlu0 %v2412, 56
      %v3337 = vpop.permute.xlu0 %3336
      %3338 = vrot.lane.b32.xlu0 %v2415, 56
      %v3339 = vpop.permute.xlu0 %3338
      %3340 = vrot.lane.b32.xlu0 %v2416, 56
      %v3341 = vpop.permute.xlu0 %3340
      %3342 = vrot.lane.b32.xlu0 %v2419, 56
      %v3343 = vpop.permute.xlu0 %3342
      %3344 = vrot.lane.b32.xlu0 %v2420, 56
      %v3345 = vpop.permute.xlu0 %3344
      %3378 = vrot.lane.b32.xlu0 %v2610, 64
      %v3379 = vpop.permute.xlu0 %3378
      %3380 = vrot.lane.b32.xlu0 %v2612, 64
      %v3381 = vpop.permute.xlu0 %3380
      %3382 = vrot.lane.b32.xlu0 %v2615, 64
      %v3383 = vpop.permute.xlu0 %3382
      %3384 = vrot.lane.b32.xlu0 %v2617, 64
      %v3385 = vpop.permute.xlu0 %3384
      %3386 = vrot.lane.b32.xlu0 %v2620, 64
      %v3387 = vpop.permute.xlu0 %3386
      %3388 = vrot.lane.b32.xlu0 %v2622, 64
      %v3389 = vpop.permute.xlu0 %3388
      %3390 = vrot.lane.b32.xlu0 %v2625, 64
      %v3391 = vpop.permute.xlu0 %3390
      %3392 = vrot.lane.b32.xlu0 %v2627, 64
      %v3393 = vpop.permute.xlu0 %3392
      %3394 = vrot.lane.b32.xlu0 %v2630, 64
      %v3395 = vpop.permute.xlu0 %3394
      %3396 = vrot.lane.b32.xlu0 %v2632, 64
      %v3397 = vpop.permute.xlu0 %3396
      %3398 = vrot.lane.b32.xlu0 %v2635, 64
      %v3399 = vpop.permute.xlu0 %3398
      %3400 = vrot.lane.b32.xlu0 %v2637, 64
      %v3401 = vpop.permute.xlu0 %3400
      %3402 = vrot.lane.b32.xlu0 %v2640, 64
      %v3403 = vpop.permute.xlu0 %3402
      %3404 = vrot.lane.b32.xlu0 %v2642, 64
      %v3405 = vpop.permute.xlu0 %3404
      %3406 = vrot.lane.b32.xlu0 %v2645, 64
      %v3407 = vpop.permute.xlu0 %3406
      %3408 = vrot.lane.b32.xlu0 %v2647, 64
      %v3409 = vpop.permute.xlu0 %3408
      %3410 = vrot.lane.b32.xlu0 %v2650, 64
      %v3411 = vpop.permute.xlu0 %3410
      %3412 = vrot.lane.b32.xlu0 %v2652, 64
      %v3413 = vpop.permute.xlu0 %3412
      %3414 = vrot.lane.b32.xlu0 %v2655, 64
      %v3415 = vpop.permute.xlu0 %3414
      %3416 = vrot.lane.b32.xlu0 %v2657, 64
      %v3417 = vpop.permute.xlu0 %3416
      %3418 = vrot.lane.b32.xlu0 %v2660, 64
      %v3419 = vpop.permute.xlu0 %3418
      %3420 = vrot.lane.b32.xlu0 %v2662, 64
      %v3421 = vpop.permute.xlu0 %3420
      %3422 = vrot.lane.b32.xlu0 %v2665, 64
      %v3423 = vpop.permute.xlu0 %3422
      %3424 = vrot.lane.b32.xlu0 %v2667, 64
      %v3425 = vpop.permute.xlu0 %3424
      %3426 = vrot.lane.b32.xlu0 %v2670, 64
      %v3427 = vpop.permute.xlu0 %3426
      %3428 = vrot.lane.b32.xlu0 %v2672, 64
      %v3429 = vpop.permute.xlu0 %3428
      %3430 = vrot.lane.b32.xlu0 %v2675, 64
      %v3431 = vpop.permute.xlu0 %3430
      %3432 = vrot.lane.b32.xlu0 %v2677, 64
      %v3433 = vpop.permute.xlu0 %3432
      %3434 = vrot.lane.b32.xlu0 %v2689, 64
      %v3435 = vpop.permute.xlu0 %3434
      %3436 = vrot.lane.b32.xlu0 %v2691, 64
      %v3437 = vpop.permute.xlu0 %3436
      %3438 = vrot.lane.b32.xlu0 %v2703, 64
      %v3439 = vpop.permute.xlu0 %3438
      %3440 = vrot.lane.b32.xlu0 %v2705, 64
      %v3441 = vpop.permute.xlu0 %3440
      %v3474 = vsel %vm252, %v2472, %v2707
      %v3475 = vsel %vm252, %v2474, %v2709
      %v3476 = vsel %vm252, %v2477, %v2711
      %v3477 = vsel %vm252, %v2479, %v2713
      %v3478 = vsel %vm252, %v2482, %v2715
      %v3479 = vsel %vm252, %v2484, %v2717
      %v3480 = vsel %vm252, %v2487, %v2719
      %v3481 = vsel %vm252, %v2489, %v2721
      %v3482 = vsel %vm252, %v2492, %v2723
      %v3483 = vsel %vm252, %v2494, %v2725
      %v3484 = vsel %vm252, %v2497, %v2727
      %v3485 = vsel %vm252, %v2499, %v2729
      %v3486 = vsel %vm252, %v2502, %v2731
      %v3487 = vsel %vm252, %v2504, %v2733
      %v3488 = vsel %vm252, %v2507, %v2735
      %v3489 = vsel %vm252, %v2509, %v2737
      %v3490 = vsel %vm252, %v2512, %v2739
      %v3491 = vsel %vm252, %v2514, %v2741
      %v3492 = vsel %vm252, %v2517, %v2743
      %v3493 = vsel %vm252, %v2519, %v2745
      %v3494 = vsel %vm252, %v2522, %v2747
      %v3495 = vsel %vm252, %v2524, %v2749
      %v3496 = vsel %vm252, %v2527, %v2751
      %v3497 = vsel %vm252, %v2529, %v2753
      %v3498 = vsel %vm252, %v2532, %v2755
      %v3499 = vsel %vm252, %v2534, %v2757
      %v3500 = vsel %vm252, %v2537, %v2759
      %v3501 = vsel %vm252, %v2539, %v2761
      %v3502 = vsel %vm252, %v2542, %v2763
      %v3503 = vsel %vm252, %v2544, %v2765
      %v3504 = vsel %vm252, %v2547, %v2767
      %v3505 = vsel %vm252, %v2549, %v2769
      %v3506 = vsel %vm1620, %v3474, %v2803
      %v3507 = vsel %vm1620, %v3475, %v2805
      %v3508 = vsel %vm1620, %v3476, %v2807
      %v3509 = vsel %vm1620, %v3477, %v2809
      %v3510 = vsel %vm1620, %v3478, %v2811
      %v3511 = vsel %vm1620, %v3479, %v2813
      %v3512 = vsel %vm1620, %v3480, %v2815
      %v3513 = vsel %vm1620, %v3481, %v2817
      %v3514 = vsel %vm1620, %v3482, %v2819
      %v3515 = vsel %vm1620, %v3483, %v2821
      %v3516 = vsel %vm1620, %v3484, %v2823
      %v3517 = vsel %vm1620, %v3485, %v2825
      %v3518 = vsel %vm1620, %v3486, %v2827
      %v3519 = vsel %vm1620, %v3487, %v2829
      %v3520 = vsel %vm1620, %v3488, %v2831
      %v3521 = vsel %vm1620, %v3489, %v2833
      %v3522 = vsel %vm1620, %v3490, %v2835
      %v3523 = vsel %vm1620, %v3491, %v2837
      %v3524 = vsel %vm1620, %v3492, %v2839
      %v3525 = vsel %vm1620, %v3493, %v2841
      %v3526 = vsel %vm1620, %v3494, %v2843
      %v3527 = vsel %vm1620, %v3495, %v2845
      %v3528 = vsel %vm1620, %v3496, %v2847
      %v3529 = vsel %vm1620, %v3497, %v2849
      %v3530 = vsel %vm1620, %v3498, %v2851
      %v3531 = vsel %vm1620, %v3499, %v2853
      %v3532 = vsel %vm1620, %v3500, %v2855
      %v3533 = vsel %vm1620, %v3501, %v2857
      %v3534 = vsel %vm1620, %v3502, %v2859
      %v3535 = vsel %vm1620, %v3503, %v2861
      %v3536 = vsel %vm1620, %v3504, %v2863
      %v3537 = vsel %vm1620, %v3505, %v2865
      %v3538 = vsel %vm1653, %v3506, %v2899
      %v3539 = vsel %vm1653, %v3507, %v2901
      %v3540 = vsel %vm1653, %v3508, %v2903
      %v3541 = vsel %vm1653, %v3509, %v2905
      %v3542 = vsel %vm1653, %v3510, %v2907
      %v3543 = vsel %vm1653, %v3511, %v2909
      %v3544 = vsel %vm1653, %v3512, %v2911
      %v3545 = vsel %vm1653, %v3513, %v2913
      %v3546 = vsel %vm1653, %v3514, %v2915
      %v3547 = vsel %vm1653, %v3515, %v2917
      %v3548 = vsel %vm1653, %v3516, %v2919
      %v3549 = vsel %vm1653, %v3517, %v2921
      %v3550 = vsel %vm1653, %v3518, %v2923
      %v3551 = vsel %vm1653, %v3519, %v2925
      %v3552 = vsel %vm1653, %v3520, %v2927
      %v3553 = vsel %vm1653, %v3521, %v2929
      %v3554 = vsel %vm1653, %v3522, %v2931
      %v3555 = vsel %vm1653, %v3523, %v2933
      %v3556 = vsel %vm1653, %v3524, %v2935
      %v3557 = vsel %vm1653, %v3525, %v2937
      %v3558 = vsel %vm1653, %v3526, %v2939
      %v3559 = vsel %vm1653, %v3527, %v2941
      %v3560 = vsel %vm1653, %v3528, %v2943
      %v3561 = vsel %vm1653, %v3529, %v2945
      %v3562 = vsel %vm1653, %v3530, %v2947
      %v3563 = vsel %vm1653, %v3531, %v2949
      %v3564 = vsel %vm1653, %v3532, %v2951
      %v3565 = vsel %vm1653, %v3533, %v2953
      %v3566 = vsel %vm1653, %v3534, %v2955
      %v3567 = vsel %vm1653, %v3535, %v2957
      %v3568 = vsel %vm1653, %v3536, %v2959
      %v3569 = vsel %vm1653, %v3537, %v2961
      %v3570 = vsel %vm1686, %v3538, %v2995
      %v3571 = vsel %vm1686, %v3539, %v2997
      %v3572 = vsel %vm1686, %v3540, %v2999
      %v3573 = vsel %vm1686, %v3541, %v3001
      %v3574 = vsel %vm1686, %v3542, %v3003
      %v3575 = vsel %vm1686, %v3543, %v3005
      %v3576 = vsel %vm1686, %v3544, %v3007
      %v3577 = vsel %vm1686, %v3545, %v3009
      %v3578 = vsel %vm1686, %v3546, %v3011
      %v3579 = vsel %vm1686, %v3547, %v3013
      %v3580 = vsel %vm1686, %v3548, %v3015
      %v3581 = vsel %vm1686, %v3549, %v3017
      %v3582 = vsel %vm1686, %v3550, %v3019
      %v3583 = vsel %vm1686, %v3551, %v3021
      %v3584 = vsel %vm1686, %v3552, %v3023
      %v3585 = vsel %vm1686, %v3553, %v3025
      %v3586 = vsel %vm1686, %v3554, %v3027
      %v3587 = vsel %vm1686, %v3555, %v3029
      %v3588 = vsel %vm1686, %v3556, %v3031
      %v3589 = vsel %vm1686, %v3557, %v3033
      %v3590 = vsel %vm1686, %v3558, %v3035
      %v3591 = vsel %vm1686, %v3559, %v3037
      %v3592 = vsel %vm1686, %v3560, %v3039
      %v3593 = vsel %vm1686, %v3561, %v3041
      %v3594 = vsel %vm1686, %v3562, %v3043
      %v3595 = vsel %vm1686, %v3563, %v3045
      %v3596 = vsel %vm1686, %v3564, %v3047
      %v3597 = vsel %vm1686, %v3565, %v3049
      %v3598 = vsel %vm1686, %v3566, %v3051
      %v3599 = vsel %vm1686, %v3567, %v3053
      %v3600 = vsel %vm1686, %v3568, %v3055
      %v3601 = vsel %vm1686, %v3569, %v3057
      %v3602 = vsel %vm1719, %v3570, %v3091
      %v3603 = vsel %vm1719, %v3571, %v3093
      %v3604 = vsel %vm1719, %v3572, %v3095
      %v3605 = vsel %vm1719, %v3573, %v3097
      %v3606 = vsel %vm1719, %v3574, %v3099
      %v3607 = vsel %vm1719, %v3575, %v3101
      %v3608 = vsel %vm1719, %v3576, %v3103
      %v3609 = vsel %vm1719, %v3577, %v3105
      %v3610 = vsel %vm1719, %v3578, %v3107
      %v3611 = vsel %vm1719, %v3579, %v3109
      %v3612 = vsel %vm1719, %v3580, %v3111
      %v3613 = vsel %vm1719, %v3581, %v3113
      %v3614 = vsel %vm1719, %v3582, %v3115
      %v3615 = vsel %vm1719, %v3583, %v3117
      %v3616 = vsel %vm1719, %v3584, %v3119
      %v3617 = vsel %vm1719, %v3585, %v3121
      %v3618 = vsel %vm1719, %v3586, %v3123
      %v3619 = vsel %vm1719, %v3587, %v3125
      %v3620 = vsel %vm1719, %v3588, %v3127
      %v3621 = vsel %vm1719, %v3589, %v3129
      %v3622 = vsel %vm1719, %v3590, %v3131
      %v3623 = vsel %vm1719, %v3591, %v3133
      %v3624 = vsel %vm1719, %v3592, %v3135
      %v3625 = vsel %vm1719, %v3593, %v3137
      %v3626 = vsel %vm1719, %v3594, %v3139
      %v3627 = vsel %vm1719, %v3595, %v3141
      %v3628 = vsel %vm1719, %v3596, %v3143
      %v3629 = vsel %vm1719, %v3597, %v3145
      %v3630 = vsel %vm1719, %v3598, %v3147
      %v3631 = vsel %vm1719, %v3599, %v3149
      %v3632 = vsel %vm1719, %v3600, %v3151
      %v3633 = vsel %vm1719, %v3601, %v3153
      %v3634 = vsel %vm1752, %v3602, %v3187
      %v3635 = vsel %vm1752, %v3603, %v3189
      %v3636 = vsel %vm1752, %v3604, %v3191
      %v3637 = vsel %vm1752, %v3605, %v3193
      %v3638 = vsel %vm1752, %v3606, %v3195
      %v3639 = vsel %vm1752, %v3607, %v3197
      %v3640 = vsel %vm1752, %v3608, %v3199
      %v3641 = vsel %vm1752, %v3609, %v3201
      %v3642 = vsel %vm1752, %v3610, %v3203
      %v3643 = vsel %vm1752, %v3611, %v3205
      %v3644 = vsel %vm1752, %v3612, %v3207
      %v3645 = vsel %vm1752, %v3613, %v3209
      %v3646 = vsel %vm1752, %v3614, %v3211
      %v3647 = vsel %vm1752, %v3615, %v3213
      %v3648 = vsel %vm1752, %v3616, %v3215
      %v3649 = vsel %vm1752, %v3617, %v3217
      %v3650 = vsel %vm1752, %v3618, %v3219
      %v3651 = vsel %vm1752, %v3619, %v3221
      %v3652 = vsel %vm1752, %v3620, %v3223
      %v3653 = vsel %vm1752, %v3621, %v3225
      %v3654 = vsel %vm1752, %v3622, %v3227
      %v3655 = vsel %vm1752, %v3623, %v3229
      %v3656 = vsel %vm1752, %v3624, %v3231
      %v3657 = vsel %vm1752, %v3625, %v3233
      %v3658 = vsel %vm1752, %v3626, %v3235
      %v3659 = vsel %vm1752, %v3627, %v3237
      %v3660 = vsel %vm1752, %v3628, %v3239
      %v3661 = vsel %vm1752, %v3629, %v3241
      %v3662 = vsel %vm1752, %v3630, %v3243
      %v3663 = vsel %vm1752, %v3631, %v3245
      %v3664 = vsel %vm1752, %v3632, %v3247
      %v3665 = vsel %vm1752, %v3633, %v3249
      %v3666 = vsel %vm1785, %v3634, %v3283
      %v3667 = vsel %vm1785, %v3635, %v3285
      %v3668 = vsel %vm1785, %v3636, %v3287
      %v3669 = vsel %vm1785, %v3637, %v3289
      %v3670 = vsel %vm1785, %v3638, %v3291
      %v3671 = vsel %vm1785, %v3639, %v3293
      %v3672 = vsel %vm1785, %v3640, %v3295
      %v3673 = vsel %vm1785, %v3641, %v3297
      %v3674 = vsel %vm1785, %v3642, %v3299
      %v3675 = vsel %vm1785, %v3643, %v3301
      %v3676 = vsel %vm1785, %v3644, %v3303
      %v3677 = vsel %vm1785, %v3645, %v3305
      %v3678 = vsel %vm1785, %v3646, %v3307
      %v3679 = vsel %vm1785, %v3647, %v3309
      %v3680 = vsel %vm1785, %v3648, %v3311
      %v3681 = vsel %vm1785, %v3649, %v3313
      %v3682 = vsel %vm1785, %v3650, %v3315
      %v3683 = vsel %vm1785, %v3651, %v3317
      %v3684 = vsel %vm1785, %v3652, %v3319
      %v3685 = vsel %vm1785, %v3653, %v3321
      %v3686 = vsel %vm1785, %v3654, %v3323
      %v3687 = vsel %vm1785, %v3655, %v3325
      %v3688 = vsel %vm1785, %v3656, %v3327
      %v3689 = vsel %vm1785, %v3657, %v3329
      %v3690 = vsel %vm1785, %v3658, %v3331
      %v3691 = vsel %vm1785, %v3659, %v3333
      %v3692 = vsel %vm1785, %v3660, %v3335
      %v3693 = vsel %vm1785, %v3661, %v3337
      %v3694 = vsel %vm1785, %v3662, %v3339
      %v3695 = vsel %vm1785, %v3663, %v3341
      %v3696 = vsel %vm1785, %v3664, %v3343
      %v3697 = vsel %vm1785, %v3665, %v3345
      %v3698 = vsel %vm1818, %v3666, %v3379
      %v3699 = vsel %vm1818, %v3667, %v3381
      %v3700 = vsel %vm1818, %v3668, %v3383
      %v3701 = vsel %vm1818, %v3669, %v3385
      %v3702 = vsel %vm1818, %v3670, %v3387
      %v3703 = vsel %vm1818, %v3671, %v3389
      %v3704 = vsel %vm1818, %v3672, %v3391
      %v3705 = vsel %vm1818, %v3673, %v3393
      %v3706 = vsel %vm1818, %v3674, %v3395
      %v3707 = vsel %vm1818, %v3675, %v3397
      %v3708 = vsel %vm1818, %v3676, %v3399
      %v3709 = vsel %vm1818, %v3677, %v3401
      %v3710 = vsel %vm1818, %v3678, %v3403
      %v3711 = vsel %vm1818, %v3679, %v3405
      %v3712 = vsel %vm1818, %v3680, %v3407
      %v3713 = vsel %vm1818, %v3681, %v3409
      %v3714 = vsel %vm1818, %v3682, %v3411
      %v3715 = vsel %vm1818, %v3683, %v3413
      %v3716 = vsel %vm1818, %v3684, %v3415
      %v3717 = vsel %vm1818, %v3685, %v3417
      %v3718 = vsel %vm1818, %v3686, %v3419
      %v3719 = vsel %vm1818, %v3687, %v3421
      %v3720 = vsel %vm1818, %v3688, %v3423
      %v3721 = vsel %vm1818, %v3689, %v3425
      %v3722 = vsel %vm1818, %v3690, %v3427
      %v3723 = vsel %vm1818, %v3691, %v3429
      %v3724 = vsel %vm1818, %v3692, %v3431
      %v3725 = vsel %vm1818, %v3693, %v3433
      %v3726 = vsel %vm1818, %v3694, %v3435
      %v3727 = vsel %vm1818, %v3695, %v3437
      %v3728 = vsel %vm1818, %v3696, %v3439
      %v3729 = vsel %vm1818, %v3697, %v3441
      %v3730 = vld [vmem:[%s3] sm:$0xff]
      %v3731 = vld [vmem:[%s3 + $0x8] sm:$0xff]
      %v3732 = vld [vmem:[%s3 + $0x10] sm:$0xff]
      %v3733 = vld [vmem:[%s3 + $0x18] sm:$0xff]
      %v3734 = vld [vmem:[%s3 + $0x20] sm:$0xff]
      %v3735 = vld [vmem:[%s3 + $0x28] sm:$0xff]
      %v3736 = vld [vmem:[%s3 + $0x30] sm:$0xff]
      %v3737 = vld [vmem:[%s3 + $0x38] sm:$0xff]
      %v3738 = vld [vmem:[%s3 + $0x40] sm:$0xff]
      %v3739 = vld [vmem:[%s4] sm:$0x1]
      %v3741 = vlaneseq
      %v3742 = vshrl.u32 %v3741, 7
      %v3743 = vsub.s32 0, %v3742
      %v3744 = vrot.slane %v3739, %v3743
      %v3747 = vsel %vm1867, %v3698, 0
      %v3750 = vsel %vm1867, %v3699, 0
      %v3753 = vsel %vm1867, %v3700, 0
      %v3756 = vsel %vm1867, %v3701, 0
      %v3759 = vsel %vm1867, %v3702, 0
      %v3762 = vsel %vm1867, %v3703, 0
      %v3765 = vsel %vm1867, %v3704, 0
      %v3768 = vsel %vm1867, %v3705, 0
      %v3771 = vsel %vm1867, %v3706, 0
      %v3774 = vsel %vm1867, %v3707, 0
      %v3777 = vsel %vm1867, %v3708, 0
      %v3780 = vsel %vm1867, %v3709, 0
      %v3783 = vsel %vm1867, %v3710, 0
      %v3786 = vsel %vm1867, %v3711, 0
      %v3789 = vsel %vm1867, %v3712, 0
      %v3792 = vsel %vm1867, %v3713, 0
      %v3795 = vsel %vm1867, %v3714, 0
      %v3798 = vsel %vm1867, %v3715, 0
      %v3801 = vsel %vm1867, %v3716, 0
      %v3804 = vsel %vm1867, %v3717, 0
      %v3807 = vsel %vm1867, %v3718, 0
      %v3810 = vsel %vm1867, %v3719, 0
      %v3813 = vsel %vm1867, %v3720, 0
      %v3816 = vsel %vm1867, %v3721, 0
      %v3819 = vsel %vm1867, %v3722, 0
      %v3822 = vsel %vm1867, %v3723, 0
      %v3825 = vsel %vm1867, %v3724, 0
      %v3828 = vsel %vm1867, %v3725, 0
      %v3831 = vsel %vm1867, %v3726, 0
      %v3834 = vsel %vm1867, %v3727, 0
      %v3837 = vsel %vm1867, %v3728, 0
      %v3840 = vsel %vm1867, %v3729, 0
      %3842 = vmatprep.subr.mxu0 0.0
      %3843 = vmatpush1.msra.mxu0 %v3730
      %3844 = vmatprep.subr.mxu0 0.0
      %3845 = vmatpush1.msra.mxu0 %v3731
      %3846 = vmatprep.subr.mxu0 0.0
      %3847 = vmatpush1.msra.mxu0 %v3732
      %3848 = vmatprep.subr.mxu0 0.0
      %3849 = vmatpush1.msra.mxu0 %v3733
      %3850 = vmatprep.subr.mxu0 0.0
      %3851 = vmatpush1.msra.mxu0 %v3734
      %3852 = vmatprep.subr.mxu0 0.0
      %3853 = vmatpush1.msra.mxu0 %v3735
      %3854 = vmatprep.subr.mxu0 0.0
      %3855 = vmatpush1.msra.mxu0 %v3736
      %3856 = vmatprep.subr.mxu0 0.0
      %3857 = vmatpush1.msra.mxu0 %v3737
      %3858 = vmatprep.subr.mxu0 0.0
      %3859 = vmatpush1.msra.mxu0 %v3738
      %3860 = vmatprep.subr.mxu0 0.0
      %3861 = vmatpush1.msra.mxu0 0.0
      %3862 = vmatprep.subr.mxu0 0.0
      %3863 = vmatpush1.msra.mxu0 0.0
      %3864 = vmatprep.subr.mxu0 0.0
      %3865 = vmatpush1.msra.mxu0 0.0
      %3866 = vmatprep.subr.mxu0 0.0
      %3867 = vmatpush1.msra.mxu0 0.0
      %3868 = vmatprep.subr.mxu0 0.0
      %3869 = vmatpush1.msra.mxu0 0.0
      %3870 = vmatprep.subr.mxu0 0.0
      %3871 = vmatpush1.msra.mxu0 0.0
      %3872 = vmatprep.subr.mxu0 0.0
      %3873 = vmatpush1.msra.mxu0 0.0
      %3874 = vmatprep.subr.mxu0 0.0
      %3875 = vmatpush1.msra.mxu0 0.0
      %3876 = vmatprep.subr.mxu0 0.0
      %3877 = vmatpush1.msra.mxu0 0.0
      %3878 = vmatprep.subr.mxu0 0.0
      %3879 = vmatpush1.msra.mxu0 0.0
      %3880 = vmatprep.subr.mxu0 0.0
      %3881 = vmatpush1.msra.mxu0 0.0
      %3882 = vmatprep.subr.mxu0 0.0
      %3883 = vmatpush1.msra.mxu0 0.0
      %3884 = vmatprep.subr.mxu0 0.0
      %3885 = vmatpush1.msra.mxu0 0.0
      %3886 = vmatprep.subr.mxu0 0.0
      %3887 = vmatpush1.msra.mxu0 0.0
      %3888 = vmatprep.subr.mxu0 0.0
      %3889 = vmatpush1.msra.mxu0 0.0
      %3890 = vmatprep.subr.mxu0 0.0
      %3891 = vmatpush1.msra.mxu0 0.0
      %3892 = vmatprep.subr.mxu0 0.0
      %3893 = vmatpush1.msra.mxu0 0.0
      %3894 = vmatprep.subr.mxu0 0.0
      %3895 = vmatpush1.msra.mxu0 0.0
      %3896 = vmatprep.subr.mxu0 0.0
      %3897 = vmatpush1.msra.mxu0 0.0
      %3898 = vmatprep.subr.mxu0 0.0
      %3899 = vmatpush1.msra.mxu0 0.0
      %3900 = vmatprep.subr.mxu0 0.0
      %3901 = vmatpush1.msra.mxu0 0.0
      %3902 = vmatprep.subr.mxu0 0.0
      %3903 = vmatpush1.msra.mxu0 0.0
      %3904 = vmatprep.subr.mxu0 0.0
      %3905 = vmatpush1.msra.mxu0 0.0
      %3906 = vmatprep.mubr.f32.mxu0 0.0
      %3907 = vmatmul.mubr.f32.gmra.mrb[0].mxu0 %v3747
      %v3908 = vpop.f32.mrb[0].mxu0
      %v3909 = vadd.f32 %v3744, %v3908
      %v3910 = vpop.f32.mrb[0].mxu0
      %3911 = vmatprep.mubr.f32.mxu0 0.0
      %3912 = vmatmul.mubr.f32.gmra.mrb[0].mxu0 %v3750
      %v3913 = vpop.f32.mrb[0].mxu0
      %v3914 = vadd.f32 %v3744, %v3913
      %v3915 = vpop.f32.mrb[0].mxu0
      %3916 = vmatprep.mubr.f32.mxu0 0.0
      %3917 = vmatmul.mubr.f32.gmra.mrb[0].mxu0 %v3753
      %v3918 = vpop.f32.mrb[0].mxu0
      %v3919 = vadd.f32 %v3744, %v3918
      %v3920 = vpop.f32.mrb[0].mxu0
      %3921 = vmatprep.mubr.f32.mxu0 0.0
      %3922 = vmatmul.mubr.f32.gmra.mrb[0].mxu0 %v3756
      %v3923 = vpop.f32.mrb[0].mxu0
      %v3924 = vadd.f32 %v3744, %v3923
      %v3925 = vpop.f32.mrb[0].mxu0
      %3926 = vmatprep.mubr.f32.mxu0 0.0
      %3927 = vmatmul.mubr.f32.gmra.mrb[0].mxu0 %v3759
      %v3928 = vpop.f32.mrb[0].mxu0
      %v3929 = vadd.f32 %v3744, %v3928
      %v3930 = vpop.f32.mrb[0].mxu0
      %3931 = vmatprep.mubr.f32.mxu0 0.0
      %3932 = vmatmul.mubr.f32.gmra.mrb[0].mxu0 %v3762
      %v3933 = vpop.f32.mrb[0].mxu0
      %v3934 = vadd.f32 %v3744, %v3933
      %v3935 = vpop.f32.mrb[0].mxu0
      %3936 = vmatprep.mubr.f32.mxu0 0.0
      %3937 = vmatmul.mubr.f32.gmra.mrb[0].mxu0 %v3765
      %v3938 = vpop.f32.mrb[0].mxu0
      %v3939 = vadd.f32 %v3744, %v3938
      %v3940 = vpop.f32.mrb[0].mxu0
      %3941 = vmatprep.mubr.f32.mxu0 0.0
      %3942 = vmatmul.mubr.f32.gmra.mrb[0].mxu0 %v3768
      %v3943 = vpop.f32.mrb[0].mxu0
      %v3944 = vadd.f32 %v3744, %v3943
      %v3945 = vpop.f32.mrb[0].mxu0
      %3946 = vmatprep.mubr.f32.mxu0 0.0
      %3947 = vmatmul.mubr.f32.gmra.mrb[0].mxu0 %v3771
      %v3948 = vpop.f32.mrb[0].mxu0
      %v3949 = vadd.f32 %v3744, %v3948
      %v3950 = vpop.f32.mrb[0].mxu0
      %3951 = vmatprep.mubr.f32.mxu0 0.0
      %3952 = vmatmul.mubr.f32.gmra.mrb[0].mxu0 %v3774
      %v3953 = vpop.f32.mrb[0].mxu0
      %v3954 = vadd.f32 %v3744, %v3953
      %v3955 = vpop.f32.mrb[0].mxu0
      %3956 = vmatprep.mubr.f32.mxu0 0.0
      %3957 = vmatmul.mubr.f32.gmra.mrb[0].mxu0 %v3777
      %v3958 = vpop.f32.mrb[0].mxu0
      %v3959 = vadd.f32 %v3744, %v3958
      %v3960 = vpop.f32.mrb[0].mxu0
      %3961 = vmatprep.mubr.f32.mxu0 0.0
      %3962 = vmatmul.mubr.f32.gmra.mrb[0].mxu0 %v3780
      %v3963 = vpop.f32.mrb[0].mxu0
      %v3964 = vadd.f32 %v3744, %v3963
      %v3965 = vpop.f32.mrb[0].mxu0
      %3966 = vmatprep.mubr.f32.mxu0 0.0
      %3967 = vmatmul.mubr.f32.gmra.mrb[0].mxu0 %v3783
      %v3968 = vpop.f32.mrb[0].mxu0
      %v3969 = vadd.f32 %v3744, %v3968
      %v3970 = vpop.f32.mrb[0].mxu0
      %3971 = vmatprep.mubr.f32.mxu0 0.0
      %3972 = vmatmul.mubr.f32.gmra.mrb[0].mxu0 %v3786
      %v3973 = vpop.f32.mrb[0].mxu0
      %v3974 = vadd.f32 %v3744, %v3973
      %v3975 = vpop.f32.mrb[0].mxu0
      %3976 = vmatprep.mubr.f32.mxu0 0.0
      %3977 = vmatmul.mubr.f32.gmra.mrb[0].mxu0 %v3789
      %v3978 = vpop.f32.mrb[0].mxu0
      %v3979 = vadd.f32 %v3744, %v3978
      %v3980 = vpop.f32.mrb[0].mxu0
      %3981 = vmatprep.mubr.f32.mxu0 0.0
      %3982 = vmatmul.mubr.f32.gmra.mrb[0].mxu0 %v3792
      %v3983 = vpop.f32.mrb[0].mxu0
      %v3984 = vadd.f32 %v3744, %v3983
      %v3985 = vpop.f32.mrb[0].mxu0
      %3986 = vmatprep.mubr.f32.mxu0 0.0
      %3987 = vmatmul.mubr.f32.gmra.mrb[0].mxu0 %v3795
      %v3988 = vpop.f32.mrb[0].mxu0
      %v3989 = vadd.f32 %v3744, %v3988
      %v3990 = vpop.f32.mrb[0].mxu0
      %3991 = vmatprep.mubr.f32.mxu0 0.0
      %3992 = vmatmul.mubr.f32.gmra.mrb[0].mxu0 %v3798
      %v3993 = vpop.f32.mrb[0].mxu0
      %v3994 = vadd.f32 %v3744, %v3993
      %v3995 = vpop.f32.mrb[0].mxu0
      %3996 = vmatprep.mubr.f32.mxu0 0.0
      %3997 = vmatmul.mubr.f32.gmra.mrb[0].mxu0 %v3801
      %v3998 = vpop.f32.mrb[0].mxu0
      %v3999 = vadd.f32 %v3744, %v3998
      %v4000 = vpop.f32.mrb[0].mxu0
      %4001 = vmatprep.mubr.f32.mxu0 0.0
      %4002 = vmatmul.mubr.f32.gmra.mrb[0].mxu0 %v3804
      %v4003 = vpop.f32.mrb[0].mxu0
      %v4004 = vadd.f32 %v3744, %v4003
      %v4005 = vpop.f32.mrb[0].mxu0
      %4006 = vmatprep.mubr.f32.mxu0 0.0
      %4007 = vmatmul.mubr.f32.gmra.mrb[0].mxu0 %v3807
      %v4008 = vpop.f32.mrb[0].mxu0
      %v4009 = vadd.f32 %v3744, %v4008
      %v4010 = vpop.f32.mrb[0].mxu0
      %4011 = vmatprep.mubr.f32.mxu0 0.0
      %4012 = vmatmul.mubr.f32.gmra.mrb[0].mxu0 %v3810
      %v4013 = vpop.f32.mrb[0].mxu0
      %v4014 = vadd.f32 %v3744, %v4013
      %v4015 = vpop.f32.mrb[0].mxu0
      %4016 = vmatprep.mubr.f32.mxu0 0.0
      %4017 = vmatmul.mubr.f32.gmra.mrb[0].mxu0 %v3813
      %v4018 = vpop.f32.mrb[0].mxu0
      %v4019 = vadd.f32 %v3744, %v4018
      %v4020 = vpop.f32.mrb[0].mxu0
      %4021 = vmatprep.mubr.f32.mxu0 0.0
      %4022 = vmatmul.mubr.f32.gmra.mrb[0].mxu0 %v3816
      %v4023 = vpop.f32.mrb[0].mxu0
      %v4024 = vadd.f32 %v3744, %v4023
      %v4025 = vpop.f32.mrb[0].mxu0
      %4026 = vmatprep.mubr.f32.mxu0 0.0
      %4027 = vmatmul.mubr.f32.gmra.mrb[0].mxu0 %v3819
      %v4028 = vpop.f32.mrb[0].mxu0
      %v4029 = vadd.f32 %v3744, %v4028
      %v4030 = vpop.f32.mrb[0].mxu0
      %4031 = vmatprep.mubr.f32.mxu0 0.0
      %4032 = vmatmul.mubr.f32.gmra.mrb[0].mxu0 %v3822
      %v4033 = vpop.f32.mrb[0].mxu0
      %v4034 = vadd.f32 %v3744, %v4033
      %v4035 = vpop.f32.mrb[0].mxu0
      %4036 = vmatprep.mubr.f32.mxu0 0.0
      %4037 = vmatmul.mubr.f32.gmra.mrb[0].mxu0 %v3825
      %v4038 = vpop.f32.mrb[0].mxu0
      %v4039 = vadd.f32 %v3744, %v4038
      %v4040 = vpop.f32.mrb[0].mxu0
      %4041 = vmatprep.mubr.f32.mxu0 0.0
      %4042 = vmatmul.mubr.f32.gmra.mrb[0].mxu0 %v3828
      %v4043 = vpop.f32.mrb[0].mxu0
      %v4044 = vadd.f32 %v3744, %v4043
      %v4045 = vpop.f32.mrb[0].mxu0
      %4046 = vmatprep.mubr.f32.mxu0 0.0
      %4047 = vmatmul.mubr.f32.gmra.mrb[0].mxu0 %v3831
      %v4048 = vpop.f32.mrb[0].mxu0
      %v4049 = vadd.f32 %v3744, %v4048
      %v4050 = vpop.f32.mrb[0].mxu0
      %4051 = vmatprep.mubr.f32.mxu0 0.0
      %4052 = vmatmul.mubr.f32.gmra.mrb[0].mxu0 %v3834
      %v4053 = vpop.f32.mrb[0].mxu0
      %v4054 = vadd.f32 %v3744, %v4053
      %v4055 = vpop.f32.mrb[0].mxu0
      %4056 = vmatprep.mubr.f32.mxu0 0.0
      %4057 = vmatmul.mubr.f32.gmra.mrb[0].mxu0 %v3837
      %v4058 = vpop.f32.mrb[0].mxu0
      %v4059 = vadd.f32 %v3744, %v4058
      %v4060 = vpop.f32.mrb[0].mxu0
      %4061 = vmatprep.mubr.f32.mxu0 0.0
      %4062 = vmatmul.mubr.f32.gmra.mrb[0].mxu0 %v3840
      %v4063 = vpop.f32.mrb[0].mxu0
      %v4064 = vadd.f32 %v3744, %v4063
      %v4065 = vpop.f32.mrb[0].mxu0
      %4066 = vdwg.mxu0
      %v4067 = vround.ne.pseudo %v3909
      %v4068 = vround.ne.pseudo %v3914
      %v4069 = vround.ne.pseudo %v3919
      %v4070 = vround.ne.pseudo %v3924
      %v4071 = vround.ne.pseudo %v3929
      %v4072 = vround.ne.pseudo %v3934
      %v4073 = vround.ne.pseudo %v3939
      %v4074 = vround.ne.pseudo %v3944
      %v4075 = vround.ne.pseudo %v3949
      %v4076 = vround.ne.pseudo %v3954
      %v4077 = vround.ne.pseudo %v3959
      %v4078 = vround.ne.pseudo %v3964
      %v4079 = vround.ne.pseudo %v3969
      %v4080 = vround.ne.pseudo %v3974
      %v4081 = vround.ne.pseudo %v3979
      %v4082 = vround.ne.pseudo %v3984
      %v4083 = vround.ne.pseudo %v3989
      %v4084 = vround.ne.pseudo %v3994
      %v4085 = vround.ne.pseudo %v3999
      %v4086 = vround.ne.pseudo %v4004
      %v4087 = vround.ne.pseudo %v4009
      %v4088 = vround.ne.pseudo %v4014
      %v4089 = vround.ne.pseudo %v4019
      %v4090 = vround.ne.pseudo %v4024
      %v4091 = vround.ne.pseudo %v4029
      %v4092 = vround.ne.pseudo %v4034
      %v4093 = vround.ne.pseudo %v4039
      %v4094 = vround.ne.pseudo %v4044
      %v4095 = vround.ne.pseudo %v4049
      %v4096 = vround.ne.pseudo %v4054
      %v4097 = vround.ne.pseudo %v4059
      %v4098 = vround.ne.pseudo %v4064
      %v4099 = vmax.f32 %v4067, -8.0
      %v4100 = vmax.f32 %v4068, -8.0
      %v4101 = vmax.f32 %v4069, -8.0
      %v4102 = vmax.f32 %v4070, -8.0
      %v4103 = vmax.f32 %v4071, -8.0
      %v4104 = vmax.f32 %v4072, -8.0
      %v4105 = vmax.f32 %v4073, -8.0
      %v4106 = vmax.f32 %v4074, -8.0
      %v4107 = vmax.f32 %v4075, -8.0
      %v4108 = vmax.f32 %v4076, -8.0
      %v4109 = vmax.f32 %v4077, -8.0
      %v4110 = vmax.f32 %v4078, -8.0
      %v4111 = vmax.f32 %v4079, -8.0
      %v4112 = vmax.f32 %v4080, -8.0
      %v4113 = vmax.f32 %v4081, -8.0
      %v4114 = vmax.f32 %v4082, -8.0
      %v4115 = vmax.f32 %v4083, -8.0
      %v4116 = vmax.f32 %v4084, -8.0
      %v4117 = vmax.f32 %v4085, -8.0
      %v4118 = vmax.f32 %v4086, -8.0
      %v4119 = vmax.f32 %v4087, -8.0
      %v4120 = vmax.f32 %v4088, -8.0
      %v4121 = vmax.f32 %v4089, -8.0
      %v4122 = vmax.f32 %v4090, -8.0
      %v4123 = vmax.f32 %v4091, -8.0
      %v4124 = vmax.f32 %v4092, -8.0
      %v4125 = vmax.f32 %v4093, -8.0
      %v4126 = vmax.f32 %v4094, -8.0
      %v4127 = vmax.f32 %v4095, -8.0
      %v4128 = vmax.f32 %v4096, -8.0
      %v4129 = vmax.f32 %v4097, -8.0
      %v4130 = vmax.f32 %v4098, -8.0
      %v4131 = vmin.f32 %v4099, 7.0
      %v4132 = vmin.f32 %v4100, 7.0
      %v4133 = vmin.f32 %v4101, 7.0
      %v4134 = vmin.f32 %v4102, 7.0
      %v4135 = vmin.f32 %v4103, 7.0
      %v4136 = vmin.f32 %v4104, 7.0
      %v4137 = vmin.f32 %v4105, 7.0
      %v4138 = vmin.f32 %v4106, 7.0
      %v4139 = vmin.f32 %v4107, 7.0
      %v4140 = vmin.f32 %v4108, 7.0
      %v4141 = vmin.f32 %v4109, 7.0
      %v4142 = vmin.f32 %v4110, 7.0
      %v4143 = vmin.f32 %v4111, 7.0
      %v4144 = vmin.f32 %v4112, 7.0
      %v4145 = vmin.f32 %v4113, 7.0
      %v4146 = vmin.f32 %v4114, 7.0
      %v4147 = vmin.f32 %v4115, 7.0
      %v4148 = vmin.f32 %v4116, 7.0
      %v4149 = vmin.f32 %v4117, 7.0
      %v4150 = vmin.f32 %v4118, 7.0
      %v4151 = vmin.f32 %v4119, 7.0
      %v4152 = vmin.f32 %v4120, 7.0
      %v4153 = vmin.f32 %v4121, 7.0
      %v4154 = vmin.f32 %v4122, 7.0
      %v4155 = vmin.f32 %v4123, 7.0
      %v4156 = vmin.f32 %v4124, 7.0
      %v4157 = vmin.f32 %v4125, 7.0
      %v4158 = vmin.f32 %v4126, 7.0
      %v4159 = vmin.f32 %v4127, 7.0
      %v4160 = vmin.f32 %v4128, 7.0
      %v4161 = vmin.f32 %v4129, 7.0
      %v4162 = vmin.f32 %v4130, 7.0
      %v4163 = vld [vmem:[%s5] sm:$0x1]
      %v4164 = vld [vmem:[%s5 + $0x1] sm:$0x1]
      %v4165 = vld [vmem:[%s5 + $0x2] sm:$0x1]
      %v4166 = vlaneseq
      %v4167 = vshrl.u32 %v4166, 7
      %v4168 = vsub.s32 0, %v4167
      %v4169 = vrot.slane %v4163, %v4168
      %v4170 = vmul.f32 %v4131, %v4169
      %v4171 = vmul.f32 %v4132, %v4169
      %v4172 = vmul.f32 %v4133, %v4169
      %v4173 = vmul.f32 %v4134, %v4169
      %v4174 = vmul.f32 %v4135, %v4169
      %v4175 = vmul.f32 %v4136, %v4169
      %v4176 = vmul.f32 %v4137, %v4169
      %v4177 = vmul.f32 %v4138, %v4169
      %v4178 = vmul.f32 %v4139, %v4169
      %v4179 = vmul.f32 %v4140, %v4169
      %v4180 = vmul.f32 %v4141, %v4169
      %v4181 = vmul.f32 %v4142, %v4169
      %v4182 = vmul.f32 %v4143, %v4169
      %v4183 = vmul.f32 %v4144, %v4169
      %v4184 = vmul.f32 %v4145, %v4169
      %v4185 = vmul.f32 %v4146, %v4169
      %v4186 = vmul.f32 %v4147, %v4169
      %v4187 = vmul.f32 %v4148, %v4169
      %v4188 = vmul.f32 %v4149, %v4169
      %v4189 = vmul.f32 %v4150, %v4169
      %v4190 = vmul.f32 %v4151, %v4169
      %v4191 = vmul.f32 %v4152, %v4169
      %v4192 = vmul.f32 %v4153, %v4169
      %v4193 = vmul.f32 %v4154, %v4169
      %v4194 = vmul.f32 %v4155, %v4169
      %v4195 = vmul.f32 %v4156, %v4169
      %v4196 = vmul.f32 %v4157, %v4169
      %v4197 = vmul.f32 %v4158, %v4169
      %v4198 = vmul.f32 %v4159, %v4169
      %v4199 = vmul.f32 %v4160, %v4169
      %v4200 = vmul.f32 %v4161, %v4169
      %v4201 = vmul.f32 %v4162, %v4169
      %v4202 = vlaneseq
      %v4203 = vshrl.u32 %v4202, 7
      %v4204 = vsub.s32 0, %v4203
      %v4205 = vrot.slane %v4164, %v4204
      %v4206 = vmul.f32 %v397, %v4205
      %v4207 = vmul.f32 %v398, %v4205
      %v4208 = vmul.f32 %v399, %v4205
      %v4209 = vmul.f32 %v400, %v4205
      %v4210 = vmul.f32 %v401, %v4205
      %v4211 = vmul.f32 %v402, %v4205
      %v4212 = vmul.f32 %v403, %v4205
      %v4213 = vmul.f32 %v404, %v4205
      %v4214 = vmul.f32 %v405, %v4205
      %v4215 = vmul.f32 %v406, %v4205
      %v4216 = vmul.f32 %v407, %v4205
      %v4217 = vmul.f32 %v408, %v4205
      %v4218 = vmul.f32 %v409, %v4205
      %v4219 = vmul.f32 %v410, %v4205
      %v4220 = vmul.f32 %v411, %v4205
      %v4221 = vmul.f32 %v412, %v4205
      %v4222 = vmul.f32 %v413, %v4205
      %v4223 = vmul.f32 %v414, %v4205
      %v4224 = vmul.f32 %v415, %v4205
      %v4225 = vmul.f32 %v416, %v4205
      %v4226 = vmul.f32 %v417, %v4205
      %v4227 = vmul.f32 %v418, %v4205
      %v4228 = vmul.f32 %v419, %v4205
      %v4229 = vmul.f32 %v420, %v4205
      %v4230 = vmul.f32 %v421, %v4205
      %v4231 = vmul.f32 %v422, %v4205
      %v4232 = vmul.f32 %v423, %v4205
      %v4233 = vmul.f32 %v424, %v4205
      %v4234 = vmul.f32 %v425, %v4205
      %v4235 = vmul.f32 %v426, %v4205
      %v4236 = vmul.f32 %v427, %v4205
      %v4237 = vmul.f32 %v428, %v4205
      %v4238 = vadd.f32 %v4170, %v4206
      %v4239 = vadd.f32 %v4171, %v4207
      %v4240 = vadd.f32 %v4172, %v4208
      %v4241 = vadd.f32 %v4173, %v4209
      %v4242 = vadd.f32 %v4174, %v4210
      %v4243 = vadd.f32 %v4175, %v4211
      %v4244 = vadd.f32 %v4176, %v4212
      %v4245 = vadd.f32 %v4177, %v4213
      %v4246 = vadd.f32 %v4178, %v4214
      %v4247 = vadd.f32 %v4179, %v4215
      %v4248 = vadd.f32 %v4180, %v4216
      %v4249 = vadd.f32 %v4181, %v4217
      %v4250 = vadd.f32 %v4182, %v4218
      %v4251 = vadd.f32 %v4183, %v4219
      %v4252 = vadd.f32 %v4184, %v4220
      %v4253 = vadd.f32 %v4185, %v4221
      %v4254 = vadd.f32 %v4186, %v4222
      %v4255 = vadd.f32 %v4187, %v4223
      %v4256 = vadd.f32 %v4188, %v4224
      %v4257 = vadd.f32 %v4189, %v4225
      %v4258 = vadd.f32 %v4190, %v4226
      %v4259 = vadd.f32 %v4191, %v4227
      %v4260 = vadd.f32 %v4192, %v4228
      %v4261 = vadd.f32 %v4193, %v4229
      %v4262 = vadd.f32 %v4194, %v4230
      %v4263 = vadd.f32 %v4195, %v4231
      %v4264 = vadd.f32 %v4196, %v4232
      %v4265 = vadd.f32 %v4197, %v4233
      %v4266 = vadd.f32 %v4198, %v4234
      %v4267 = vadd.f32 %v4199, %v4235
      %v4268 = vadd.f32 %v4200, %v4236
      %v4269 = vadd.f32 %v4201, %v4237
      %v4270 = vmax.f32 %v4238, 0.0
      %v4271 = vmax.f32 %v4239, 0.0
      %v4272 = vmax.f32 %v4240, 0.0
      %v4273 = vmax.f32 %v4241, 0.0
      %v4274 = vmax.f32 %v4242, 0.0
      %v4275 = vmax.f32 %v4243, 0.0
      %v4276 = vmax.f32 %v4244, 0.0
      %v4277 = vmax.f32 %v4245, 0.0
      %v4278 = vmax.f32 %v4246, 0.0
      %v4279 = vmax.f32 %v4247, 0.0
      %v4280 = vmax.f32 %v4248, 0.0
      %v4281 = vmax.f32 %v4249, 0.0
      %v4282 = vmax.f32 %v4250, 0.0
      %v4283 = vmax.f32 %v4251, 0.0
      %v4284 = vmax.f32 %v4252, 0.0
      %v4285 = vmax.f32 %v4253, 0.0
      %v4286 = vmax.f32 %v4254, 0.0
      %v4287 = vmax.f32 %v4255, 0.0
      %v4288 = vmax.f32 %v4256, 0.0
      %v4289 = vmax.f32 %v4257, 0.0
      %v4290 = vmax.f32 %v4258, 0.0
      %v4291 = vmax.f32 %v4259, 0.0
      %v4292 = vmax.f32 %v4260, 0.0
      %v4293 = vmax.f32 %v4261, 0.0
      %v4294 = vmax.f32 %v4262, 0.0
      %v4295 = vmax.f32 %v4263, 0.0
      %v4296 = vmax.f32 %v4264, 0.0
      %v4297 = vmax.f32 %v4265, 0.0
      %v4298 = vmax.f32 %v4266, 0.0
      %v4299 = vmax.f32 %v4267, 0.0
      %v4300 = vmax.f32 %v4268, 0.0
      %v4301 = vmax.f32 %v4269, 0.0
      %v4302 = vround.ne.pseudo %v4270
      %v4303 = vround.ne.pseudo %v4271
      %v4304 = vround.ne.pseudo %v4272
      %v4305 = vround.ne.pseudo %v4273
      %v4306 = vround.ne.pseudo %v4274
      %v4307 = vround.ne.pseudo %v4275
      %v4308 = vround.ne.pseudo %v4276
      %v4309 = vround.ne.pseudo %v4277
      %v4310 = vround.ne.pseudo %v4278
      %v4311 = vround.ne.pseudo %v4279
      %v4312 = vround.ne.pseudo %v4280
      %v4313 = vround.ne.pseudo %v4281
      %v4314 = vround.ne.pseudo %v4282
      %v4315 = vround.ne.pseudo %v4283
      %v4316 = vround.ne.pseudo %v4284
      %v4317 = vround.ne.pseudo %v4285
      %v4318 = vround.ne.pseudo %v4286
      %v4319 = vround.ne.pseudo %v4287
      %v4320 = vround.ne.pseudo %v4288
      %v4321 = vround.ne.pseudo %v4289
      %v4322 = vround.ne.pseudo %v4290
      %v4323 = vround.ne.pseudo %v4291
      %v4324 = vround.ne.pseudo %v4292
      %v4325 = vround.ne.pseudo %v4293
      %v4326 = vround.ne.pseudo %v4294
      %v4327 = vround.ne.pseudo %v4295
      %v4328 = vround.ne.pseudo %v4296
      %v4329 = vround.ne.pseudo %v4297
      %v4330 = vround.ne.pseudo %v4298
      %v4331 = vround.ne.pseudo %v4299
      %v4332 = vround.ne.pseudo %v4300
      %v4333 = vround.ne.pseudo %v4301
      %v4334 = vmax.f32 %v4302, -8.0
      %v4335 = vmax.f32 %v4303, -8.0
      %v4336 = vmax.f32 %v4304, -8.0
      %v4337 = vmax.f32 %v4305, -8.0
      %v4338 = vmax.f32 %v4306, -8.0
      %v4339 = vmax.f32 %v4307, -8.0
      %v4340 = vmax.f32 %v4308, -8.0
      %v4341 = vmax.f32 %v4309, -8.0
      %v4342 = vmax.f32 %v4310, -8.0
      %v4343 = vmax.f32 %v4311, -8.0
      %v4344 = vmax.f32 %v4312, -8.0
      %v4345 = vmax.f32 %v4313, -8.0
      %v4346 = vmax.f32 %v4314, -8.0
      %v4347 = vmax.f32 %v4315, -8.0
      %v4348 = vmax.f32 %v4316, -8.0
      %v4349 = vmax.f32 %v4317, -8.0
      %v4350 = vmax.f32 %v4318, -8.0
      %v4351 = vmax.f32 %v4319, -8.0
      %v4352 = vmax.f32 %v4320, -8.0
      %v4353 = vmax.f32 %v4321, -8.0
      %v4354 = vmax.f32 %v4322, -8.0
      %v4355 = vmax.f32 %v4323, -8.0
      %v4356 = vmax.f32 %v4324, -8.0
      %v4357 = vmax.f32 %v4325, -8.0
      %v4358 = vmax.f32 %v4326, -8.0
      %v4359 = vmax.f32 %v4327, -8.0
      %v4360 = vmax.f32 %v4328, -8.0
      %v4361 = vmax.f32 %v4329, -8.0
      %v4362 = vmax.f32 %v4330, -8.0
      %v4363 = vmax.f32 %v4331, -8.0
      %v4364 = vmax.f32 %v4332, -8.0
      %v4365 = vmax.f32 %v4333, -8.0
      %v4366 = vmin.f32 %v4334, 7.0
      %v4367 = vmin.f32 %v4335, 7.0
      %v4368 = vmin.f32 %v4336, 7.0
      %v4369 = vmin.f32 %v4337, 7.0
      %v4370 = vmin.f32 %v4338, 7.0
      %v4371 = vmin.f32 %v4339, 7.0
      %v4372 = vmin.f32 %v4340, 7.0
      %v4373 = vmin.f32 %v4341, 7.0
      %v4374 = vmin.f32 %v4342, 7.0
      %v4375 = vmin.f32 %v4343, 7.0
      %v4376 = vmin.f32 %v4344, 7.0
      %v4377 = vmin.f32 %v4345, 7.0
      %v4378 = vmin.f32 %v4346, 7.0
      %v4379 = vmin.f32 %v4347, 7.0
      %v4380 = vmin.f32 %v4348, 7.0
      %v4381 = vmin.f32 %v4349, 7.0
      %v4382 = vmin.f32 %v4350, 7.0
      %v4383 = vmin.f32 %v4351, 7.0
      %v4384 = vmin.f32 %v4352, 7.0
      %v4385 = vmin.f32 %v4353, 7.0
      %v4386 = vmin.f32 %v4354, 7.0
      %v4387 = vmin.f32 %v4355, 7.0
      %v4388 = vmin.f32 %v4356, 7.0
      %v4389 = vmin.f32 %v4357, 7.0
      %v4390 = vmin.f32 %v4358, 7.0
      %v4391 = vmin.f32 %v4359, 7.0
      %v4392 = vmin.f32 %v4360, 7.0
      %v4393 = vmin.f32 %v4361, 7.0
      %v4394 = vmin.f32 %v4362, 7.0
      %v4395 = vmin.f32 %v4363, 7.0
      %v4396 = vmin.f32 %v4364, 7.0
      %v4397 = vmin.f32 %v4365, 7.0
      %v4398 = vlaneseq
      %v4399 = vshrl.u32 %v4398, 7
      %v4400 = vsub.s32 0, %v4399
      %v4401 = vrot.slane %v4165, %v4400
      %v4402 = vmul.f32 %v4366, %v4401
      %v4403 = vmul.f32 %v4367, %v4401
      %v4404 = vmul.f32 %v4368, %v4401
      %v4405 = vmul.f32 %v4369, %v4401
      %v4406 = vmul.f32 %v4370, %v4401
      %v4407 = vmul.f32 %v4371, %v4401
      %v4408 = vmul.f32 %v4372, %v4401
      %v4409 = vmul.f32 %v4373, %v4401
      %v4410 = vmul.f32 %v4374, %v4401
      %v4411 = vmul.f32 %v4375, %v4401
      %v4412 = vmul.f32 %v4376, %v4401
      %v4413 = vmul.f32 %v4377, %v4401
      %v4414 = vmul.f32 %v4378, %v4401
      %v4415 = vmul.f32 %v4379, %v4401
      %v4416 = vmul.f32 %v4380, %v4401
      %v4417 = vmul.f32 %v4381, %v4401
      %v4418 = vmul.f32 %v4382, %v4401
      %v4419 = vmul.f32 %v4383, %v4401
      %v4420 = vmul.f32 %v4384, %v4401
      %v4421 = vmul.f32 %v4385, %v4401
      %v4422 = vmul.f32 %v4386, %v4401
      %v4423 = vmul.f32 %v4387, %v4401
      %v4424 = vmul.f32 %v4388, %v4401
      %v4425 = vmul.f32 %v4389, %v4401
      %v4426 = vmul.f32 %v4390, %v4401
      %v4427 = vmul.f32 %v4391, %v4401
      %v4428 = vmul.f32 %v4392, %v4401
      %v4429 = vmul.f32 %v4393, %v4401
      %v4430 = vmul.f32 %v4394, %v4401
      %v4431 = vmul.f32 %v4395, %v4401
      %v4432 = vmul.f32 %v4396, %v4401
      %v4433 = vmul.f32 %v4397, %v4401
      %4434 = vst.msk [vmem:[%s251] sm:$0xff] %vm252, %v4402
      %4435 = vst.msk [vmem:[%s251 + $0x8] sm:$0xff] %vm252, %v4403
      %4436 = vst.msk [vmem:[%s251 + $0x10] sm:$0xff] %vm252, %v4404
      %4437 = vst.msk [vmem:[%s251 + $0x18] sm:$0xff] %vm252, %v4405
      %4438 = vst.msk [vmem:[%s251 + $0x20] sm:$0xff] %vm252, %v4406
      %4439 = vst.msk [vmem:[%s251 + $0x28] sm:$0xff] %vm252, %v4407
      %4440 = vst.msk [vmem:[%s251 + $0x30] sm:$0xff] %vm252, %v4408
      %4441 = vst.msk [vmem:[%s251 + $0x38] sm:$0xff] %vm252, %v4409
      %4442 = vst.msk [vmem:[%s251 + $0x40] sm:$0xff] %vm252, %v4410
      %4443 = vst.msk [vmem:[%s251 + $0x48] sm:$0xff] %vm252, %v4411
      %4444 = vst.msk [vmem:[%s251 + $0x50] sm:$0xff] %vm252, %v4412
      %4445 = vst.msk [vmem:[%s251 + $0x58] sm:$0xff] %vm252, %v4413
      %4446 = vst.msk [vmem:[%s251 + $0x60] sm:$0xff] %vm252, %v4414
      %4447 = vst.msk [vmem:[%s251 + $0x68] sm:$0xff] %vm252, %v4415
      %4448 = vst.msk [vmem:[%s251 + $0x70] sm:$0xff] %vm252, %v4416
      %4449 = vst.msk [vmem:[%s251 + $0x78] sm:$0xff] %vm252, %v4417
      %4450 = vst.msk [vmem:[%s251 + $0x80] sm:$0xff] %vm252, %v4418
      %4451 = vst.msk [vmem:[%s251 + $0x88] sm:$0xff] %vm252, %v4419
      %4452 = vst.msk [vmem:[%s251 + $0x90] sm:$0xff] %vm252, %v4420
      %4453 = vst.msk [vmem:[%s251 + $0x98] sm:$0xff] %vm252, %v4421
      %4454 = vst.msk [vmem:[%s251 + $0xa0] sm:$0xff] %vm252, %v4422
      %4455 = vst.msk [vmem:[%s251 + $0xa8] sm:$0xff] %vm252, %v4423
      %4456 = vst.msk [vmem:[%s251 + $0xb0] sm:$0xff] %vm252, %v4424
      %4457 = vst.msk [vmem:[%s251 + $0xb8] sm:$0xff] %vm252, %v4425
      %4458 = vst.msk [vmem:[%s251 + $0xc0] sm:$0xff] %vm252, %v4426
      %4459 = vst.msk [vmem:[%s251 + $0xc8] sm:$0xff] %vm252, %v4427
      %4460 = vst.msk [vmem:[%s251 + $0xd0] sm:$0xff] %vm252, %v4428
      %4461 = vst.msk [vmem:[%s251 + $0xd8] sm:$0xff] %vm252, %v4429
      %4462 = vst.msk [vmem:[%s251 + $0xe0] sm:$0xff] %vm252, %v4430
      %4463 = vst.msk [vmem:[%s251 + $0xe8] sm:$0xff] %vm252, %v4431
      %4464 = vst.msk [vmem:[%s251 + $0xf0] sm:$0xff] %vm252, %v4432
      %4465 = vst.msk [vmem:[%s251 + $0xf8] sm:$0xff] %vm252, %v4433
      %p4466 = scmp.lt.s32.totalorder %s17, 1
      %s4467 = scalar_select %p4466, %s17, 1
      %s4468 = smul.addr %s4467, 32
      %s4469 = smul.addr %s4468, 8
      %s4470 = scalar_lea.vmem %s6, %s4469
      // Predicated region
      $region45: #{tpu_custom_call.1} parent=43 // pred_check
        %p4471 = pneg %p166
      $region46: #{tpu_custom_call.1} parent=43 // pred_check_branch
        %4473 = sbr.rel (%p4471) target = $region48
      $region47: #{tpu_custom_call.1} parent=43 // pred_region
        _
      $region48: #{tpu_custom_call.1} parent=43 // pred_fallthru
        _
    $region44: #{tpu_custom_call.1} parent=5 // pred_fallthru
      _
    %p4474 = scmp.le.s32.totalorder 2, %s12
    // Predicated region
    $region49: #{tpu_custom_call.1} parent=5 // pred_check
      %p4475 = pneg %p4474
    $region50: #{tpu_custom_call.1} parent=5 // pred_check_branch
      %4477 = sbr.rel (%p4475) target = $region52
    $region51: #{tpu_custom_call.1} parent=5 // pred_region
      %s4478 = ssub.s32 %s12, 2
      // Predicated region
      $region53: #{tpu_custom_call.1} parent=51 // pred_check
        %p4479 = pneg %p172
      $region54: #{tpu_custom_call.1} parent=51 // pred_check_branch
        %4481 = sbr.rel (%p4479) target = $region56
      $region55: #{tpu_custom_call.1} parent=51 // pred_region
        %p4482 = scmp.lt.s32.totalorder %s18, 1
        %s4483 = scalar_select %p4482, %s18, 1
        %s4484 = smul.addr %s4483, 32
        %s4485 = smul.addr %s4484, 8
        %s4486 = scalar_lea.vmem %s6, %s4485
      $region56: #{tpu_custom_call.1} parent=51 // pred_fallthru
        _
    $region52: #{tpu_custom_call.1} parent=5 // pred_fallthru
      _
  $region6: #{tpu_custom_call.1} parent=0 // loop_footer
    %s16 = sadd.s32 1, %s12
  $region7: #{tpu_custom_call.1} parent=0 // loop_footer_branch
    %11 = sbr.rel target = $region3
  $region8: #{tpu_custom_call.1} parent=0 // loop_exit
    _

</llo_original>
